<compile_context>
chip_gen: v6e
topology: v6e:2x2x1
jax: 0.10.0
libtpu: 0.0.40
codegen_flags: <defaults>
</compile_context>

<pallas_src>
import functools

import jax
import jax.numpy as jnp
import numpy as np
from jax.experimental import pallas as pl
from jax.experimental.pallas import tpu as pltpu


def transformer_block_kernel(
        x_ref, ln1_w_ref, ln1_b_ref, wqkv_ref, shift_ref, wdw_ref, bmask_ref,
        ascale_ref, abias_ref, wproj_ref, ln2_w_ref, ln2_b_ref,
        win_ref, wstack_ref, wout_ref, alpha_ref, o_ref, *, B, C, hidden):
    f32 = jnp.float32
    bf16 = jnp.bfloat16

    x = x_ref[...]                                        # (C, N) channel-major

    def layernorm(t, w_ref, b_ref):
        mu = jnp.mean(t, axis=0, keepdims=True)           # reduce over channels
        var = jnp.mean(jnp.square(t - mu), axis=0, keepdims=True)
        return (t - mu) * jax.lax.rsqrt(var + 1e-5) * w_ref[...] + b_ref[...]

    # ----------------------- attention branch -----------------------
    y = layernorm(x, ln1_w_ref, ln1_b_ref)                               # (C, N)
    qkv = jnp.dot(wqkv_ref[...], y.astype(bf16),
                  preferred_element_type=f32)                            # (3C, N)

    # depthwise 3x3 conv (padding=1): 9 taps via masked shift matrices (MXU)
    qkv_b = qkv.astype(bf16)
    dw = None
    for o in range(9):
        tap = jnp.dot(qkv_b, shift_ref[o],
                      preferred_element_type=f32) * wdw_ref[o]           # (3C, N)
        dw = tap if dw is None else dw + tap

    q = dw[0 * C:1 * C, :]                                               # (C, N)
    k = dw[1 * C:2 * C, :]
    v = dw[2 * C:3 * C, :]

    attn = None
    for b in range(B):                        # per-image attention (B unrolled)
        m = bmask_ref[b]                                                 # (1, N)
        qb = q * m
        kb = k * m
        # F.normalize(dim=-1): 1 / max(||.||, 1e-12)
        qb = qb * jax.lax.rsqrt(
            jnp.maximum(jnp.sum(qb * qb, axis=1, keepdims=True), 1e-24))
        kb = kb * jax.lax.rsqrt(
            jnp.maximum(jnp.sum(kb * kb, axis=1, keepdims=True), 1e-24))
        # full (C, C) Gram; per-head structure enforced by scale + bias masks
        scores = jax.lax.dot_general(qb, kb, (((1,), (1,)), ((), ())),
                                     preferred_element_type=f32)         # (C, C)
        scores = scores * ascale_ref[...] + abias_ref[...]
        scores = scores - jnp.max(scores, axis=-1, keepdims=True)
        p = jnp.exp(scores)
        p = p * pl.reciprocal(jnp.sum(p, axis=-1, keepdims=True), approx=True)
        obm = jnp.dot(p, v, preferred_element_type=f32) * m              # (C, N)
        attn = obm if attn is None else attn + obm

    attn = jnp.dot(wproj_ref[...], attn.astype(bf16),
                   preferred_element_type=f32)                           # (C, N)
    x1 = x + attn

    # ----------------------- feed-forward branch -----------------------
    y2 = layernorm(x1, ln2_w_ref, ln2_b_ref)
    h = jnp.dot(win_ref[...], y2.astype(bf16),
                preferred_element_type=f32)                              # (hid, N)

    # dense 3x3 conv fused: one stacked 1x1 matmul + 9 masked shift matmuls
    g = jnp.dot(wstack_ref[...], h.astype(bf16),
                preferred_element_type=f32)                              # (9*hid, N)
    g_b = g.astype(bf16)
    conv = None
    for o in range(9):
        t = jnp.dot(g_b[o * hidden:(o + 1) * hidden, :], shift_ref[o],
                    preferred_element_type=f32)                          # (hid, N)
        conv = t if conv is None else conv + t

    alpha = alpha_ref[0, 0]                               # PReLU slope (SMEM scalar)
    act = jnp.where(conv > 0, conv, alpha * conv)
    ffn = jnp.dot(wout_ref[...], act.astype(bf16),
                  preferred_element_type=f32)                            # (C, N)

    o_ref[...] = x1 + ffn                                 # lane-dense (C, N) store


def transformer_block(x, params, *, num_heads):
    """x: (B, C, H, W) float32 (NCHW); params in PyTorch-native shapes."""
    B, C, H, W = x.shape
    HW = H * W
    N = B * HW
    hidden = params['w_in'].shape[0]
    ch = C // num_heads
    bf16 = jnp.bfloat16

    # ---- lane geometry: lane n = b*H*W + h*W + w ----
    n_idx = np.arange(N)
    hh = (n_idx // W) % H
    ww = n_idx % W

    # 0/1 masked shift matrices: (qkv @ S[o])[:, n] = qkv[:, n + dy*W + dx]
    # when (h+dy, w+dx) is inside the image, else 0 (conv zero padding).
    shift_mats = np.zeros((9, N, N), np.float32)
    for o in range(9):
        dy, dx = o // 3 - 1, o % 3 - 1
        valid = ((hh + dy >= 0) & (hh + dy < H) &
                 (ww + dx >= 0) & (ww + dx < W))
        src = n_idx + dy * W + dx
        shift_mats[o, src[valid], n_idx[valid]] = 1.0
    shift_mats = jnp.asarray(shift_mats).astype(bf16)          # (9, N, N)

    # per-image lane masks for attention (attention never mixes images)
    bmask = np.zeros((B, 1, N), np.float32)
    for b in range(B):
        bmask[b, 0, b * HW:(b + 1) * HW] = 1.0

    # depthwise tap weights: (9, 3C, 1)
    wdw = params['w_dw'].reshape(3 * C, 9).T[:, :, None]

    # attention temperature (per-row) + block-diagonal head mask, both (C, C)
    head_id = np.repeat(np.arange(num_heads), ch)
    temp = params['temp'].reshape(num_heads)
    attn_scale = temp[head_id][:, None] * jnp.ones((1, C), jnp.float32)
    attn_bias = jnp.asarray(
        np.where(head_id[:, None] == head_id[None, :], 0.0, -1e30)
    ).astype(jnp.float32)

    # stacked dense-conv weight: rows ordered (tap, out_channel), cols = in_ch
    w_stack = params['w_conv'].transpose(2, 3, 0, 1).reshape(9 * hidden, hidden)

    x_cm = jnp.transpose(x, (1, 0, 2, 3)).reshape(C, N)        # channel-major

    args = [
        x_cm,
        params['ln1_w'].reshape(C, 1), params['ln1_b'].reshape(C, 1),
        params['w_qkv'].reshape(3 * C, C).astype(bf16),
        shift_mats,
        wdw,
        jnp.asarray(bmask),
        attn_scale, attn_bias,
        params['w_proj'].reshape(C, C).astype(bf16),
        params['ln2_w'].reshape(C, 1), params['ln2_b'].reshape(C, 1),
        params['w_in'].reshape(hidden, C).astype(bf16),
        w_stack.astype(bf16),
        params['w_out'].reshape(C, hidden).astype(bf16),
        params['alpha'].reshape(1, 1),
    ]

    kernel = functools.partial(
        transformer_block_kernel, B=B, C=C, hidden=hidden)

    vmem = pl.BlockSpec(memory_space=pltpu.MemorySpace.VMEM)
    smem = pl.BlockSpec(memory_space=pltpu.MemorySpace.SMEM)

    out_cm = pl.pallas_call(
        kernel,
        out_shape=jax.ShapeDtypeStruct((C, N), jnp.float32),
        in_specs=[vmem] * 15 + [smem],
        out_specs=vmem,
    )(*args)

    return jnp.transpose(out_cm.reshape(C, B, H, W), (1, 0, 2, 3))


def reference(x, p, num_heads):
    """Pure-JAX NCHW reference mirroring the PyTorch module (f32)."""
    B, C, H, W = x.shape
    HW = H * W
    ch = C // num_heads

    def ln(t3, w, b):                                       # t3: (B, HW, C)
        mu = t3.mean(-1, keepdims=True)
        var = ((t3 - mu) ** 2).mean(-1, keepdims=True)
        return (t3 - mu) / jnp.sqrt(var + 1e-5) * w + b

    def norm(t, w, b):                                      # to_3d -> LN -> to_4d
        t3 = t.reshape(B, C, HW).transpose(0, 2, 1)
        return ln(t3, w, b).transpose(0, 2, 1).reshape(B, C, H, W)

    def conv1x1(t, w4):
        return jnp.einsum('oc,bchw->bohw', w4[:, :, 0, 0], t)

    def dwconv3x3(t, w4):                                   # groups == channels
        pad = jnp.pad(t, ((0, 0), (0, 0), (1, 1), (1, 1)))
        out = jnp.zeros_like(t)
        for ky in range(3):
            for kx in range(3):
                out = out + (pad[:, :, ky:ky + H, kx:kx + W]
                             * w4[None, :, 0, ky, kx, None, None])
        return out

    def conv3x3(t, w4):                                     # dense 3x3
        pad = jnp.pad(t, ((0, 0), (0, 0), (1, 1), (1, 1)))
        out = jnp.zeros((B, w4.shape[0], H, W), jnp.float32)
        for ky in range(3):
            for kx in range(3):
                out = out + jnp.einsum('oc,bchw->bohw', w4[:, :, ky, kx],
                                       pad[:, :, ky:ky + H, kx:kx + W])
        return out

    # attention
    y = norm(x, p['ln1_w'], p['ln1_b'])
    qkv = dwconv3x3(conv1x1(y, p['w_qkv']), p['w_dw'])
    q, k, v = jnp.split(qkv, 3, axis=1)

    def split_heads(t):
        return t.reshape(B, num_heads, ch, HW)

    def l2n(t):
        n = jnp.sqrt((t * t).sum(-1, keepdims=True))
        return t / jnp.maximum(n, 1e-12)

    q, k, v = split_heads(q), split_heads(k), split_heads(v)
    q, k = l2n(q), l2n(k)
    attn = jnp.einsum('bhcx,bhdx->bhcd', q, k) * p['temp'][None]
    attn = jax.nn.softmax(attn, axis=-1)
    out = jnp.einsum('bhcd,bhdx->bhcx', attn, v).reshape(B, C, H, W)
    x1 = x + conv1x1(out, p['w_proj'])

    # feed-forward
    y2 = norm(x1, p['ln2_w'], p['ln2_b'])
    h = conv3x3(conv1x1(y2, p['w_in']), p['w_conv'])
    h = jnp.where(h > 0, h, p['alpha'][0] * h)
    return x1 + conv1x1(h, p['w_out'])


if __name__ == "__main__":
    B, C, H, W = 2, 16, 8, 8
    num_heads = 2
    ffn_expansion_factor = 2
    hidden = int(C * ffn_expansion_factor)

    key = jax.random.PRNGKey(0)
    ks = jax.random.split(key, 8)
    s = 0.1
    params = {
        'ln1_w': jnp.ones((C,), jnp.float32),
        'ln1_b': jnp.zeros((C,), jnp.float32),
        'w_qkv': s * jax.random.normal(ks[0], (3 * C, C, 1, 1), jnp.float32),
        'w_dw': s * jax.random.normal(ks[1], (3 * C, 1, 3, 3), jnp.float32),
        'temp': jnp.ones((num_heads, 1, 1), jnp.float32),     # nn.Parameter ones
        'w_proj': s * jax.random.normal(ks[2], (C, C, 1, 1), jnp.float32),
        'ln2_w': jnp.ones((C,), jnp.float32),
        'ln2_b': jnp.zeros((C,), jnp.float32),
        'w_in': s * jax.random.normal(ks[3], (hidden, C, 1, 1), jnp.float32),
        'w_conv': s * jax.random.normal(ks[4], (hidden, hidden, 3, 3), jnp.float32),
        'alpha': jnp.full((1,), 0.25, jnp.float32),           # PReLU default
        'w_out': s * jax.random.normal(ks[5], (C, hidden, 1, 1), jnp.float32),
    }
    x = jax.random.normal(ks[6], (B, C, H, W), jnp.float32)

    out = jax.block_until_ready(transformer_block(x, params, num_heads=num_heads))
    ref = jax.block_until_ready(reference(x, params, num_heads))
    np.testing.assert_allclose(np.asarray(out), np.asarray(ref),
                               atol=3e-2, rtol=3e-2)
    print("KERNEL_OK")
</pallas_src>

<mosaic_0001>
module attributes {stable_mosaic.version = 11 : i64} {
  func.func @transformer_block_kernel(%arg0: memref<16x128xf32, #tpu.memory_space<vmem>>, %arg1: memref<16x1xf32, #tpu.memory_space<vmem>>, %arg2: memref<16x1xf32, #tpu.memory_space<vmem>>, %arg3: memref<48x16xbf16, #tpu.memory_space<vmem>>, %arg4: memref<9x128x128xbf16, #tpu.memory_space<vmem>>, %arg5: memref<9x48x1xf32, #tpu.memory_space<vmem>>, %arg6: memref<2x1x128xf32, #tpu.memory_space<vmem>>, %arg7: memref<16x16xf32, #tpu.memory_space<vmem>>, %arg8: memref<16x16xf32, #tpu.memory_space<vmem>>, %arg9: memref<16x16xbf16, #tpu.memory_space<vmem>>, %arg10: memref<16x1xf32, #tpu.memory_space<vmem>>, %arg11: memref<16x1xf32, #tpu.memory_space<vmem>>, %arg12: memref<32x16xbf16, #tpu.memory_space<vmem>>, %arg13: memref<288x32xbf16, #tpu.memory_space<vmem>>, %arg14: memref<16x32xbf16, #tpu.memory_space<vmem>>, %arg15: memref<1x1xf32, #tpu.memory_space<smem>>, %arg16: memref<16x128xf32, #tpu.memory_space<vmem>>) attributes {dimension_semantics = [], scalar_prefetch = 0 : i64, scratch_operands = 0 : i64, tpu.core_type = #tpu.core_type<tc>} {
    %c0 = arith.constant 0 : index
    %c0_0 = arith.constant 0 : index
    %0 = vector.load %arg0[%c0, %c0_0] : memref<16x128xf32, #tpu.memory_space<vmem>>, vector<16x128xf32>
    %cst = arith.constant dense<0.000000e+00> : vector<128xf32>
    %1 = vector.multi_reduction <add>, %0, %cst [0] : vector<16x128xf32> to vector<128xf32>
    %2 = vector.shape_cast %1 : vector<128xf32> to vector<1x128xf32>
    %cst_1 = arith.constant 1.600000e+01 : f32
    %3 = vector.broadcast %cst_1 : f32 to vector<1x128xf32>
    %4 = arith.divf %2, %3 : vector<1x128xf32>
    %5 = vector.broadcast %4 : vector<1x128xf32> to vector<16x128xf32>
    %6 = arith.subf %0, %5 : vector<16x128xf32>
    %7 = arith.mulf %6, %6 : vector<16x128xf32>
    %cst_2 = arith.constant dense<0.000000e+00> : vector<128xf32>
    %8 = vector.multi_reduction <add>, %7, %cst_2 [0] : vector<16x128xf32> to vector<128xf32>
    %9 = vector.shape_cast %8 : vector<128xf32> to vector<1x128xf32>
    %cst_3 = arith.constant 1.600000e+01 : f32
    %10 = vector.broadcast %cst_3 : f32 to vector<1x128xf32>
    %11 = arith.divf %9, %10 : vector<1x128xf32>
    %12 = vector.broadcast %4 : vector<1x128xf32> to vector<16x128xf32>
    %13 = arith.subf %0, %12 : vector<16x128xf32>
    %cst_4 = arith.constant 9.99999974E-6 : f32
    %14 = vector.broadcast %cst_4 : f32 to vector<1x128xf32>
    %15 = arith.addf %11, %14 : vector<1x128xf32>
    %16 = math.rsqrt %15 : vector<1x128xf32>
    %17 = vector.broadcast %16 : vector<1x128xf32> to vector<16x128xf32>
    %18 = arith.mulf %13, %17 : vector<16x128xf32>
    %c0_5 = arith.constant 0 : index
    %c0_6 = arith.constant 0 : index
    %19 = vector.load %arg1[%c0_5, %c0_6] : memref<16x1xf32, #tpu.memory_space<vmem>>, vector<16x1xf32>
    %20 = vector.broadcast %19 : vector<16x1xf32> to vector<16x128xf32>
    %21 = arith.mulf %18, %20 : vector<16x128xf32>
    %c0_7 = arith.constant 0 : index
    %c0_8 = arith.constant 0 : index
    %22 = vector.load %arg2[%c0_7, %c0_8] : memref<16x1xf32, #tpu.memory_space<vmem>>, vector<16x1xf32>
    %23 = vector.broadcast %22 : vector<16x1xf32> to vector<16x128xf32>
    %24 = arith.addf %21, %23 : vector<16x128xf32>
    %c0_9 = arith.constant 0 : index
    %c0_10 = arith.constant 0 : index
    %25 = vector.load %arg3[%c0_9, %c0_10] : memref<48x16xbf16, #tpu.memory_space<vmem>>, vector<48x16xbf16>
    %26 = arith.truncf %24 : vector<16x128xf32> to vector<16x128xbf16>
    %cst_11 = arith.constant dense<0.000000e+00> : vector<48x128xf32>
    %27 = tpu.matmul %25, %26, %cst_11 {dimension_numbers = #tpu.dot_dimension_numbers<[1], [0], [0], [1], [0, 0, 1, 1], [], []>} : vector<48x16xbf16>, vector<16x128xbf16>, vector<48x128xf32> -> vector<48x128xf32>
    %28 = arith.truncf %27 : vector<48x128xf32> to vector<48x128xbf16>
    %c0_12 = arith.constant 0 : index
    %c0_13 = arith.constant 0 : index
    %c0_14 = arith.constant 0 : index
    %29 = vector.load %arg4[%c0_12, %c0_13, %c0_14] : memref<9x128x128xbf16, #tpu.memory_space<vmem>>, vector<1x128x128xbf16>
    %30 = vector.shape_cast %29 : vector<1x128x128xbf16> to vector<128x128xbf16>
    %cst_15 = arith.constant dense<0.000000e+00> : vector<48x128xf32>
    %31 = tpu.matmul %28, %30, %cst_15 {dimension_numbers = #tpu.dot_dimension_numbers<[1], [0], [0], [1], [0, 0, 1, 1], [], []>} : vector<48x128xbf16>, vector<128x128xbf16>, vector<48x128xf32> -> vector<48x128xf32>
    %c0_16 = arith.constant 0 : index
    %c0_17 = arith.constant 0 : index
    %c0_18 = arith.constant 0 : index
    %32 = vector.load %arg5[%c0_16, %c0_17, %c0_18] : memref<9x48x1xf32, #tpu.memory_space<vmem>>, vector<1x48x1xf32>
    %33 = vector.shape_cast %32 : vector<1x48x1xf32> to vector<48x1xf32>
    %34 = vector.broadcast %33 : vector<48x1xf32> to vector<48x128xf32>
    %35 = arith.mulf %31, %34 : vector<48x128xf32>
    %c1 = arith.constant 1 : index
    %c0_19 = arith.constant 0 : index
    %c0_20 = arith.constant 0 : index
    %36 = vector.load %arg4[%c1, %c0_19, %c0_20] : memref<9x128x128xbf16, #tpu.memory_space<vmem>>, vector<1x128x128xbf16>
    %37 = vector.shape_cast %36 : vector<1x128x128xbf16> to vector<128x128xbf16>
    %cst_21 = arith.constant dense<0.000000e+00> : vector<48x128xf32>
    %38 = tpu.matmul %28, %37, %cst_21 {dimension_numbers = #tpu.dot_dimension_numbers<[1], [0], [0], [1], [0, 0, 1, 1], [], []>} : vector<48x128xbf16>, vector<128x128xbf16>, vector<48x128xf32> -> vector<48x128xf32>
    %c1_22 = arith.constant 1 : index
    %c0_23 = arith.constant 0 : index
    %c0_24 = arith.constant 0 : index
    %39 = vector.load %arg5[%c1_22, %c0_23, %c0_24] : memref<9x48x1xf32, #tpu.memory_space<vmem>>, vector<1x48x1xf32>
    %40 = vector.shape_cast %39 : vector<1x48x1xf32> to vector<48x1xf32>
    %41 = vector.broadcast %40 : vector<48x1xf32> to vector<48x128xf32>
    %42 = arith.mulf %38, %41 : vector<48x128xf32>
    %43 = arith.addf %35, %42 : vector<48x128xf32>
    %c2 = arith.constant 2 : index
    %c0_25 = arith.constant 0 : index
    %c0_26 = arith.constant 0 : index
    %44 = vector.load %arg4[%c2, %c0_25, %c0_26] : memref<9x128x128xbf16, #tpu.memory_space<vmem>>, vector<1x128x128xbf16>
    %45 = vector.shape_cast %44 : vector<1x128x128xbf16> to vector<128x128xbf16>
    %cst_27 = arith.constant dense<0.000000e+00> : vector<48x128xf32>
    %46 = tpu.matmul %28, %45, %cst_27 {dimension_numbers = #tpu.dot_dimension_numbers<[1], [0], [0], [1], [0, 0, 1, 1], [], []>} : vector<48x128xbf16>, vector<128x128xbf16>, vector<48x128xf32> -> vector<48x128xf32>
    %c2_28 = arith.constant 2 : index
    %c0_29 = arith.constant 0 : index
    %c0_30 = arith.constant 0 : index
    %47 = vector.load %arg5[%c2_28, %c0_29, %c0_30] : memref<9x48x1xf32, #tpu.memory_space<vmem>>, vector<1x48x1xf32>
    %48 = vector.shape_cast %47 : vector<1x48x1xf32> to vector<48x1xf32>
    %49 = vector.broadcast %48 : vector<48x1xf32> to vector<48x128xf32>
    %50 = arith.mulf %46, %49 : vector<48x128xf32>
    %51 = arith.addf %43, %50 : vector<48x128xf32>
    %c3 = arith.constant 3 : index
    %c0_31 = arith.constant 0 : index
    %c0_32 = arith.constant 0 : index
    %52 = vector.load %arg4[%c3, %c0_31, %c0_32] : memref<9x128x128xbf16, #tpu.memory_space<vmem>>, vector<1x128x128xbf16>
    %53 = vector.shape_cast %52 : vector<1x128x128xbf16> to vector<128x128xbf16>
    %cst_33 = arith.constant dense<0.000000e+00> : vector<48x128xf32>
    %54 = tpu.matmul %28, %53, %cst_33 {dimension_numbers = #tpu.dot_dimension_numbers<[1], [0], [0], [1], [0, 0, 1, 1], [], []>} : vector<48x128xbf16>, vector<128x128xbf16>, vector<48x128xf32> -> vector<48x128xf32>
    %c3_34 = arith.constant 3 : index
    %c0_35 = arith.constant 0 : index
    %c0_36 = arith.constant 0 : index
    %55 = vector.load %arg5[%c3_34, %c0_35, %c0_36] : memref<9x48x1xf32, #tpu.memory_space<vmem>>, vector<1x48x1xf32>
    %56 = vector.shape_cast %55 : vector<1x48x1xf32> to vector<48x1xf32>
    %57 = vector.broadcast %56 : vector<48x1xf32> to vector<48x128xf32>
    %58 = arith.mulf %54, %57 : vector<48x128xf32>
    %59 = arith.addf %51, %58 : vector<48x128xf32>
    %c4 = arith.constant 4 : index
    %c0_37 = arith.constant 0 : index
    %c0_38 = arith.constant 0 : index
    %60 = vector.load %arg4[%c4, %c0_37, %c0_38] : memref<9x128x128xbf16, #tpu.memory_space<vmem>>, vector<1x128x128xbf16>
    %61 = vector.shape_cast %60 : vector<1x128x128xbf16> to vector<128x128xbf16>
    %cst_39 = arith.constant dense<0.000000e+00> : vector<48x128xf32>
    %62 = tpu.matmul %28, %61, %cst_39 {dimension_numbers = #tpu.dot_dimension_numbers<[1], [0], [0], [1], [0, 0, 1, 1], [], []>} : vector<48x128xbf16>, vector<128x128xbf16>, vector<48x128xf32> -> vector<48x128xf32>
    %c4_40 = arith.constant 4 : index
    %c0_41 = arith.constant 0 : index
    %c0_42 = arith.constant 0 : index
    %63 = vector.load %arg5[%c4_40, %c0_41, %c0_42] : memref<9x48x1xf32, #tpu.memory_space<vmem>>, vector<1x48x1xf32>
    %64 = vector.shape_cast %63 : vector<1x48x1xf32> to vector<48x1xf32>
    %65 = vector.broadcast %64 : vector<48x1xf32> to vector<48x128xf32>
    %66 = arith.mulf %62, %65 : vector<48x128xf32>
    %67 = arith.addf %59, %66 : vector<48x128xf32>
    %c5 = arith.constant 5 : index
    %c0_43 = arith.constant 0 : index
    %c0_44 = arith.constant 0 : index
    %68 = vector.load %arg4[%c5, %c0_43, %c0_44] : memref<9x128x128xbf16, #tpu.memory_space<vmem>>, vector<1x128x128xbf16>
    %69 = vector.shape_cast %68 : vector<1x128x128xbf16> to vector<128x128xbf16>
    %cst_45 = arith.constant dense<0.000000e+00> : vector<48x128xf32>
    %70 = tpu.matmul %28, %69, %cst_45 {dimension_numbers = #tpu.dot_dimension_numbers<[1], [0], [0], [1], [0, 0, 1, 1], [], []>} : vector<48x128xbf16>, vector<128x128xbf16>, vector<48x128xf32> -> vector<48x128xf32>
    %c5_46 = arith.constant 5 : index
    %c0_47 = arith.constant 0 : index
    %c0_48 = arith.constant 0 : index
    %71 = vector.load %arg5[%c5_46, %c0_47, %c0_48] : memref<9x48x1xf32, #tpu.memory_space<vmem>>, vector<1x48x1xf32>
    %72 = vector.shape_cast %71 : vector<1x48x1xf32> to vector<48x1xf32>
    %73 = vector.broadcast %72 : vector<48x1xf32> to vector<48x128xf32>
    %74 = arith.mulf %70, %73 : vector<48x128xf32>
    %75 = arith.addf %67, %74 : vector<48x128xf32>
    %c6 = arith.constant 6 : index
    %c0_49 = arith.constant 0 : index
    %c0_50 = arith.constant 0 : index
    %76 = vector.load %arg4[%c6, %c0_49, %c0_50] : memref<9x128x128xbf16, #tpu.memory_space<vmem>>, vector<1x128x128xbf16>
    %77 = vector.shape_cast %76 : vector<1x128x128xbf16> to vector<128x128xbf16>
    %cst_51 = arith.constant dense<0.000000e+00> : vector<48x128xf32>
    %78 = tpu.matmul %28, %77, %cst_51 {dimension_numbers = #tpu.dot_dimension_numbers<[1], [0], [0], [1], [0, 0, 1, 1], [], []>} : vector<48x128xbf16>, vector<128x128xbf16>, vector<48x128xf32> -> vector<48x128xf32>
    %c6_52 = arith.constant 6 : index
    %c0_53 = arith.constant 0 : index
    %c0_54 = arith.constant 0 : index
    %79 = vector.load %arg5[%c6_52, %c0_53, %c0_54] : memref<9x48x1xf32, #tpu.memory_space<vmem>>, vector<1x48x1xf32>
    %80 = vector.shape_cast %79 : vector<1x48x1xf32> to vector<48x1xf32>
    %81 = vector.broadcast %80 : vector<48x1xf32> to vector<48x128xf32>
    %82 = arith.mulf %78, %81 : vector<48x128xf32>
    %83 = arith.addf %75, %82 : vector<48x128xf32>
    %c7 = arith.constant 7 : index
    %c0_55 = arith.constant 0 : index
    %c0_56 = arith.constant 0 : index
    %84 = vector.load %arg4[%c7, %c0_55, %c0_56] : memref<9x128x128xbf16, #tpu.memory_space<vmem>>, vector<1x128x128xbf16>
    %85 = vector.shape_cast %84 : vector<1x128x128xbf16> to vector<128x128xbf16>
    %cst_57 = arith.constant dense<0.000000e+00> : vector<48x128xf32>
    %86 = tpu.matmul %28, %85, %cst_57 {dimension_numbers = #tpu.dot_dimension_numbers<[1], [0], [0], [1], [0, 0, 1, 1], [], []>} : vector<48x128xbf16>, vector<128x128xbf16>, vector<48x128xf32> -> vector<48x128xf32>
    %c7_58 = arith.constant 7 : index
    %c0_59 = arith.constant 0 : index
    %c0_60 = arith.constant 0 : index
    %87 = vector.load %arg5[%c7_58, %c0_59, %c0_60] : memref<9x48x1xf32, #tpu.memory_space<vmem>>, vector<1x48x1xf32>
    %88 = vector.shape_cast %87 : vector<1x48x1xf32> to vector<48x1xf32>
    %89 = vector.broadcast %88 : vector<48x1xf32> to vector<48x128xf32>
    %90 = arith.mulf %86, %89 : vector<48x128xf32>
    %91 = arith.addf %83, %90 : vector<48x128xf32>
    %c8 = arith.constant 8 : index
    %c0_61 = arith.constant 0 : index
    %c0_62 = arith.constant 0 : index
    %92 = vector.load %arg4[%c8, %c0_61, %c0_62] : memref<9x128x128xbf16, #tpu.memory_space<vmem>>, vector<1x128x128xbf16>
    %93 = vector.shape_cast %92 : vector<1x128x128xbf16> to vector<128x128xbf16>
    %cst_63 = arith.constant dense<0.000000e+00> : vector<48x128xf32>
    %94 = tpu.matmul %28, %93, %cst_63 {dimension_numbers = #tpu.dot_dimension_numbers<[1], [0], [0], [1], [0, 0, 1, 1], [], []>} : vector<48x128xbf16>, vector<128x128xbf16>, vector<48x128xf32> -> vector<48x128xf32>
    %c8_64 = arith.constant 8 : index
    %c0_65 = arith.constant 0 : index
    %c0_66 = arith.constant 0 : index
    %95 = vector.load %arg5[%c8_64, %c0_65, %c0_66] : memref<9x48x1xf32, #tpu.memory_space<vmem>>, vector<1x48x1xf32>
    %96 = vector.shape_cast %95 : vector<1x48x1xf32> to vector<48x1xf32>
    %97 = vector.broadcast %96 : vector<48x1xf32> to vector<48x128xf32>
    %98 = arith.mulf %94, %97 : vector<48x128xf32>
    %99 = arith.addf %91, %98 : vector<48x128xf32>
    %100 = vector.extract_strided_slice %99 {offsets = [0, 0], sizes = [16, 128], strides = [1, 1]} : vector<48x128xf32> to vector<16x128xf32>
    %101 = vector.extract_strided_slice %99 {offsets = [16, 0], sizes = [16, 128], strides = [1, 1]} : vector<48x128xf32> to vector<16x128xf32>
    %102 = vector.extract_strided_slice %99 {offsets = [32, 0], sizes = [16, 128], strides = [1, 1]} : vector<48x128xf32> to vector<16x128xf32>
    %c0_67 = arith.constant 0 : index
    %c0_68 = arith.constant 0 : index
    %c0_69 = arith.constant 0 : index
    %103 = vector.load %arg6[%c0_67, %c0_68, %c0_69] : memref<2x1x128xf32, #tpu.memory_space<vmem>>, vector<1x1x128xf32>
    %104 = vector.shape_cast %103 : vector<1x1x128xf32> to vector<1x128xf32>
    %105 = vector.broadcast %104 : vector<1x128xf32> to vector<16x128xf32>
    %106 = arith.mulf %100, %105 : vector<16x128xf32>
    %107 = vector.broadcast %104 : vector<1x128xf32> to vector<16x128xf32>
    %108 = arith.mulf %101, %107 : vector<16x128xf32>
    %109 = arith.mulf %106, %106 : vector<16x128xf32>
    %cst_70 = arith.constant dense<0.000000e+00> : vector<16xf32>
    %110 = vector.multi_reduction <add>, %109, %cst_70 [1] : vector<16x128xf32> to vector<16xf32>
    %111 = vector.shape_cast %110 : vector<16xf32> to vector<16x1xf32>
    %cst_71 = arith.constant 1.000000e-24 : f32
    %112 = vector.broadcast %cst_71 : f32 to vector<16x1xf32>
    %113 = arith.maximumf %111, %112 : vector<16x1xf32>
    %114 = math.rsqrt %113 : vector<16x1xf32>
    %115 = vector.broadcast %114 : vector<16x1xf32> to vector<16x128xf32>
    %116 = arith.mulf %106, %115 : vector<16x128xf32>
    %117 = arith.mulf %108, %108 : vector<16x128xf32>
    %cst_72 = arith.constant dense<0.000000e+00> : vector<16xf32>
    %118 = vector.multi_reduction <add>, %117, %cst_72 [1] : vector<16x128xf32> to vector<16xf32>
    %119 = vector.shape_cast %118 : vector<16xf32> to vector<16x1xf32>
    %cst_73 = arith.constant 1.000000e-24 : f32
    %120 = vector.broadcast %cst_73 : f32 to vector<16x1xf32>
    %121 = arith.maximumf %119, %120 : vector<16x1xf32>
    %122 = math.rsqrt %121 : vector<16x1xf32>
    %123 = vector.broadcast %122 : vector<16x1xf32> to vector<16x128xf32>
    %124 = arith.mulf %108, %123 : vector<16x128xf32>
    %cst_74 = arith.constant dense<0.000000e+00> : vector<16x16xf32>
    %125 = tpu.matmul %116, %124, %cst_74 {dimension_numbers = #tpu.dot_dimension_numbers<[1], [1], [0], [0], [0, 0, 1, 0], [], []>} : vector<16x128xf32>, vector<16x128xf32>, vector<16x16xf32> -> vector<16x16xf32>
    %c0_75 = arith.constant 0 : index
    %c0_76 = arith.constant 0 : index
    %126 = vector.load %arg7[%c0_75, %c0_76] : memref<16x16xf32, #tpu.memory_space<vmem>>, vector<16x16xf32>
    %127 = arith.mulf %125, %126 : vector<16x16xf32>
    %c0_77 = arith.constant 0 : index
    %c0_78 = arith.constant 0 : index
    %128 = vector.load %arg8[%c0_77, %c0_78] : memref<16x16xf32, #tpu.memory_space<vmem>>, vector<16x16xf32>
    %129 = arith.addf %127, %128 : vector<16x16xf32>
    %cst_79 = arith.constant dense<0xFF800000> : vector<16xf32>
    %130 = vector.multi_reduction <maximumf>, %129, %cst_79 [1] : vector<16x16xf32> to vector<16xf32>
    %131 = vector.shape_cast %130 : vector<16xf32> to vector<16x1xf32>
    %132 = vector.broadcast %131 : vector<16x1xf32> to vector<16x16xf32>
    %133 = arith.subf %129, %132 : vector<16x16xf32>
    %134 = math.exp %133 : vector<16x16xf32>
    %cst_80 = arith.constant dense<0.000000e+00> : vector<16xf32>
    %135 = vector.multi_reduction <add>, %134, %cst_80 [1] : vector<16x16xf32> to vector<16xf32>
    %136 = vector.shape_cast %135 : vector<16xf32> to vector<16x1xf32>
    %137 = tpu.reciprocal %136 {approx = true} : vector<16x1xf32> -> vector<16x1xf32>
    %138 = vector.broadcast %137 : vector<16x1xf32> to vector<16x16xf32>
    %139 = arith.mulf %134, %138 : vector<16x16xf32>
    %cst_81 = arith.constant dense<0.000000e+00> : vector<16x128xf32>
    %140 = tpu.matmul %139, %102, %cst_81 {dimension_numbers = #tpu.dot_dimension_numbers<[1], [0], [0], [1], [0, 0, 1, 1], [], []>} : vector<16x16xf32>, vector<16x128xf32>, vector<16x128xf32> -> vector<16x128xf32>
    %141 = vector.broadcast %104 : vector<1x128xf32> to vector<16x128xf32>
    %142 = arith.mulf %140, %141 : vector<16x128xf32>
    %c1_82 = arith.constant 1 : index
    %c0_83 = arith.constant 0 : index
    %c0_84 = arith.constant 0 : index
    %143 = vector.load %arg6[%c1_82, %c0_83, %c0_84] : memref<2x1x128xf32, #tpu.memory_space<vmem>>, vector<1x1x128xf32>
    %144 = vector.shape_cast %143 : vector<1x1x128xf32> to vector<1x128xf32>
    %145 = vector.broadcast %144 : vector<1x128xf32> to vector<16x128xf32>
    %146 = arith.mulf %100, %145 : vector<16x128xf32>
    %147 = vector.broadcast %144 : vector<1x128xf32> to vector<16x128xf32>
    %148 = arith.mulf %101, %147 : vector<16x128xf32>
    %149 = arith.mulf %146, %146 : vector<16x128xf32>
    %cst_85 = arith.constant dense<0.000000e+00> : vector<16xf32>
    %150 = vector.multi_reduction <add>, %149, %cst_85 [1] : vector<16x128xf32> to vector<16xf32>
    %151 = vector.shape_cast %150 : vector<16xf32> to vector<16x1xf32>
    %cst_86 = arith.constant 1.000000e-24 : f32
    %152 = vector.broadcast %cst_86 : f32 to vector<16x1xf32>
    %153 = arith.maximumf %151, %152 : vector<16x1xf32>
    %154 = math.rsqrt %153 : vector<16x1xf32>
    %155 = vector.broadcast %154 : vector<16x1xf32> to vector<16x128xf32>
    %156 = arith.mulf %146, %155 : vector<16x128xf32>
    %157 = arith.mulf %148, %148 : vector<16x128xf32>
    %cst_87 = arith.constant dense<0.000000e+00> : vector<16xf32>
    %158 = vector.multi_reduction <add>, %157, %cst_87 [1] : vector<16x128xf32> to vector<16xf32>
    %159 = vector.shape_cast %158 : vector<16xf32> to vector<16x1xf32>
    %cst_88 = arith.constant 1.000000e-24 : f32
    %160 = vector.broadcast %cst_88 : f32 to vector<16x1xf32>
    %161 = arith.maximumf %159, %160 : vector<16x1xf32>
    %162 = math.rsqrt %161 : vector<16x1xf32>
    %163 = vector.broadcast %162 : vector<16x1xf32> to vector<16x128xf32>
    %164 = arith.mulf %148, %163 : vector<16x128xf32>
    %cst_89 = arith.constant dense<0.000000e+00> : vector<16x16xf32>
    %165 = tpu.matmul %156, %164, %cst_89 {dimension_numbers = #tpu.dot_dimension_numbers<[1], [1], [0], [0], [0, 0, 1, 0], [], []>} : vector<16x128xf32>, vector<16x128xf32>, vector<16x16xf32> -> vector<16x16xf32>
    %c0_90 = arith.constant 0 : index
    %c0_91 = arith.constant 0 : index
    %166 = vector.load %arg7[%c0_90, %c0_91] : memref<16x16xf32, #tpu.memory_space<vmem>>, vector<16x16xf32>
    %167 = arith.mulf %165, %166 : vector<16x16xf32>
    %c0_92 = arith.constant 0 : index
    %c0_93 = arith.constant 0 : index
    %168 = vector.load %arg8[%c0_92, %c0_93] : memref<16x16xf32, #tpu.memory_space<vmem>>, vector<16x16xf32>
    %169 = arith.addf %167, %168 : vector<16x16xf32>
    %cst_94 = arith.constant dense<0xFF800000> : vector<16xf32>
    %170 = vector.multi_reduction <maximumf>, %169, %cst_94 [1] : vector<16x16xf32> to vector<16xf32>
    %171 = vector.shape_cast %170 : vector<16xf32> to vector<16x1xf32>
    %172 = vector.broadcast %171 : vector<16x1xf32> to vector<16x16xf32>
    %173 = arith.subf %169, %172 : vector<16x16xf32>
    %174 = math.exp %173 : vector<16x16xf32>
    %cst_95 = arith.constant dense<0.000000e+00> : vector<16xf32>
    %175 = vector.multi_reduction <add>, %174, %cst_95 [1] : vector<16x16xf32> to vector<16xf32>
    %176 = vector.shape_cast %175 : vector<16xf32> to vector<16x1xf32>
    %177 = tpu.reciprocal %176 {approx = true} : vector<16x1xf32> -> vector<16x1xf32>
    %178 = vector.broadcast %177 : vector<16x1xf32> to vector<16x16xf32>
    %179 = arith.mulf %174, %178 : vector<16x16xf32>
    %cst_96 = arith.constant dense<0.000000e+00> : vector<16x128xf32>
    %180 = tpu.matmul %179, %102, %cst_96 {dimension_numbers = #tpu.dot_dimension_numbers<[1], [0], [0], [1], [0, 0, 1, 1], [], []>} : vector<16x16xf32>, vector<16x128xf32>, vector<16x128xf32> -> vector<16x128xf32>
    %181 = vector.broadcast %144 : vector<1x128xf32> to vector<16x128xf32>
    %182 = arith.mulf %180, %181 : vector<16x128xf32>
    %183 = arith.addf %142, %182 : vector<16x128xf32>
    %c0_97 = arith.constant 0 : index
    %c0_98 = arith.constant 0 : index
    %184 = vector.load %arg9[%c0_97, %c0_98] : memref<16x16xbf16, #tpu.memory_space<vmem>>, vector<16x16xbf16>
    %185 = arith.truncf %183 : vector<16x128xf32> to vector<16x128xbf16>
    %cst_99 = arith.constant dense<0.000000e+00> : vector<16x128xf32>
    %186 = tpu.matmul %184, %185, %cst_99 {dimension_numbers = #tpu.dot_dimension_numbers<[1], [0], [0], [1], [0, 0, 1, 1], [], []>} : vector<16x16xbf16>, vector<16x128xbf16>, vector<16x128xf32> -> vector<16x128xf32>
    %187 = arith.addf %0, %186 : vector<16x128xf32>
    %cst_100 = arith.constant dense<0.000000e+00> : vector<128xf32>
    %188 = vector.multi_reduction <add>, %187, %cst_100 [0] : vector<16x128xf32> to vector<128xf32>
    %189 = vector.shape_cast %188 : vector<128xf32> to vector<1x128xf32>
    %cst_101 = arith.constant 1.600000e+01 : f32
    %190 = vector.broadcast %cst_101 : f32 to vector<1x128xf32>
    %191 = arith.divf %189, %190 : vector<1x128xf32>
    %192 = vector.broadcast %191 : vector<1x128xf32> to vector<16x128xf32>
    %193 = arith.subf %187, %192 : vector<16x128xf32>
    %194 = arith.mulf %193, %193 : vector<16x128xf32>
    %cst_102 = arith.constant dense<0.000000e+00> : vector<128xf32>
    %195 = vector.multi_reduction <add>, %194, %cst_102 [0] : vector<16x128xf32> to vector<128xf32>
    %196 = vector.shape_cast %195 : vector<128xf32> to vector<1x128xf32>
    %cst_103 = arith.constant 1.600000e+01 : f32
    %197 = vector.broadcast %cst_103 : f32 to vector<1x128xf32>
    %198 = arith.divf %196, %197 : vector<1x128xf32>
    %199 = vector.broadcast %191 : vector<1x128xf32> to vector<16x128xf32>
    %200 = arith.subf %187, %199 : vector<16x128xf32>
    %cst_104 = arith.constant 9.99999974E-6 : f32
    %201 = vector.broadcast %cst_104 : f32 to vector<1x128xf32>
    %202 = arith.addf %198, %201 : vector<1x128xf32>
    %203 = math.rsqrt %202 : vector<1x128xf32>
    %204 = vector.broadcast %203 : vector<1x128xf32> to vector<16x128xf32>
    %205 = arith.mulf %200, %204 : vector<16x128xf32>
    %c0_105 = arith.constant 0 : index
    %c0_106 = arith.constant 0 : index
    %206 = vector.load %arg10[%c0_105, %c0_106] : memref<16x1xf32, #tpu.memory_space<vmem>>, vector<16x1xf32>
    %207 = vector.broadcast %206 : vector<16x1xf32> to vector<16x128xf32>
    %208 = arith.mulf %205, %207 : vector<16x128xf32>
    %c0_107 = arith.constant 0 : index
    %c0_108 = arith.constant 0 : index
    %209 = vector.load %arg11[%c0_107, %c0_108] : memref<16x1xf32, #tpu.memory_space<vmem>>, vector<16x1xf32>
    %210 = vector.broadcast %209 : vector<16x1xf32> to vector<16x128xf32>
    %211 = arith.addf %208, %210 : vector<16x128xf32>
    %c0_109 = arith.constant 0 : index
    %c0_110 = arith.constant 0 : index
    %212 = vector.load %arg12[%c0_109, %c0_110] : memref<32x16xbf16, #tpu.memory_space<vmem>>, vector<32x16xbf16>
    %213 = arith.truncf %211 : vector<16x128xf32> to vector<16x128xbf16>
    %cst_111 = arith.constant dense<0.000000e+00> : vector<32x128xf32>
    %214 = tpu.matmul %212, %213, %cst_111 {dimension_numbers = #tpu.dot_dimension_numbers<[1], [0], [0], [1], [0, 0, 1, 1], [], []>} : vector<32x16xbf16>, vector<16x128xbf16>, vector<32x128xf32> -> vector<32x128xf32>
    %c0_112 = arith.constant 0 : index
    %c0_113 = arith.constant 0 : index
    %215 = vector.load %arg13[%c0_112, %c0_113] : memref<288x32xbf16, #tpu.memory_space<vmem>>, vector<288x32xbf16>
    %216 = arith.truncf %214 : vector<32x128xf32> to vector<32x128xbf16>
    %cst_114 = arith.constant dense<0.000000e+00> : vector<288x128xf32>
    %217 = tpu.matmul %215, %216, %cst_114 {dimension_numbers = #tpu.dot_dimension_numbers<[1], [0], [0], [1], [0, 0, 1, 1], [], []>} : vector<288x32xbf16>, vector<32x128xbf16>, vector<288x128xf32> -> vector<288x128xf32>
    %218 = arith.truncf %217 : vector<288x128xf32> to vector<288x128xbf16>
    %219 = vector.extract_strided_slice %218 {offsets = [0, 0], sizes = [32, 128], strides = [1, 1]} : vector<288x128xbf16> to vector<32x128xbf16>
    %c0_115 = arith.constant 0 : index
    %c0_116 = arith.constant 0 : index
    %c0_117 = arith.constant 0 : index
    %220 = vector.load %arg4[%c0_115, %c0_116, %c0_117] : memref<9x128x128xbf16, #tpu.memory_space<vmem>>, vector<1x128x128xbf16>
    %221 = vector.shape_cast %220 : vector<1x128x128xbf16> to vector<128x128xbf16>
    %cst_118 = arith.constant dense<0.000000e+00> : vector<32x128xf32>
    %222 = tpu.matmul %219, %221, %cst_118 {dimension_numbers = #tpu.dot_dimension_numbers<[1], [0], [0], [1], [0, 0, 1, 1], [], []>} : vector<32x128xbf16>, vector<128x128xbf16>, vector<32x128xf32> -> vector<32x128xf32>
    %223 = vector.extract_strided_slice %218 {offsets = [32, 0], sizes = [32, 128], strides = [1, 1]} : vector<288x128xbf16> to vector<32x128xbf16>
    %c1_119 = arith.constant 1 : index
    %c0_120 = arith.constant 0 : index
    %c0_121 = arith.constant 0 : index
    %224 = vector.load %arg4[%c1_119, %c0_120, %c0_121] : memref<9x128x128xbf16, #tpu.memory_space<vmem>>, vector<1x128x128xbf16>
    %225 = vector.shape_cast %224 : vector<1x128x128xbf16> to vector<128x128xbf16>
    %cst_122 = arith.constant dense<0.000000e+00> : vector<32x128xf32>
    %226 = tpu.matmul %223, %225, %cst_122 {dimension_numbers = #tpu.dot_dimension_numbers<[1], [0], [0], [1], [0, 0, 1, 1], [], []>} : vector<32x128xbf16>, vector<128x128xbf16>, vector<32x128xf32> -> vector<32x128xf32>
    %227 = arith.addf %222, %226 : vector<32x128xf32>
    %228 = vector.extract_strided_slice %218 {offsets = [64, 0], sizes = [32, 128], strides = [1, 1]} : vector<288x128xbf16> to vector<32x128xbf16>
    %c2_123 = arith.constant 2 : index
    %c0_124 = arith.constant 0 : index
    %c0_125 = arith.constant 0 : index
    %229 = vector.load %arg4[%c2_123, %c0_124, %c0_125] : memref<9x128x128xbf16, #tpu.memory_space<vmem>>, vector<1x128x128xbf16>
    %230 = vector.shape_cast %229 : vector<1x128x128xbf16> to vector<128x128xbf16>
    %cst_126 = arith.constant dense<0.000000e+00> : vector<32x128xf32>
    %231 = tpu.matmul %228, %230, %cst_126 {dimension_numbers = #tpu.dot_dimension_numbers<[1], [0], [0], [1], [0, 0, 1, 1], [], []>} : vector<32x128xbf16>, vector<128x128xbf16>, vector<32x128xf32> -> vector<32x128xf32>
    %232 = arith.addf %227, %231 : vector<32x128xf32>
    %233 = vector.extract_strided_slice %218 {offsets = [96, 0], sizes = [32, 128], strides = [1, 1]} : vector<288x128xbf16> to vector<32x128xbf16>
    %c3_127 = arith.constant 3 : index
    %c0_128 = arith.constant 0 : index
    %c0_129 = arith.constant 0 : index
    %234 = vector.load %arg4[%c3_127, %c0_128, %c0_129] : memref<9x128x128xbf16, #tpu.memory_space<vmem>>, vector<1x128x128xbf16>
    %235 = vector.shape_cast %234 : vector<1x128x128xbf16> to vector<128x128xbf16>
    %cst_130 = arith.constant dense<0.000000e+00> : vector<32x128xf32>
    %236 = tpu.matmul %233, %235, %cst_130 {dimension_numbers = #tpu.dot_dimension_numbers<[1], [0], [0], [1], [0, 0, 1, 1], [], []>} : vector<32x128xbf16>, vector<128x128xbf16>, vector<32x128xf32> -> vector<32x128xf32>
    %237 = arith.addf %232, %236 : vector<32x128xf32>
    %238 = vector.extract_strided_slice %218 {offsets = [128, 0], sizes = [32, 128], strides = [1, 1]} : vector<288x128xbf16> to vector<32x128xbf16>
    %c4_131 = arith.constant 4 : index
    %c0_132 = arith.constant 0 : index
    %c0_133 = arith.constant 0 : index
    %239 = vector.load %arg4[%c4_131, %c0_132, %c0_133] : memref<9x128x128xbf16, #tpu.memory_space<vmem>>, vector<1x128x128xbf16>
    %240 = vector.shape_cast %239 : vector<1x128x128xbf16> to vector<128x128xbf16>
    %cst_134 = arith.constant dense<0.000000e+00> : vector<32x128xf32>
    %241 = tpu.matmul %238, %240, %cst_134 {dimension_numbers = #tpu.dot_dimension_numbers<[1], [0], [0], [1], [0, 0, 1, 1], [], []>} : vector<32x128xbf16>, vector<128x128xbf16>, vector<32x128xf32> -> vector<32x128xf32>
    %242 = arith.addf %237, %241 : vector<32x128xf32>
    %243 = vector.extract_strided_slice %218 {offsets = [160, 0], sizes = [32, 128], strides = [1, 1]} : vector<288x128xbf16> to vector<32x128xbf16>
    %c5_135 = arith.constant 5 : index
    %c0_136 = arith.constant 0 : index
    %c0_137 = arith.constant 0 : index
    %244 = vector.load %arg4[%c5_135, %c0_136, %c0_137] : memref<9x128x128xbf16, #tpu.memory_space<vmem>>, vector<1x128x128xbf16>
    %245 = vector.shape_cast %244 : vector<1x128x128xbf16> to vector<128x128xbf16>
    %cst_138 = arith.constant dense<0.000000e+00> : vector<32x128xf32>
    %246 = tpu.matmul %243, %245, %cst_138 {dimension_numbers = #tpu.dot_dimension_numbers<[1], [0], [0], [1], [0, 0, 1, 1], [], []>} : vector<32x128xbf16>, vector<128x128xbf16>, vector<32x128xf32> -> vector<32x128xf32>
    %247 = arith.addf %242, %246 : vector<32x128xf32>
    %248 = vector.extract_strided_slice %218 {offsets = [192, 0], sizes = [32, 128], strides = [1, 1]} : vector<288x128xbf16> to vector<32x128xbf16>
    %c6_139 = arith.constant 6 : index
    %c0_140 = arith.constant 0 : index
    %c0_141 = arith.constant 0 : index
    %249 = vector.load %arg4[%c6_139, %c0_140, %c0_141] : memref<9x128x128xbf16, #tpu.memory_space<vmem>>, vector<1x128x128xbf16>
    %250 = vector.shape_cast %249 : vector<1x128x128xbf16> to vector<128x128xbf16>
    %cst_142 = arith.constant dense<0.000000e+00> : vector<32x128xf32>
    %251 = tpu.matmul %248, %250, %cst_142 {dimension_numbers = #tpu.dot_dimension_numbers<[1], [0], [0], [1], [0, 0, 1, 1], [], []>} : vector<32x128xbf16>, vector<128x128xbf16>, vector<32x128xf32> -> vector<32x128xf32>
    %252 = arith.addf %247, %251 : vector<32x128xf32>
    %253 = vector.extract_strided_slice %218 {offsets = [224, 0], sizes = [32, 128], strides = [1, 1]} : vector<288x128xbf16> to vector<32x128xbf16>
    %c7_143 = arith.constant 7 : index
    %c0_144 = arith.constant 0 : index
    %c0_145 = arith.constant 0 : index
    %254 = vector.load %arg4[%c7_143, %c0_144, %c0_145] : memref<9x128x128xbf16, #tpu.memory_space<vmem>>, vector<1x128x128xbf16>
    %255 = vector.shape_cast %254 : vector<1x128x128xbf16> to vector<128x128xbf16>
    %cst_146 = arith.constant dense<0.000000e+00> : vector<32x128xf32>
    %256 = tpu.matmul %253, %255, %cst_146 {dimension_numbers = #tpu.dot_dimension_numbers<[1], [0], [0], [1], [0, 0, 1, 1], [], []>} : vector<32x128xbf16>, vector<128x128xbf16>, vector<32x128xf32> -> vector<32x128xf32>
    %257 = arith.addf %252, %256 : vector<32x128xf32>
    %258 = vector.extract_strided_slice %218 {offsets = [256, 0], sizes = [32, 128], strides = [1, 1]} : vector<288x128xbf16> to vector<32x128xbf16>
    %c8_147 = arith.constant 8 : index
    %c0_148 = arith.constant 0 : index
    %c0_149 = arith.constant 0 : index
    %259 = vector.load %arg4[%c8_147, %c0_148, %c0_149] : memref<9x128x128xbf16, #tpu.memory_space<vmem>>, vector<1x128x128xbf16>
    %260 = vector.shape_cast %259 : vector<1x128x128xbf16> to vector<128x128xbf16>
    %cst_150 = arith.constant dense<0.000000e+00> : vector<32x128xf32>
    %261 = tpu.matmul %258, %260, %cst_150 {dimension_numbers = #tpu.dot_dimension_numbers<[1], [0], [0], [1], [0, 0, 1, 1], [], []>} : vector<32x128xbf16>, vector<128x128xbf16>, vector<32x128xf32> -> vector<32x128xf32>
    %262 = arith.addf %257, %261 : vector<32x128xf32>
    %c0_151 = arith.constant 0 : index
    %c0_152 = arith.constant 0 : index
    %263 = memref.load %arg15[%c0_151, %c0_152] : memref<1x1xf32, #tpu.memory_space<smem>>
    %cst_153 = arith.constant 0.000000e+00 : f32
    %264 = vector.broadcast %cst_153 : f32 to vector<32x128xf32>
    %265 = arith.cmpf ogt, %262, %264 : vector<32x128xf32>
    %266 = vector.broadcast %263 : f32 to vector<32x128xf32>
    %267 = arith.mulf %266, %262 : vector<32x128xf32>
    %268 = arith.select %265, %262, %267 : vector<32x128xi1>, vector<32x128xf32>
    %c0_154 = arith.constant 0 : index
    %c0_155 = arith.constant 0 : index
    %269 = vector.load %arg14[%c0_154, %c0_155] : memref<16x32xbf16, #tpu.memory_space<vmem>>, vector<16x32xbf16>
    %270 = arith.truncf %268 : vector<32x128xf32> to vector<32x128xbf16>
    %cst_156 = arith.constant dense<0.000000e+00> : vector<16x128xf32>
    %271 = tpu.matmul %269, %270, %cst_156 {dimension_numbers = #tpu.dot_dimension_numbers<[1], [0], [0], [1], [0, 0, 1, 1], [], []>} : vector<16x32xbf16>, vector<32x128xbf16>, vector<16x128xf32> -> vector<16x128xf32>
    %272 = arith.addf %187, %271 : vector<16x128xf32>
    %c0_157 = arith.constant 0 : index
    %c0_158 = arith.constant 0 : index
    %273 = vector.load %arg16[%c0_157, %c0_158] : memref<16x128xf32, #tpu.memory_space<vmem>>, vector<16x128xf32>
    tpu.vector_store %arg16[%c0_157, %c0_158], %272 {strides = array<i32>} : memref<16x128xf32, #tpu.memory_space<vmem>>, vector<16x128xf32>,
    return
  }
}

</mosaic_0001>

<llo_original>
// kernel: tpu_custom_call.1
$region0: #{tpu_custom_call.1}
  #allocation0 [shape = 'u32[]', space=smem, size = 0x4, offset = 0x4, fixed_abs, tag = 'smem constant byte address 0x4 - core index']
  #allocation1 [shape = 'u32[144,128]{1,0:T(1,128)}', space=vmem, size = 0x12000, scoped, tag = 'internal scratch']
  #allocation2 [shape = 'f32[1,1]{1,0:T(1,128)S(6)}', space=smem, size = 0x200, scoped, tag = 'scoped memory for tpu_custom_call.1']
  %s0 = inlined_call_operand.vmem [shape: f32[16,128], index: 0, kind: input, shape index: {}]
  %s1 = inlined_call_operand.vmem [shape: f32[16,1], index: 1, kind: input, shape index: {}]
  %s2 = inlined_call_operand.vmem [shape: f32[16,1], index: 2, kind: input, shape index: {}]
  %s3 = inlined_call_operand.vmem [shape: bf16[48,16], index: 3, kind: input, shape index: {}]
  %s4 = inlined_call_operand.vmem [shape: bf16[9,128,128], index: 4, kind: input, shape index: {}]
  %s5 = inlined_call_operand.vmem [shape: f32[9,48,1], index: 5, kind: input, shape index: {}]
  %s6 = inlined_call_operand.vmem [shape: f32[2,1,128], index: 6, kind: input, shape index: {}]
  %s7 = inlined_call_operand.vmem [shape: f32[16,16], index: 7, kind: input, shape index: {}]
  %s8 = inlined_call_operand.vmem [shape: f32[16,16], index: 8, kind: input, shape index: {}]
  %s9 = inlined_call_operand.vmem [shape: bf16[16,16], index: 9, kind: input, shape index: {}]
  %s10 = inlined_call_operand.vmem [shape: f32[16,1], index: 10, kind: input, shape index: {}]
  %s11 = inlined_call_operand.vmem [shape: f32[16,1], index: 11, kind: input, shape index: {}]
  %s12 = inlined_call_operand.vmem [shape: bf16[32,16], index: 12, kind: input, shape index: {}]
  %s13 = inlined_call_operand.vmem [shape: bf16[288,32], index: 13, kind: input, shape index: {}]
  %s14 = inlined_call_operand.vmem [shape: bf16[16,32], index: 14, kind: input, shape index: {}]
  %s15 = inlined_call_operand.<no memory space> [shape: f32[1,1], index: 15, kind: input, shape index: {}]
  %s16 = inlined_call_operand.hbm [shape: f32[16,128], index: 16, kind: output, shape index: {}]
  %s17 = sld [smem:[#allocation0]]
  $region74: #{tpu_custom_call.1} parent=0
    _
  %s19 = ssub.s32 1, %s17
  %s20 = scalar_select 0, %s19, %s17
  %21 = sst [smem:[#allocation2]] %s15
  $region1: #{tpu_custom_call.1} parent=0
    #allocation3 [shape = 'u8[8192]{0}', space=vmem, size = 0x2000, scoped, tag = 'output window, operand 0, single buffered']
    #allocation4 [shape = 's32[1]{0}', space=sflag, size = 0x4, scoped, tag = 'scoped memory for tpu_custom_call.1']
    %22 = vsyncpa [#allocation4], 0
    // Predicated region
    $region2: #{tpu_custom_call.1} parent=1 // pred_check
      _
    $region3: #{tpu_custom_call.1} parent=1 // pred_check_branch
      %24 = sbr.rel (0) target = $region5
    $region4: #{tpu_custom_call.1} parent=1 // pred_region
      _
    $region5: #{tpu_custom_call.1} parent=1 // pred_fallthru
      _
    // Predicated region
    $region6: #{tpu_custom_call.1} parent=1 // pred_check
      _
    $region7: #{tpu_custom_call.1} parent=1 // pred_check_branch
      %26 = sbr.rel (0) target = $region9
    $region8: #{tpu_custom_call.1} parent=1 // pred_region
      _
    $region9: #{tpu_custom_call.1} parent=1 // pred_fallthru
      _
    // Predicated region
    $region10: #{tpu_custom_call.1} parent=1 // pred_check
      _
    $region11: #{tpu_custom_call.1} parent=1 // pred_check_branch
      %28 = sbr.rel (0) target = $region13
    $region12: #{tpu_custom_call.1} parent=1 // pred_region
      _
    $region13: #{tpu_custom_call.1} parent=1 // pred_fallthru
      _
    // Predicated region
    $region14: #{tpu_custom_call.1} parent=1 // pred_check
      _
    $region15: #{tpu_custom_call.1} parent=1 // pred_check_branch
      %30 = sbr.rel (0) target = $region17
    $region16: #{tpu_custom_call.1} parent=1 // pred_region
      _
    $region17: #{tpu_custom_call.1} parent=1 // pred_fallthru
      _
    // Predicated region
    $region18: #{tpu_custom_call.1} parent=1 // pred_check
      _
    $region19: #{tpu_custom_call.1} parent=1 // pred_check_branch
      %32 = sbr.rel (0) target = $region21
    $region20: #{tpu_custom_call.1} parent=1 // pred_region
      _
    $region21: #{tpu_custom_call.1} parent=1 // pred_fallthru
      _
    // Predicated region
    $region22: #{tpu_custom_call.1} parent=1 // pred_check
      _
    $region23: #{tpu_custom_call.1} parent=1 // pred_check_branch
      %34 = sbr.rel (0) target = $region25
    $region24: #{tpu_custom_call.1} parent=1 // pred_region
      _
    $region25: #{tpu_custom_call.1} parent=1 // pred_fallthru
      _
    // Predicated region
    $region26: #{tpu_custom_call.1} parent=1 // pred_check
      _
    $region27: #{tpu_custom_call.1} parent=1 // pred_check_branch
      %36 = sbr.rel (0) target = $region29
    $region28: #{tpu_custom_call.1} parent=1 // pred_region
      _
    $region29: #{tpu_custom_call.1} parent=1 // pred_fallthru
      _
    // Predicated region
    $region30: #{tpu_custom_call.1} parent=1 // pred_check
      _
    $region31: #{tpu_custom_call.1} parent=1 // pred_check_branch
      %38 = sbr.rel (0) target = $region33
    $region32: #{tpu_custom_call.1} parent=1 // pred_region
      _
    $region33: #{tpu_custom_call.1} parent=1 // pred_fallthru
      _
    // Predicated region
    $region34: #{tpu_custom_call.1} parent=1 // pred_check
      _
    $region35: #{tpu_custom_call.1} parent=1 // pred_check_branch
      %40 = sbr.rel (0) target = $region37
    $region36: #{tpu_custom_call.1} parent=1 // pred_region
      _
    $region37: #{tpu_custom_call.1} parent=1 // pred_fallthru
      _
    // Predicated region
    $region38: #{tpu_custom_call.1} parent=1 // pred_check
      _
    $region39: #{tpu_custom_call.1} parent=1 // pred_check_branch
      %42 = sbr.rel (0) target = $region41
    $region40: #{tpu_custom_call.1} parent=1 // pred_region
      _
    $region41: #{tpu_custom_call.1} parent=1 // pred_fallthru
      _
    // Predicated region
    $region42: #{tpu_custom_call.1} parent=1 // pred_check
      _
    $region43: #{tpu_custom_call.1} parent=1 // pred_check_branch
      %44 = sbr.rel (0) target = $region45
    $region44: #{tpu_custom_call.1} parent=1 // pred_region
      _
    $region45: #{tpu_custom_call.1} parent=1 // pred_fallthru
      _
    // Predicated region
    $region46: #{tpu_custom_call.1} parent=1 // pred_check
      _
    $region47: #{tpu_custom_call.1} parent=1 // pred_check_branch
      %46 = sbr.rel (0) target = $region49
    $region48: #{tpu_custom_call.1} parent=1 // pred_region
      _
    $region49: #{tpu_custom_call.1} parent=1 // pred_fallthru
      _
    // Predicated region
    $region50: #{tpu_custom_call.1} parent=1 // pred_check
      _
    $region51: #{tpu_custom_call.1} parent=1 // pred_check_branch
      %48 = sbr.rel (0) target = $region53
    $region52: #{tpu_custom_call.1} parent=1 // pred_region
      _
    $region53: #{tpu_custom_call.1} parent=1 // pred_fallthru
      _
    // Predicated region
    $region54: #{tpu_custom_call.1} parent=1 // pred_check
      _
    $region55: #{tpu_custom_call.1} parent=1 // pred_check_branch
      %50 = sbr.rel (0) target = $region57
    $region56: #{tpu_custom_call.1} parent=1 // pred_region
      _
    $region57: #{tpu_custom_call.1} parent=1 // pred_fallthru
      _
    // Predicated region
    $region58: #{tpu_custom_call.1} parent=1 // pred_check
      _
    $region59: #{tpu_custom_call.1} parent=1 // pred_check_branch
      %52 = sbr.rel (0) target = $region61
    $region60: #{tpu_custom_call.1} parent=1 // pred_region
      _
    $region61: #{tpu_custom_call.1} parent=1 // pred_fallthru
      _
    // Predicated region
    $region62: #{tpu_custom_call.1} parent=1 // pred_check
      _
    $region63: #{tpu_custom_call.1} parent=1 // pred_check_branch
      %54 = sbr.rel (0) target = $region65
    $region64: #{tpu_custom_call.1} parent=1 // pred_region
      _
    $region65: #{tpu_custom_call.1} parent=1 // pred_fallthru
      _
    %v56 = vld [vmem:[%s0] sm:$0xff]
    %v57 = vld [vmem:[%s0 + $0x8] sm:$0xff]
    %v58 = vadd.f32 %v56, %v57
    %v59 = vrot.slane %v58, 4
    %v60 = vadd.f32 %v58, %v59
    %v61 = vrot.slane %v60, 2
    %v62 = vadd.f32 %v60, %v61
    %v63 = vrot.slane %v62, 1
    %v64 = vadd.f32 %v62, %v63
    %v65 = vrcp.pop 16.0
    %v66 = vmul.f32 %v64, %v65
    %v67 = vsub.f32 %v56, %v66
    %v68 = vsub.f32 %v57, %v66
    %v69 = vmul.f32 %v67, %v67
    %v70 = vmul.f32 %v68, %v68
    %v71 = vadd.f32 %v69, %v70
    %v72 = vrot.slane %v71, 4
    %v73 = vadd.f32 %v71, %v72
    %v74 = vrot.slane %v73, 2
    %v75 = vadd.f32 %v73, %v74
    %v76 = vrot.slane %v75, 1
    %v77 = vadd.f32 %v75, %v76
    %v78 = vmul.f32 %v77, %v65
    %v79 = vadd.f32 %v78, 1e-05
    %v80 = vrsqrt.pop %v79
    %v81 = vmul.f32 %v67, %v80
    %v82 = vmul.f32 %v68, %v80
    %v83 = vld [vmem:[%s1] sm:$0xff]
    %v84 = vld [vmem:[%s1 + $0x8] sm:$0xff]
    %86 = vset.pattern.permute.xlu0 0
    %87 = vperm.xlu0 %86, %v83
    %v88 = vpop.permute.xlu0 %87
    %91 = vset.pattern.permute.xlu0 0
    %92 = vperm.xlu0 %91, %v84
    %v93 = vpop.permute.xlu0 %92
    %v95 = vmul.f32 %v81, %v88
    %v96 = vmul.f32 %v82, %v93
    %v97 = vld [vmem:[%s2] sm:$0xff]
    %v98 = vld [vmem:[%s2 + $0x8] sm:$0xff]
    %100 = vset.pattern.permute.xlu0 0
    %101 = vperm.xlu0 %100, %v97
    %v102 = vpop.permute.xlu0 %101
    %105 = vset.pattern.permute.xlu0 0
    %106 = vperm.xlu0 %105, %v98
    %v107 = vpop.permute.xlu0 %106
    %v109 = vadd.f32 %v95, %v102
    %v110 = vadd.f32 %v96, %v107
    %v111 = vld [vmem:[%s3] sm:$0xf]
    %v112 = vld [vmem:[%s3 + $0x4] sm:$0xf]
    %v113 = vld [vmem:[%s3 + $0x8] sm:$0xf]
    %v114 = vld [vmem:[%s3 + $0xc] sm:$0xf]
    %v115 = vld [vmem:[%s3 + $0x10] sm:$0xf]
    %v116 = vld [vmem:[%s3 + $0x14] sm:$0xf]
    %v117 = vpack.c.bf16 %v110, %v109
    %v124 = vunpack.c.l.b16 %v111
    %v125 = vunpack.c.l.b16 %v112
    %v126 = vunpack.c.l.b16 %v113
    %v127 = vunpack.c.l.b16 %v114
    %v128 = vunpack.c.l.b16 %v115
    %v129 = vunpack.c.l.b16 %v116
    %v130 = vpack.c.b16 %v125, %v124
    %v131 = vpack.c.b16 %v127, %v126
    %v132 = vpack.c.b16 %v129, %v128
    %vm133 = vcmask 130048
    %v135 = vsel %vm133, %v130, 0
    %v138 = vsel %vm133, %v131, 0
    %v141 = vsel %vm133, %v132, 0
    %143 = vmatprep.subr.bf16.mxu0 0
    %144 = vmatpush1.bf16.msra.mxu0 0
    %145 = vmatprep.subr.bf16.mxu0 0
    %146 = vmatpush1.bf16.msra.mxu0 0
    %147 = vmatprep.subr.bf16.mxu0 0
    %148 = vmatpush1.bf16.msra.mxu0 0
    %149 = vmatprep.subr.bf16.mxu0 0
    %150 = vmatpush1.bf16.msra.mxu0 0
    %151 = vmatprep.subr.bf16.mxu0 0
    %152 = vmatpush1.bf16.msra.mxu0 0
    %153 = vmatprep.subr.bf16.mxu0 0
    %154 = vmatpush1.bf16.msra.mxu0 0
    %155 = vmatprep.subr.bf16.mxu0 0
    %156 = vmatpush1.bf16.msra.mxu0 0
    %157 = vmatprep.subr.bf16.mxu0 0
    %158 = vmatpush1.bf16.msra.mxu0 %v117
    %159 = vmatprep.subr.bf16.mxu0 0
    %160 = vmatpush2.bf16.msra.mxu0 0
    %161 = vmatprep.subr.bf16.mxu0 0
    %162 = vmatpush2.bf16.msra.mxu0 0
    %163 = vmatprep.subr.bf16.mxu0 0
    %164 = vmatpush2.bf16.msra.mxu0 0
    %165 = vmatprep.subr.bf16.mxu0 0
    %166 = vmatpush2.bf16.msra.mxu0 0
    %167 = vmatprep.subr.bf16.mxu0 0
    %168 = vmatpush2.bf16.msra.mxu0 0
    %169 = vmatprep.subr.bf16.mxu0 0
    %170 = vmatpush2.bf16.msra.mxu0 0
    %171 = vmatprep.subr.bf16.mxu0 0
    %172 = vmatpush2.bf16.msra.mxu0 0
    %173 = vmatprep.subr.bf16.mxu0 0
    %174 = vmatpush2.bf16.msra.mxu0 0
    %175 = vmatprep.mubr.bf16.mxu0 0
    %176 = vmatmul.mubr.bf16.gmra.mxu0 %v135
    %v177 = vpop.f32.mrf.mxu0
    %v178 = vadd.f32 0.0, %v177
    %v179 = vpop.f32.mrf.mxu0
    %v180 = vpop.f32.mrf.mxu0
    %v181 = vadd.f32 0.0, %v180
    %v182 = vpop.f32.mrf.mxu0
    %183 = vmatprep.mubr.bf16.mxu0 0
    %184 = vmatmul.mubr.bf16.gmra.mxu0 %v138
    %v185 = vpop.f32.mrf.mxu0
    %v186 = vadd.f32 0.0, %v185
    %v187 = vpop.f32.mrf.mxu0
    %v188 = vpop.f32.mrf.mxu0
    %v189 = vadd.f32 0.0, %v188
    %v190 = vpop.f32.mrf.mxu0
    %191 = vmatprep.mubr.bf16.mxu0 0
    %192 = vmatmul.mubr.bf16.gmra.mxu0 %v141
    %v193 = vpop.f32.mrf.mxu0
    %v194 = vadd.f32 0.0, %v193
    %v195 = vpop.f32.mrf.mxu0
    %v196 = vpop.f32.mrf.mxu0
    %v197 = vadd.f32 0.0, %v196
    %v198 = vpop.f32.mrf.mxu0
    %199 = vdwg.mxu0
    %v200 = vpack.c.bf16 %v181, %v178
    %v201 = vpack.c.bf16 %v189, %v186
    %v202 = vpack.c.bf16 %v197, %v194
    %v203 = vld [vmem:[%s4] sm:$0xf]
    %v204 = vld [vmem:[%s4 + $0x4] sm:$0xf]
    %v205 = vld [vmem:[%s4 + $0x8] sm:$0xf]
    %v206 = vld [vmem:[%s4 + $0xc] sm:$0xf]
    %v207 = vld [vmem:[%s4 + $0x10] sm:$0xf]
    %v208 = vld [vmem:[%s4 + $0x14] sm:$0xf]
    %v209 = vld [vmem:[%s4 + $0x18] sm:$0xf]
    %v210 = vld [vmem:[%s4 + $0x1c] sm:$0xf]
    %v211 = vld [vmem:[%s4 + $0x20] sm:$0xf]
    %v212 = vld [vmem:[%s4 + $0x24] sm:$0xf]
    %v213 = vld [vmem:[%s4 + $0x28] sm:$0xf]
    %v214 = vld [vmem:[%s4 + $0x2c] sm:$0xf]
    %v215 = vld [vmem:[%s4 + $0x30] sm:$0xf]
    %v216 = vld [vmem:[%s4 + $0x34] sm:$0xf]
    %v217 = vld [vmem:[%s4 + $0x38] sm:$0xf]
    %v218 = vld [vmem:[%s4 + $0x3c] sm:$0xf]
    %v235 = vunpack.c.l.b16 %v203
    %v236 = vunpack.c.l.b16 %v204
    %v237 = vunpack.c.l.b16 %v205
    %v238 = vunpack.c.l.b16 %v206
    %v239 = vunpack.c.l.b16 %v207
    %v240 = vunpack.c.l.b16 %v208
    %v241 = vunpack.c.l.b16 %v209
    %v242 = vunpack.c.l.b16 %v210
    %v243 = vunpack.c.l.b16 %v211
    %v244 = vunpack.c.l.b16 %v212
    %v245 = vunpack.c.l.b16 %v213
    %v246 = vunpack.c.l.b16 %v214
    %v247 = vunpack.c.l.b16 %v215
    %v248 = vunpack.c.l.b16 %v216
    %v249 = vunpack.c.l.b16 %v217
    %v250 = vunpack.c.l.b16 %v218
    %v251 = vpack.c.b16 %v236, %v235
    %v252 = vpack.c.b16 %v238, %v237
    %v253 = vpack.c.b16 %v240, %v239
    %v254 = vpack.c.b16 %v242, %v241
    %v255 = vpack.c.b16 %v244, %v243
    %v256 = vpack.c.b16 %v246, %v245
    %v257 = vpack.c.b16 %v248, %v247
    %v258 = vpack.c.b16 %v250, %v249
    %267 = vmatprep.subr.bf16.mxu0 0
    %268 = vmatpush1.bf16.msra.mxu0 %v258
    %269 = vmatprep.subr.bf16.mxu0 0
    %270 = vmatpush1.bf16.msra.mxu0 %v257
    %271 = vmatprep.subr.bf16.mxu0 0
    %272 = vmatpush1.bf16.msra.mxu0 %v256
    %273 = vmatprep.subr.bf16.mxu0 0
    %274 = vmatpush1.bf16.msra.mxu0 %v255
    %275 = vmatprep.subr.bf16.mxu0 0
    %276 = vmatpush1.bf16.msra.mxu0 %v254
    %277 = vmatprep.subr.bf16.mxu0 0
    %278 = vmatpush1.bf16.msra.mxu0 %v253
    %279 = vmatprep.subr.bf16.mxu0 0
    %280 = vmatpush1.bf16.msra.mxu0 %v252
    %281 = vmatprep.subr.bf16.mxu0 0
    %282 = vmatpush1.bf16.msra.mxu0 %v251
    %283 = vmatprep.subr.bf16.mxu0 0
    %284 = vmatpush2.bf16.msra.mxu0 0
    %285 = vmatprep.subr.bf16.mxu0 0
    %286 = vmatpush2.bf16.msra.mxu0 0
    %287 = vmatprep.subr.bf16.mxu0 0
    %288 = vmatpush2.bf16.msra.mxu0 0
    %289 = vmatprep.subr.bf16.mxu0 0
    %290 = vmatpush2.bf16.msra.mxu0 0
    %291 = vmatprep.subr.bf16.mxu0 0
    %292 = vmatpush2.bf16.msra.mxu0 0
    %293 = vmatprep.subr.bf16.mxu0 0
    %294 = vmatpush2.bf16.msra.mxu0 0
    %295 = vmatprep.subr.bf16.mxu0 0
    %296 = vmatpush2.bf16.msra.mxu0 0
    %297 = vmatprep.subr.bf16.mxu0 0
    %298 = vmatpush2.bf16.msra.mxu0 0
    %299 = vmatprep.mubr.bf16.mxu0 0
    %300 = vmatmul.mubr.bf16.gmra.mxu0 %v200
    %v301 = vpop.f32.mrf.mxu0
    %v302 = vadd.f32 0.0, %v301
    %v303 = vpop.f32.mrf.mxu0
    %v304 = vpop.f32.mrf.mxu0
    %v305 = vadd.f32 0.0, %v304
    %v306 = vpop.f32.mrf.mxu0
    %307 = vmatprep.mubr.bf16.mxu0 0
    %308 = vmatmul.mubr.bf16.gmra.mxu0 %v201
    %v309 = vpop.f32.mrf.mxu0
    %v310 = vadd.f32 0.0, %v309
    %v311 = vpop.f32.mrf.mxu0
    %v312 = vpop.f32.mrf.mxu0
    %v313 = vadd.f32 0.0, %v312
    %v314 = vpop.f32.mrf.mxu0
    %315 = vmatprep.mubr.bf16.mxu0 0
    %316 = vmatmul.mubr.bf16.gmra.mxu0 %v202
    %v317 = vpop.f32.mrf.mxu0
    %v318 = vadd.f32 0.0, %v317
    %v319 = vpop.f32.mrf.mxu0
    %v320 = vpop.f32.mrf.mxu0
    %v321 = vadd.f32 0.0, %v320
    %v322 = vpop.f32.mrf.mxu0
    %323 = vdwg.mxu0
    %v324 = vld [vmem:[%s5] sm:$0xff]
    %v325 = vld [vmem:[%s5 + $0x8] sm:$0xff]
    %v326 = vld [vmem:[%s5 + $0x10] sm:$0xff]
    %v327 = vld [vmem:[%s5 + $0x18] sm:$0xff]
    %v328 = vld [vmem:[%s5 + $0x20] sm:$0xff]
    %v329 = vld [vmem:[%s5 + $0x28] sm:$0xff]
    %331 = vset.pattern.permute.xlu0 0
    %332 = vperm.xlu0 %331, %v324
    %v333 = vpop.permute.xlu0 %332
    %336 = vset.pattern.permute.xlu0 0
    %337 = vperm.xlu0 %336, %v325
    %v338 = vpop.permute.xlu0 %337
    %341 = vset.pattern.permute.xlu0 0
    %342 = vperm.xlu0 %341, %v326
    %v343 = vpop.permute.xlu0 %342
    %346 = vset.pattern.permute.xlu0 0
    %347 = vperm.xlu0 %346, %v327
    %v348 = vpop.permute.xlu0 %347
    %351 = vset.pattern.permute.xlu0 0
    %352 = vperm.xlu0 %351, %v328
    %v353 = vpop.permute.xlu0 %352
    %356 = vset.pattern.permute.xlu0 0
    %357 = vperm.xlu0 %356, %v329
    %v358 = vpop.permute.xlu0 %357
    %v360 = vmul.f32 %v302, %v333
    %v361 = vmul.f32 %v305, %v338
    %v362 = vmul.f32 %v310, %v343
    %v363 = vmul.f32 %v313, %v348
    %v364 = vmul.f32 %v318, %v353
    %v365 = vmul.f32 %v321, %v358
    %s366 = scalar_lea.vmem %s4, 64
    %v367 = vld [vmem:[%s366] sm:$0xf]
    %v368 = vld [vmem:[%s366 + $0x4] sm:$0xf]
    %v369 = vld [vmem:[%s366 + $0x8] sm:$0xf]
    %v370 = vld [vmem:[%s366 + $0xc] sm:$0xf]
    %v371 = vld [vmem:[%s366 + $0x10] sm:$0xf]
    %v372 = vld [vmem:[%s366 + $0x14] sm:$0xf]
    %v373 = vld [vmem:[%s366 + $0x18] sm:$0xf]
    %v374 = vld [vmem:[%s366 + $0x1c] sm:$0xf]
    %v375 = vld [vmem:[%s366 + $0x20] sm:$0xf]
    %v376 = vld [vmem:[%s366 + $0x24] sm:$0xf]
    %v377 = vld [vmem:[%s366 + $0x28] sm:$0xf]
    %v378 = vld [vmem:[%s366 + $0x2c] sm:$0xf]
    %v379 = vld [vmem:[%s366 + $0x30] sm:$0xf]
    %v380 = vld [vmem:[%s366 + $0x34] sm:$0xf]
    %v381 = vld [vmem:[%s366 + $0x38] sm:$0xf]
    %v382 = vld [vmem:[%s366 + $0x3c] sm:$0xf]
    %v399 = vunpack.c.l.b16 %v367
    %v400 = vunpack.c.l.b16 %v368
    %v401 = vunpack.c.l.b16 %v369
    %v402 = vunpack.c.l.b16 %v370
    %v403 = vunpack.c.l.b16 %v371
    %v404 = vunpack.c.l.b16 %v372
    %v405 = vunpack.c.l.b16 %v373
    %v406 = vunpack.c.l.b16 %v374
    %v407 = vunpack.c.l.b16 %v375
    %v408 = vunpack.c.l.b16 %v376
    %v409 = vunpack.c.l.b16 %v377
    %v410 = vunpack.c.l.b16 %v378
    %v411 = vunpack.c.l.b16 %v379
    %v412 = vunpack.c.l.b16 %v380
    %v413 = vunpack.c.l.b16 %v381
    %v414 = vunpack.c.l.b16 %v382
    %v415 = vpack.c.b16 %v400, %v399
    %v416 = vpack.c.b16 %v402, %v401
    %v417 = vpack.c.b16 %v404, %v403
    %v418 = vpack.c.b16 %v406, %v405
    %v419 = vpack.c.b16 %v408, %v407
    %v420 = vpack.c.b16 %v410, %v409
    %v421 = vpack.c.b16 %v412, %v411
    %v422 = vpack.c.b16 %v414, %v413
    %431 = vmatprep.subr.bf16.mxu0 0
    %432 = vmatpush1.bf16.msra.mxu0 %v422
    %433 = vmatprep.subr.bf16.mxu0 0
    %434 = vmatpush1.bf16.msra.mxu0 %v421
    %435 = vmatprep.subr.bf16.mxu0 0
    %436 = vmatpush1.bf16.msra.mxu0 %v420
    %437 = vmatprep.subr.bf16.mxu0 0
    %438 = vmatpush1.bf16.msra.mxu0 %v419
    %439 = vmatprep.subr.bf16.mxu0 0
    %440 = vmatpush1.bf16.msra.mxu0 %v418
    %441 = vmatprep.subr.bf16.mxu0 0
    %442 = vmatpush1.bf16.msra.mxu0 %v417
    %443 = vmatprep.subr.bf16.mxu0 0
    %444 = vmatpush1.bf16.msra.mxu0 %v416
    %445 = vmatprep.subr.bf16.mxu0 0
    %446 = vmatpush1.bf16.msra.mxu0 %v415
    %447 = vmatprep.subr.bf16.mxu0 0
    %448 = vmatpush2.bf16.msra.mxu0 0
    %449 = vmatprep.subr.bf16.mxu0 0
    %450 = vmatpush2.bf16.msra.mxu0 0
    %451 = vmatprep.subr.bf16.mxu0 0
    %452 = vmatpush2.bf16.msra.mxu0 0
    %453 = vmatprep.subr.bf16.mxu0 0
    %454 = vmatpush2.bf16.msra.mxu0 0
    %455 = vmatprep.subr.bf16.mxu0 0
    %456 = vmatpush2.bf16.msra.mxu0 0
    %457 = vmatprep.subr.bf16.mxu0 0
    %458 = vmatpush2.bf16.msra.mxu0 0
    %459 = vmatprep.subr.bf16.mxu0 0
    %460 = vmatpush2.bf16.msra.mxu0 0
    %461 = vmatprep.subr.bf16.mxu0 0
    %462 = vmatpush2.bf16.msra.mxu0 0
    %463 = vmatprep.mubr.bf16.mxu0 0
    %464 = vmatmul.mubr.bf16.gmra.mxu0 %v200
    %v465 = vpop.f32.mrf.mxu0
    %v466 = vadd.f32 0.0, %v465
    %v467 = vpop.f32.mrf.mxu0
    %v468 = vpop.f32.mrf.mxu0
    %v469 = vadd.f32 0.0, %v468
    %v470 = vpop.f32.mrf.mxu0
    %471 = vmatprep.mubr.bf16.mxu0 0
    %472 = vmatmul.mubr.bf16.gmra.mxu0 %v201
    %v473 = vpop.f32.mrf.mxu0
    %v474 = vadd.f32 0.0, %v473
    %v475 = vpop.f32.mrf.mxu0
    %v476 = vpop.f32.mrf.mxu0
    %v477 = vadd.f32 0.0, %v476
    %v478 = vpop.f32.mrf.mxu0
    %479 = vmatprep.mubr.bf16.mxu0 0
    %480 = vmatmul.mubr.bf16.gmra.mxu0 %v202
    %v481 = vpop.f32.mrf.mxu0
    %v482 = vadd.f32 0.0, %v481
    %v483 = vpop.f32.mrf.mxu0
    %v484 = vpop.f32.mrf.mxu0
    %v485 = vadd.f32 0.0, %v484
    %v486 = vpop.f32.mrf.mxu0
    %487 = vdwg.mxu0
    %s488 = scalar_lea.vmem %s5, 48
    %v489 = vld [vmem:[%s488] sm:$0xff]
    %v490 = vld [vmem:[%s488 + $0x8] sm:$0xff]
    %v491 = vld [vmem:[%s488 + $0x10] sm:$0xff]
    %v492 = vld [vmem:[%s488 + $0x18] sm:$0xff]
    %v493 = vld [vmem:[%s488 + $0x20] sm:$0xff]
    %v494 = vld [vmem:[%s488 + $0x28] sm:$0xff]
    %496 = vset.pattern.permute.xlu0 0
    %497 = vperm.xlu0 %496, %v489
    %v498 = vpop.permute.xlu0 %497
    %501 = vset.pattern.permute.xlu0 0
    %502 = vperm.xlu0 %501, %v490
    %v503 = vpop.permute.xlu0 %502
    %506 = vset.pattern.permute.xlu0 0
    %507 = vperm.xlu0 %506, %v491
    %v508 = vpop.permute.xlu0 %507
    %511 = vset.pattern.permute.xlu0 0
    %512 = vperm.xlu0 %511, %v492
    %v513 = vpop.permute.xlu0 %512
    %516 = vset.pattern.permute.xlu0 0
    %517 = vperm.xlu0 %516, %v493
    %v518 = vpop.permute.xlu0 %517
    %521 = vset.pattern.permute.xlu0 0
    %522 = vperm.xlu0 %521, %v494
    %v523 = vpop.permute.xlu0 %522
    %v525 = vmul.f32 %v466, %v498
    %v526 = vmul.f32 %v469, %v503
    %v527 = vmul.f32 %v474, %v508
    %v528 = vmul.f32 %v477, %v513
    %v529 = vmul.f32 %v482, %v518
    %v530 = vmul.f32 %v485, %v523
    %v531 = vadd.f32 %v360, %v525
    %v532 = vadd.f32 %v361, %v526
    %v533 = vadd.f32 %v362, %v527
    %v534 = vadd.f32 %v363, %v528
    %v535 = vadd.f32 %v364, %v529
    %v536 = vadd.f32 %v365, %v530
    %s537 = scalar_lea.vmem %s4, 128
    %v538 = vld [vmem:[%s537] sm:$0xf]
    %v539 = vld [vmem:[%s537 + $0x4] sm:$0xf]
    %v540 = vld [vmem:[%s537 + $0x8] sm:$0xf]
    %v541 = vld [vmem:[%s537 + $0xc] sm:$0xf]
    %v542 = vld [vmem:[%s537 + $0x10] sm:$0xf]
    %v543 = vld [vmem:[%s537 + $0x14] sm:$0xf]
    %v544 = vld [vmem:[%s537 + $0x18] sm:$0xf]
    %v545 = vld [vmem:[%s537 + $0x1c] sm:$0xf]
    %v546 = vld [vmem:[%s537 + $0x20] sm:$0xf]
    %v547 = vld [vmem:[%s537 + $0x24] sm:$0xf]
    %v548 = vld [vmem:[%s537 + $0x28] sm:$0xf]
    %v549 = vld [vmem:[%s537 + $0x2c] sm:$0xf]
    %v550 = vld [vmem:[%s537 + $0x30] sm:$0xf]
    %v551 = vld [vmem:[%s537 + $0x34] sm:$0xf]
    %v552 = vld [vmem:[%s537 + $0x38] sm:$0xf]
    %v553 = vld [vmem:[%s537 + $0x3c] sm:$0xf]
    %v570 = vunpack.c.l.b16 %v538
    %v571 = vunpack.c.l.b16 %v539
    %v572 = vunpack.c.l.b16 %v540
    %v573 = vunpack.c.l.b16 %v541
    %v574 = vunpack.c.l.b16 %v542
    %v575 = vunpack.c.l.b16 %v543
    %v576 = vunpack.c.l.b16 %v544
    %v577 = vunpack.c.l.b16 %v545
    %v578 = vunpack.c.l.b16 %v546
    %v579 = vunpack.c.l.b16 %v547
    %v580 = vunpack.c.l.b16 %v548
    %v581 = vunpack.c.l.b16 %v549
    %v582 = vunpack.c.l.b16 %v550
    %v583 = vunpack.c.l.b16 %v551
    %v584 = vunpack.c.l.b16 %v552
    %v585 = vunpack.c.l.b16 %v553
    %v586 = vpack.c.b16 %v571, %v570
    %v587 = vpack.c.b16 %v573, %v572
    %v588 = vpack.c.b16 %v575, %v574
    %v589 = vpack.c.b16 %v577, %v576
    %v590 = vpack.c.b16 %v579, %v578
    %v591 = vpack.c.b16 %v581, %v580
    %v592 = vpack.c.b16 %v583, %v582
    %v593 = vpack.c.b16 %v585, %v584
    %602 = vmatprep.subr.bf16.mxu0 0
    %603 = vmatpush1.bf16.msra.mxu0 %v593
    %604 = vmatprep.subr.bf16.mxu0 0
    %605 = vmatpush1.bf16.msra.mxu0 %v592
    %606 = vmatprep.subr.bf16.mxu0 0
    %607 = vmatpush1.bf16.msra.mxu0 %v591
    %608 = vmatprep.subr.bf16.mxu0 0
    %609 = vmatpush1.bf16.msra.mxu0 %v590
    %610 = vmatprep.subr.bf16.mxu0 0
    %611 = vmatpush1.bf16.msra.mxu0 %v589
    %612 = vmatprep.subr.bf16.mxu0 0
    %613 = vmatpush1.bf16.msra.mxu0 %v588
    %614 = vmatprep.subr.bf16.mxu0 0
    %615 = vmatpush1.bf16.msra.mxu0 %v587
    %616 = vmatprep.subr.bf16.mxu0 0
    %617 = vmatpush1.bf16.msra.mxu0 %v586
    %618 = vmatprep.subr.bf16.mxu0 0
    %619 = vmatpush2.bf16.msra.mxu0 0
    %620 = vmatprep.subr.bf16.mxu0 0
    %621 = vmatpush2.bf16.msra.mxu0 0
    %622 = vmatprep.subr.bf16.mxu0 0
    %623 = vmatpush2.bf16.msra.mxu0 0
    %624 = vmatprep.subr.bf16.mxu0 0
    %625 = vmatpush2.bf16.msra.mxu0 0
    %626 = vmatprep.subr.bf16.mxu0 0
    %627 = vmatpush2.bf16.msra.mxu0 0
    %628 = vmatprep.subr.bf16.mxu0 0
    %629 = vmatpush2.bf16.msra.mxu0 0
    %630 = vmatprep.subr.bf16.mxu0 0
    %631 = vmatpush2.bf16.msra.mxu0 0
    %632 = vmatprep.subr.bf16.mxu0 0
    %633 = vmatpush2.bf16.msra.mxu0 0
    %634 = vmatprep.mubr.bf16.mxu0 0
    %635 = vmatmul.mubr.bf16.gmra.mxu0 %v200
    %v636 = vpop.f32.mrf.mxu0
    %v637 = vadd.f32 0.0, %v636
    %v638 = vpop.f32.mrf.mxu0
    %v639 = vpop.f32.mrf.mxu0
    %v640 = vadd.f32 0.0, %v639
    %v641 = vpop.f32.mrf.mxu0
    %642 = vmatprep.mubr.bf16.mxu0 0
    %643 = vmatmul.mubr.bf16.gmra.mxu0 %v201
    %v644 = vpop.f32.mrf.mxu0
    %v645 = vadd.f32 0.0, %v644
    %v646 = vpop.f32.mrf.mxu0
    %v647 = vpop.f32.mrf.mxu0
    %v648 = vadd.f32 0.0, %v647
    %v649 = vpop.f32.mrf.mxu0
    %650 = vmatprep.mubr.bf16.mxu0 0
    %651 = vmatmul.mubr.bf16.gmra.mxu0 %v202
    %v652 = vpop.f32.mrf.mxu0
    %v653 = vadd.f32 0.0, %v652
    %v654 = vpop.f32.mrf.mxu0
    %v655 = vpop.f32.mrf.mxu0
    %v656 = vadd.f32 0.0, %v655
    %v657 = vpop.f32.mrf.mxu0
    %658 = vdwg.mxu0
    %s659 = scalar_lea.vmem %s5, 96
    %v660 = vld [vmem:[%s659] sm:$0xff]
    %v661 = vld [vmem:[%s659 + $0x8] sm:$0xff]
    %v662 = vld [vmem:[%s659 + $0x10] sm:$0xff]
    %v663 = vld [vmem:[%s659 + $0x18] sm:$0xff]
    %v664 = vld [vmem:[%s659 + $0x20] sm:$0xff]
    %v665 = vld [vmem:[%s659 + $0x28] sm:$0xff]
    %667 = vset.pattern.permute.xlu0 0
    %668 = vperm.xlu0 %667, %v660
    %v669 = vpop.permute.xlu0 %668
    %672 = vset.pattern.permute.xlu0 0
    %673 = vperm.xlu0 %672, %v661
    %v674 = vpop.permute.xlu0 %673
    %677 = vset.pattern.permute.xlu0 0
    %678 = vperm.xlu0 %677, %v662
    %v679 = vpop.permute.xlu0 %678
    %682 = vset.pattern.permute.xlu0 0
    %683 = vperm.xlu0 %682, %v663
    %v684 = vpop.permute.xlu0 %683
    %687 = vset.pattern.permute.xlu0 0
    %688 = vperm.xlu0 %687, %v664
    %v689 = vpop.permute.xlu0 %688
    %692 = vset.pattern.permute.xlu0 0
    %693 = vperm.xlu0 %692, %v665
    %v694 = vpop.permute.xlu0 %693
    %v696 = vmul.f32 %v637, %v669
    %v697 = vmul.f32 %v640, %v674
    %v698 = vmul.f32 %v645, %v679
    %v699 = vmul.f32 %v648, %v684
    %v700 = vmul.f32 %v653, %v689
    %v701 = vmul.f32 %v656, %v694
    %v702 = vadd.f32 %v531, %v696
    %v703 = vadd.f32 %v532, %v697
    %v704 = vadd.f32 %v533, %v698
    %v705 = vadd.f32 %v534, %v699
    %v706 = vadd.f32 %v535, %v700
    %v707 = vadd.f32 %v536, %v701
    %s708 = scalar_lea.vmem %s4, 192
    %v709 = vld [vmem:[%s708] sm:$0xf]
    %v710 = vld [vmem:[%s708 + $0x4] sm:$0xf]
    %v711 = vld [vmem:[%s708 + $0x8] sm:$0xf]
    %v712 = vld [vmem:[%s708 + $0xc] sm:$0xf]
    %v713 = vld [vmem:[%s708 + $0x10] sm:$0xf]
    %v714 = vld [vmem:[%s708 + $0x14] sm:$0xf]
    %v715 = vld [vmem:[%s708 + $0x18] sm:$0xf]
    %v716 = vld [vmem:[%s708 + $0x1c] sm:$0xf]
    %v717 = vld [vmem:[%s708 + $0x20] sm:$0xf]
    %v718 = vld [vmem:[%s708 + $0x24] sm:$0xf]
    %v719 = vld [vmem:[%s708 + $0x28] sm:$0xf]
    %v720 = vld [vmem:[%s708 + $0x2c] sm:$0xf]
    %v721 = vld [vmem:[%s708 + $0x30] sm:$0xf]
    %v722 = vld [vmem:[%s708 + $0x34] sm:$0xf]
    %v723 = vld [vmem:[%s708 + $0x38] sm:$0xf]
    %v724 = vld [vmem:[%s708 + $0x3c] sm:$0xf]
    %v741 = vunpack.c.l.b16 %v709
    %v742 = vunpack.c.l.b16 %v710
    %v743 = vunpack.c.l.b16 %v711
    %v744 = vunpack.c.l.b16 %v712
    %v745 = vunpack.c.l.b16 %v713
    %v746 = vunpack.c.l.b16 %v714
    %v747 = vunpack.c.l.b16 %v715
    %v748 = vunpack.c.l.b16 %v716
    %v749 = vunpack.c.l.b16 %v717
    %v750 = vunpack.c.l.b16 %v718
    %v751 = vunpack.c.l.b16 %v719
    %v752 = vunpack.c.l.b16 %v720
    %v753 = vunpack.c.l.b16 %v721
    %v754 = vunpack.c.l.b16 %v722
    %v755 = vunpack.c.l.b16 %v723
    %v756 = vunpack.c.l.b16 %v724
    %v757 = vpack.c.b16 %v742, %v741
    %v758 = vpack.c.b16 %v744, %v743
    %v759 = vpack.c.b16 %v746, %v745
    %v760 = vpack.c.b16 %v748, %v747
    %v761 = vpack.c.b16 %v750, %v749
    %v762 = vpack.c.b16 %v752, %v751
    %v763 = vpack.c.b16 %v754, %v753
    %v764 = vpack.c.b16 %v756, %v755
    %773 = vmatprep.subr.bf16.mxu0 0
    %774 = vmatpush1.bf16.msra.mxu0 %v764
    %775 = vmatprep.subr.bf16.mxu0 0
    %776 = vmatpush1.bf16.msra.mxu0 %v763
    %777 = vmatprep.subr.bf16.mxu0 0
    %778 = vmatpush1.bf16.msra.mxu0 %v762
    %779 = vmatprep.subr.bf16.mxu0 0
    %780 = vmatpush1.bf16.msra.mxu0 %v761
    %781 = vmatprep.subr.bf16.mxu0 0
    %782 = vmatpush1.bf16.msra.mxu0 %v760
    %783 = vmatprep.subr.bf16.mxu0 0
    %784 = vmatpush1.bf16.msra.mxu0 %v759
    %785 = vmatprep.subr.bf16.mxu0 0
    %786 = vmatpush1.bf16.msra.mxu0 %v758
    %787 = vmatprep.subr.bf16.mxu0 0
    %788 = vmatpush1.bf16.msra.mxu0 %v757
    %789 = vmatprep.subr.bf16.mxu0 0
    %790 = vmatpush2.bf16.msra.mxu0 0
    %791 = vmatprep.subr.bf16.mxu0 0
    %792 = vmatpush2.bf16.msra.mxu0 0
    %793 = vmatprep.subr.bf16.mxu0 0
    %794 = vmatpush2.bf16.msra.mxu0 0
    %795 = vmatprep.subr.bf16.mxu0 0
    %796 = vmatpush2.bf16.msra.mxu0 0
    %797 = vmatprep.subr.bf16.mxu0 0
    %798 = vmatpush2.bf16.msra.mxu0 0
    %799 = vmatprep.subr.bf16.mxu0 0
    %800 = vmatpush2.bf16.msra.mxu0 0
    %801 = vmatprep.subr.bf16.mxu0 0
    %802 = vmatpush2.bf16.msra.mxu0 0
    %803 = vmatprep.subr.bf16.mxu0 0
    %804 = vmatpush2.bf16.msra.mxu0 0
    %805 = vmatprep.mubr.bf16.mxu0 0
    %806 = vmatmul.mubr.bf16.gmra.mxu0 %v200
    %v807 = vpop.f32.mrf.mxu0
    %v808 = vadd.f32 0.0, %v807
    %v809 = vpop.f32.mrf.mxu0
    %v810 = vpop.f32.mrf.mxu0
    %v811 = vadd.f32 0.0, %v810
    %v812 = vpop.f32.mrf.mxu0
    %813 = vmatprep.mubr.bf16.mxu0 0
    %814 = vmatmul.mubr.bf16.gmra.mxu0 %v201
    %v815 = vpop.f32.mrf.mxu0
    %v816 = vadd.f32 0.0, %v815
    %v817 = vpop.f32.mrf.mxu0
    %v818 = vpop.f32.mrf.mxu0
    %v819 = vadd.f32 0.0, %v818
    %v820 = vpop.f32.mrf.mxu0
    %821 = vmatprep.mubr.bf16.mxu0 0
    %822 = vmatmul.mubr.bf16.gmra.mxu0 %v202
    %v823 = vpop.f32.mrf.mxu0
    %v824 = vadd.f32 0.0, %v823
    %v825 = vpop.f32.mrf.mxu0
    %v826 = vpop.f32.mrf.mxu0
    %v827 = vadd.f32 0.0, %v826
    %v828 = vpop.f32.mrf.mxu0
    %829 = vdwg.mxu0
    %s830 = scalar_lea.vmem %s5, 144
    %v831 = vld [vmem:[%s830] sm:$0xff]
    %v832 = vld [vmem:[%s830 + $0x8] sm:$0xff]
    %v833 = vld [vmem:[%s830 + $0x10] sm:$0xff]
    %v834 = vld [vmem:[%s830 + $0x18] sm:$0xff]
    %v835 = vld [vmem:[%s830 + $0x20] sm:$0xff]
    %v836 = vld [vmem:[%s830 + $0x28] sm:$0xff]
    %838 = vset.pattern.permute.xlu0 0
    %839 = vperm.xlu0 %838, %v831
    %v840 = vpop.permute.xlu0 %839
    %843 = vset.pattern.permute.xlu0 0
    %844 = vperm.xlu0 %843, %v832
    %v845 = vpop.permute.xlu0 %844
    %848 = vset.pattern.permute.xlu0 0
    %849 = vperm.xlu0 %848, %v833
    %v850 = vpop.permute.xlu0 %849
    %853 = vset.pattern.permute.xlu0 0
    %854 = vperm.xlu0 %853, %v834
    %v855 = vpop.permute.xlu0 %854
    %858 = vset.pattern.permute.xlu0 0
    %859 = vperm.xlu0 %858, %v835
    %v860 = vpop.permute.xlu0 %859
    %863 = vset.pattern.permute.xlu0 0
    %864 = vperm.xlu0 %863, %v836
    %v865 = vpop.permute.xlu0 %864
    %v867 = vmul.f32 %v808, %v840
    %v868 = vmul.f32 %v811, %v845
    %v869 = vmul.f32 %v816, %v850
    %v870 = vmul.f32 %v819, %v855
    %v871 = vmul.f32 %v824, %v860
    %v872 = vmul.f32 %v827, %v865
    %v873 = vadd.f32 %v702, %v867
    %v874 = vadd.f32 %v703, %v868
    %v875 = vadd.f32 %v704, %v869
    %v876 = vadd.f32 %v705, %v870
    %v877 = vadd.f32 %v706, %v871
    %v878 = vadd.f32 %v707, %v872
    %s879 = scalar_lea.vmem %s4, 256
    %v880 = vld [vmem:[%s879] sm:$0xf]
    %v881 = vld [vmem:[%s879 + $0x4] sm:$0xf]
    %v882 = vld [vmem:[%s879 + $0x8] sm:$0xf]
    %v883 = vld [vmem:[%s879 + $0xc] sm:$0xf]
    %v884 = vld [vmem:[%s879 + $0x10] sm:$0xf]
    %v885 = vld [vmem:[%s879 + $0x14] sm:$0xf]
    %v886 = vld [vmem:[%s879 + $0x18] sm:$0xf]
    %v887 = vld [vmem:[%s879 + $0x1c] sm:$0xf]
    %v888 = vld [vmem:[%s879 + $0x20] sm:$0xf]
    %v889 = vld [vmem:[%s879 + $0x24] sm:$0xf]
    %v890 = vld [vmem:[%s879 + $0x28] sm:$0xf]
    %v891 = vld [vmem:[%s879 + $0x2c] sm:$0xf]
    %v892 = vld [vmem:[%s879 + $0x30] sm:$0xf]
    %v893 = vld [vmem:[%s879 + $0x34] sm:$0xf]
    %v894 = vld [vmem:[%s879 + $0x38] sm:$0xf]
    %v895 = vld [vmem:[%s879 + $0x3c] sm:$0xf]
    %v912 = vunpack.c.l.b16 %v880
    %v913 = vunpack.c.l.b16 %v881
    %v914 = vunpack.c.l.b16 %v882
    %v915 = vunpack.c.l.b16 %v883
    %v916 = vunpack.c.l.b16 %v884
    %v917 = vunpack.c.l.b16 %v885
    %v918 = vunpack.c.l.b16 %v886
    %v919 = vunpack.c.l.b16 %v887
    %v920 = vunpack.c.l.b16 %v888
    %v921 = vunpack.c.l.b16 %v889
    %v922 = vunpack.c.l.b16 %v890
    %v923 = vunpack.c.l.b16 %v891
    %v924 = vunpack.c.l.b16 %v892
    %v925 = vunpack.c.l.b16 %v893
    %v926 = vunpack.c.l.b16 %v894
    %v927 = vunpack.c.l.b16 %v895
    %v928 = vpack.c.b16 %v913, %v912
    %v929 = vpack.c.b16 %v915, %v914
    %v930 = vpack.c.b16 %v917, %v916
    %v931 = vpack.c.b16 %v919, %v918
    %v932 = vpack.c.b16 %v921, %v920
    %v933 = vpack.c.b16 %v923, %v922
    %v934 = vpack.c.b16 %v925, %v924
    %v935 = vpack.c.b16 %v927, %v926
    %944 = vmatprep.subr.bf16.mxu0 0
    %945 = vmatpush1.bf16.msra.mxu0 %v935
    %946 = vmatprep.subr.bf16.mxu0 0
    %947 = vmatpush1.bf16.msra.mxu0 %v934
    %948 = vmatprep.subr.bf16.mxu0 0
    %949 = vmatpush1.bf16.msra.mxu0 %v933
    %950 = vmatprep.subr.bf16.mxu0 0
    %951 = vmatpush1.bf16.msra.mxu0 %v932
    %952 = vmatprep.subr.bf16.mxu0 0
    %953 = vmatpush1.bf16.msra.mxu0 %v931
    %954 = vmatprep.subr.bf16.mxu0 0
    %955 = vmatpush1.bf16.msra.mxu0 %v930
    %956 = vmatprep.subr.bf16.mxu0 0
    %957 = vmatpush1.bf16.msra.mxu0 %v929
    %958 = vmatprep.subr.bf16.mxu0 0
    %959 = vmatpush1.bf16.msra.mxu0 %v928
    %960 = vmatprep.subr.bf16.mxu0 0
    %961 = vmatpush2.bf16.msra.mxu0 0
    %962 = vmatprep.subr.bf16.mxu0 0
    %963 = vmatpush2.bf16.msra.mxu0 0
    %964 = vmatprep.subr.bf16.mxu0 0
    %965 = vmatpush2.bf16.msra.mxu0 0
    %966 = vmatprep.subr.bf16.mxu0 0
    %967 = vmatpush2.bf16.msra.mxu0 0
    %968 = vmatprep.subr.bf16.mxu0 0
    %969 = vmatpush2.bf16.msra.mxu0 0
    %970 = vmatprep.subr.bf16.mxu0 0
    %971 = vmatpush2.bf16.msra.mxu0 0
    %972 = vmatprep.subr.bf16.mxu0 0
    %973 = vmatpush2.bf16.msra.mxu0 0
    %974 = vmatprep.subr.bf16.mxu0 0
    %975 = vmatpush2.bf16.msra.mxu0 0
    %976 = vmatprep.mubr.bf16.mxu0 0
    %977 = vmatmul.mubr.bf16.gmra.mxu0 %v200
    %v978 = vpop.f32.mrf.mxu0
    %v979 = vadd.f32 0.0, %v978
    %v980 = vpop.f32.mrf.mxu0
    %v981 = vpop.f32.mrf.mxu0
    %v982 = vadd.f32 0.0, %v981
    %v983 = vpop.f32.mrf.mxu0
    %984 = vmatprep.mubr.bf16.mxu0 0
    %985 = vmatmul.mubr.bf16.gmra.mxu0 %v201
    %v986 = vpop.f32.mrf.mxu0
    %v987 = vadd.f32 0.0, %v986
    %v988 = vpop.f32.mrf.mxu0
    %v989 = vpop.f32.mrf.mxu0
    %v990 = vadd.f32 0.0, %v989
    %v991 = vpop.f32.mrf.mxu0
    %992 = vmatprep.mubr.bf16.mxu0 0
    %993 = vmatmul.mubr.bf16.gmra.mxu0 %v202
    %v994 = vpop.f32.mrf.mxu0
    %v995 = vadd.f32 0.0, %v994
    %v996 = vpop.f32.mrf.mxu0
    %v997 = vpop.f32.mrf.mxu0
    %v998 = vadd.f32 0.0, %v997
    %v999 = vpop.f32.mrf.mxu0
    %1000 = vdwg.mxu0
    %s1001 = scalar_lea.vmem %s5, 192
    %v1002 = vld [vmem:[%s1001] sm:$0xff]
    %v1003 = vld [vmem:[%s1001 + $0x8] sm:$0xff]
    %v1004 = vld [vmem:[%s1001 + $0x10] sm:$0xff]
    %v1005 = vld [vmem:[%s1001 + $0x18] sm:$0xff]
    %v1006 = vld [vmem:[%s1001 + $0x20] sm:$0xff]
    %v1007 = vld [vmem:[%s1001 + $0x28] sm:$0xff]
    %1009 = vset.pattern.permute.xlu0 0
    %1010 = vperm.xlu0 %1009, %v1002
    %v1011 = vpop.permute.xlu0 %1010
    %1014 = vset.pattern.permute.xlu0 0
    %1015 = vperm.xlu0 %1014, %v1003
    %v1016 = vpop.permute.xlu0 %1015
    %1019 = vset.pattern.permute.xlu0 0
    %1020 = vperm.xlu0 %1019, %v1004
    %v1021 = vpop.permute.xlu0 %1020
    %1024 = vset.pattern.permute.xlu0 0
    %1025 = vperm.xlu0 %1024, %v1005
    %v1026 = vpop.permute.xlu0 %1025
    %1029 = vset.pattern.permute.xlu0 0
    %1030 = vperm.xlu0 %1029, %v1006
    %v1031 = vpop.permute.xlu0 %1030
    %1034 = vset.pattern.permute.xlu0 0
    %1035 = vperm.xlu0 %1034, %v1007
    %v1036 = vpop.permute.xlu0 %1035
    %v1038 = vmul.f32 %v979, %v1011
    %v1039 = vmul.f32 %v982, %v1016
    %v1040 = vmul.f32 %v987, %v1021
    %v1041 = vmul.f32 %v990, %v1026
    %v1042 = vmul.f32 %v995, %v1031
    %v1043 = vmul.f32 %v998, %v1036
    %v1044 = vadd.f32 %v873, %v1038
    %v1045 = vadd.f32 %v874, %v1039
    %v1046 = vadd.f32 %v875, %v1040
    %v1047 = vadd.f32 %v876, %v1041
    %v1048 = vadd.f32 %v877, %v1042
    %v1049 = vadd.f32 %v878, %v1043
    %s1050 = scalar_lea.vmem %s4, 320
    %v1051 = vld [vmem:[%s1050] sm:$0xf]
    %v1052 = vld [vmem:[%s1050 + $0x4] sm:$0xf]
    %v1053 = vld [vmem:[%s1050 + $0x8] sm:$0xf]
    %v1054 = vld [vmem:[%s1050 + $0xc] sm:$0xf]
    %v1055 = vld [vmem:[%s1050 + $0x10] sm:$0xf]
    %v1056 = vld [vmem:[%s1050 + $0x14] sm:$0xf]
    %v1057 = vld [vmem:[%s1050 + $0x18] sm:$0xf]
    %v1058 = vld [vmem:[%s1050 + $0x1c] sm:$0xf]
    %v1059 = vld [vmem:[%s1050 + $0x20] sm:$0xf]
    %v1060 = vld [vmem:[%s1050 + $0x24] sm:$0xf]
    %v1061 = vld [vmem:[%s1050 + $0x28] sm:$0xf]
    %v1062 = vld [vmem:[%s1050 + $0x2c] sm:$0xf]
    %v1063 = vld [vmem:[%s1050 + $0x30] sm:$0xf]
    %v1064 = vld [vmem:[%s1050 + $0x34] sm:$0xf]
    %v1065 = vld [vmem:[%s1050 + $0x38] sm:$0xf]
    %v1066 = vld [vmem:[%s1050 + $0x3c] sm:$0xf]
    %v1083 = vunpack.c.l.b16 %v1051
    %v1084 = vunpack.c.l.b16 %v1052
    %v1085 = vunpack.c.l.b16 %v1053
    %v1086 = vunpack.c.l.b16 %v1054
    %v1087 = vunpack.c.l.b16 %v1055
    %v1088 = vunpack.c.l.b16 %v1056
    %v1089 = vunpack.c.l.b16 %v1057
    %v1090 = vunpack.c.l.b16 %v1058
    %v1091 = vunpack.c.l.b16 %v1059
    %v1092 = vunpack.c.l.b16 %v1060
    %v1093 = vunpack.c.l.b16 %v1061
    %v1094 = vunpack.c.l.b16 %v1062
    %v1095 = vunpack.c.l.b16 %v1063
    %v1096 = vunpack.c.l.b16 %v1064
    %v1097 = vunpack.c.l.b16 %v1065
    %v1098 = vunpack.c.l.b16 %v1066
    %v1099 = vpack.c.b16 %v1084, %v1083
    %v1100 = vpack.c.b16 %v1086, %v1085
    %v1101 = vpack.c.b16 %v1088, %v1087
    %v1102 = vpack.c.b16 %v1090, %v1089
    %v1103 = vpack.c.b16 %v1092, %v1091
    %v1104 = vpack.c.b16 %v1094, %v1093
    %v1105 = vpack.c.b16 %v1096, %v1095
    %v1106 = vpack.c.b16 %v1098, %v1097
    %1115 = vmatprep.subr.bf16.mxu0 0
    %1116 = vmatpush1.bf16.msra.mxu0 %v1106
    %1117 = vmatprep.subr.bf16.mxu0 0
    %1118 = vmatpush1.bf16.msra.mxu0 %v1105
    %1119 = vmatprep.subr.bf16.mxu0 0
    %1120 = vmatpush1.bf16.msra.mxu0 %v1104
    %1121 = vmatprep.subr.bf16.mxu0 0
    %1122 = vmatpush1.bf16.msra.mxu0 %v1103
    %1123 = vmatprep.subr.bf16.mxu0 0
    %1124 = vmatpush1.bf16.msra.mxu0 %v1102
    %1125 = vmatprep.subr.bf16.mxu0 0
    %1126 = vmatpush1.bf16.msra.mxu0 %v1101
    %1127 = vmatprep.subr.bf16.mxu0 0
    %1128 = vmatpush1.bf16.msra.mxu0 %v1100
    %1129 = vmatprep.subr.bf16.mxu0 0
    %1130 = vmatpush1.bf16.msra.mxu0 %v1099
    %1131 = vmatprep.subr.bf16.mxu0 0
    %1132 = vmatpush2.bf16.msra.mxu0 0
    %1133 = vmatprep.subr.bf16.mxu0 0
    %1134 = vmatpush2.bf16.msra.mxu0 0
    %1135 = vmatprep.subr.bf16.mxu0 0
    %1136 = vmatpush2.bf16.msra.mxu0 0
    %1137 = vmatprep.subr.bf16.mxu0 0
    %1138 = vmatpush2.bf16.msra.mxu0 0
    %1139 = vmatprep.subr.bf16.mxu0 0
    %1140 = vmatpush2.bf16.msra.mxu0 0
    %1141 = vmatprep.subr.bf16.mxu0 0
    %1142 = vmatpush2.bf16.msra.mxu0 0
    %1143 = vmatprep.subr.bf16.mxu0 0
    %1144 = vmatpush2.bf16.msra.mxu0 0
    %1145 = vmatprep.subr.bf16.mxu0 0
    %1146 = vmatpush2.bf16.msra.mxu0 0
    %1147 = vmatprep.mubr.bf16.mxu0 0
    %1148 = vmatmul.mubr.bf16.gmra.mxu0 %v200
    %v1149 = vpop.f32.mrf.mxu0
    %v1150 = vadd.f32 0.0, %v1149
    %v1151 = vpop.f32.mrf.mxu0
    %v1152 = vpop.f32.mrf.mxu0
    %v1153 = vadd.f32 0.0, %v1152
    %v1154 = vpop.f32.mrf.mxu0
    %1155 = vmatprep.mubr.bf16.mxu0 0
    %1156 = vmatmul.mubr.bf16.gmra.mxu0 %v201
    %v1157 = vpop.f32.mrf.mxu0
    %v1158 = vadd.f32 0.0, %v1157
    %v1159 = vpop.f32.mrf.mxu0
    %v1160 = vpop.f32.mrf.mxu0
    %v1161 = vadd.f32 0.0, %v1160
    %v1162 = vpop.f32.mrf.mxu0
    %1163 = vmatprep.mubr.bf16.mxu0 0
    %1164 = vmatmul.mubr.bf16.gmra.mxu0 %v202
    %v1165 = vpop.f32.mrf.mxu0
    %v1166 = vadd.f32 0.0, %v1165
    %v1167 = vpop.f32.mrf.mxu0
    %v1168 = vpop.f32.mrf.mxu0
    %v1169 = vadd.f32 0.0, %v1168
    %v1170 = vpop.f32.mrf.mxu0
    %1171 = vdwg.mxu0
    %s1172 = scalar_lea.vmem %s5, 240
    %v1173 = vld [vmem:[%s1172] sm:$0xff]
    %v1174 = vld [vmem:[%s1172 + $0x8] sm:$0xff]
    %v1175 = vld [vmem:[%s1172 + $0x10] sm:$0xff]
    %v1176 = vld [vmem:[%s1172 + $0x18] sm:$0xff]
    %v1177 = vld [vmem:[%s1172 + $0x20] sm:$0xff]
    %v1178 = vld [vmem:[%s1172 + $0x28] sm:$0xff]
    %1180 = vset.pattern.permute.xlu0 0
    %1181 = vperm.xlu0 %1180, %v1173
    %v1182 = vpop.permute.xlu0 %1181
    %1185 = vset.pattern.permute.xlu0 0
    %1186 = vperm.xlu0 %1185, %v1174
    %v1187 = vpop.permute.xlu0 %1186
    %1190 = vset.pattern.permute.xlu0 0
    %1191 = vperm.xlu0 %1190, %v1175
    %v1192 = vpop.permute.xlu0 %1191
    %1195 = vset.pattern.permute.xlu0 0
    %1196 = vperm.xlu0 %1195, %v1176
    %v1197 = vpop.permute.xlu0 %1196
    %1200 = vset.pattern.permute.xlu0 0
    %1201 = vperm.xlu0 %1200, %v1177
    %v1202 = vpop.permute.xlu0 %1201
    %1205 = vset.pattern.permute.xlu0 0
    %1206 = vperm.xlu0 %1205, %v1178
    %v1207 = vpop.permute.xlu0 %1206
    %v1209 = vmul.f32 %v1150, %v1182
    %v1210 = vmul.f32 %v1153, %v1187
    %v1211 = vmul.f32 %v1158, %v1192
    %v1212 = vmul.f32 %v1161, %v1197
    %v1213 = vmul.f32 %v1166, %v1202
    %v1214 = vmul.f32 %v1169, %v1207
    %v1215 = vadd.f32 %v1044, %v1209
    %v1216 = vadd.f32 %v1045, %v1210
    %v1217 = vadd.f32 %v1046, %v1211
    %v1218 = vadd.f32 %v1047, %v1212
    %v1219 = vadd.f32 %v1048, %v1213
    %v1220 = vadd.f32 %v1049, %v1214
    %s1221 = scalar_lea.vmem %s4, 384
    %v1222 = vld [vmem:[%s1221] sm:$0xf]
    %v1223 = vld [vmem:[%s1221 + $0x4] sm:$0xf]
    %v1224 = vld [vmem:[%s1221 + $0x8] sm:$0xf]
    %v1225 = vld [vmem:[%s1221 + $0xc] sm:$0xf]
    %v1226 = vld [vmem:[%s1221 + $0x10] sm:$0xf]
    %v1227 = vld [vmem:[%s1221 + $0x14] sm:$0xf]
    %v1228 = vld [vmem:[%s1221 + $0x18] sm:$0xf]
    %v1229 = vld [vmem:[%s1221 + $0x1c] sm:$0xf]
    %v1230 = vld [vmem:[%s1221 + $0x20] sm:$0xf]
    %v1231 = vld [vmem:[%s1221 + $0x24] sm:$0xf]
    %v1232 = vld [vmem:[%s1221 + $0x28] sm:$0xf]
    %v1233 = vld [vmem:[%s1221 + $0x2c] sm:$0xf]
    %v1234 = vld [vmem:[%s1221 + $0x30] sm:$0xf]
    %v1235 = vld [vmem:[%s1221 + $0x34] sm:$0xf]
    %v1236 = vld [vmem:[%s1221 + $0x38] sm:$0xf]
    %v1237 = vld [vmem:[%s1221 + $0x3c] sm:$0xf]
    %v1254 = vunpack.c.l.b16 %v1222
    %v1255 = vunpack.c.l.b16 %v1223
    %v1256 = vunpack.c.l.b16 %v1224
    %v1257 = vunpack.c.l.b16 %v1225
    %v1258 = vunpack.c.l.b16 %v1226
    %v1259 = vunpack.c.l.b16 %v1227
    %v1260 = vunpack.c.l.b16 %v1228
    %v1261 = vunpack.c.l.b16 %v1229
    %v1262 = vunpack.c.l.b16 %v1230
    %v1263 = vunpack.c.l.b16 %v1231
    %v1264 = vunpack.c.l.b16 %v1232
    %v1265 = vunpack.c.l.b16 %v1233
    %v1266 = vunpack.c.l.b16 %v1234
    %v1267 = vunpack.c.l.b16 %v1235
    %v1268 = vunpack.c.l.b16 %v1236
    %v1269 = vunpack.c.l.b16 %v1237
    %v1270 = vpack.c.b16 %v1255, %v1254
    %v1271 = vpack.c.b16 %v1257, %v1256
    %v1272 = vpack.c.b16 %v1259, %v1258
    %v1273 = vpack.c.b16 %v1261, %v1260
    %v1274 = vpack.c.b16 %v1263, %v1262
    %v1275 = vpack.c.b16 %v1265, %v1264
    %v1276 = vpack.c.b16 %v1267, %v1266
    %v1277 = vpack.c.b16 %v1269, %v1268
    %1286 = vmatprep.subr.bf16.mxu0 0
    %1287 = vmatpush1.bf16.msra.mxu0 %v1277
    %1288 = vmatprep.subr.bf16.mxu0 0
    %1289 = vmatpush1.bf16.msra.mxu0 %v1276
    %1290 = vmatprep.subr.bf16.mxu0 0
    %1291 = vmatpush1.bf16.msra.mxu0 %v1275
    %1292 = vmatprep.subr.bf16.mxu0 0
    %1293 = vmatpush1.bf16.msra.mxu0 %v1274
    %1294 = vmatprep.subr.bf16.mxu0 0
    %1295 = vmatpush1.bf16.msra.mxu0 %v1273
    %1296 = vmatprep.subr.bf16.mxu0 0
    %1297 = vmatpush1.bf16.msra.mxu0 %v1272
    %1298 = vmatprep.subr.bf16.mxu0 0
    %1299 = vmatpush1.bf16.msra.mxu0 %v1271
    %1300 = vmatprep.subr.bf16.mxu0 0
    %1301 = vmatpush1.bf16.msra.mxu0 %v1270
    %1302 = vmatprep.subr.bf16.mxu0 0
    %1303 = vmatpush2.bf16.msra.mxu0 0
    %1304 = vmatprep.subr.bf16.mxu0 0
    %1305 = vmatpush2.bf16.msra.mxu0 0
    %1306 = vmatprep.subr.bf16.mxu0 0
    %1307 = vmatpush2.bf16.msra.mxu0 0
    %1308 = vmatprep.subr.bf16.mxu0 0
    %1309 = vmatpush2.bf16.msra.mxu0 0
    %1310 = vmatprep.subr.bf16.mxu0 0
    %1311 = vmatpush2.bf16.msra.mxu0 0
    %1312 = vmatprep.subr.bf16.mxu0 0
    %1313 = vmatpush2.bf16.msra.mxu0 0
    %1314 = vmatprep.subr.bf16.mxu0 0
    %1315 = vmatpush2.bf16.msra.mxu0 0
    %1316 = vmatprep.subr.bf16.mxu0 0
    %1317 = vmatpush2.bf16.msra.mxu0 0
    %1318 = vmatprep.mubr.bf16.mxu0 0
    %1319 = vmatmul.mubr.bf16.gmra.mxu0 %v200
    %v1320 = vpop.f32.mrf.mxu0
    %v1321 = vadd.f32 0.0, %v1320
    %v1322 = vpop.f32.mrf.mxu0
    %v1323 = vpop.f32.mrf.mxu0
    %v1324 = vadd.f32 0.0, %v1323
    %v1325 = vpop.f32.mrf.mxu0
    %1326 = vmatprep.mubr.bf16.mxu0 0
    %1327 = vmatmul.mubr.bf16.gmra.mxu0 %v201
    %v1328 = vpop.f32.mrf.mxu0
    %v1329 = vadd.f32 0.0, %v1328
    %v1330 = vpop.f32.mrf.mxu0
    %v1331 = vpop.f32.mrf.mxu0
    %v1332 = vadd.f32 0.0, %v1331
    %v1333 = vpop.f32.mrf.mxu0
    %1334 = vmatprep.mubr.bf16.mxu0 0
    %1335 = vmatmul.mubr.bf16.gmra.mxu0 %v202
    %v1336 = vpop.f32.mrf.mxu0
    %v1337 = vadd.f32 0.0, %v1336
    %v1338 = vpop.f32.mrf.mxu0
    %v1339 = vpop.f32.mrf.mxu0
    %v1340 = vadd.f32 0.0, %v1339
    %v1341 = vpop.f32.mrf.mxu0
    %1342 = vdwg.mxu0
    %s1343 = scalar_lea.vmem %s5, 288
    %v1344 = vld [vmem:[%s1343] sm:$0xff]
    %v1345 = vld [vmem:[%s1343 + $0x8] sm:$0xff]
    %v1346 = vld [vmem:[%s1343 + $0x10] sm:$0xff]
    %v1347 = vld [vmem:[%s1343 + $0x18] sm:$0xff]
    %v1348 = vld [vmem:[%s1343 + $0x20] sm:$0xff]
    %v1349 = vld [vmem:[%s1343 + $0x28] sm:$0xff]
    %1351 = vset.pattern.permute.xlu0 0
    %1352 = vperm.xlu0 %1351, %v1344
    %v1353 = vpop.permute.xlu0 %1352
    %1356 = vset.pattern.permute.xlu0 0
    %1357 = vperm.xlu0 %1356, %v1345
    %v1358 = vpop.permute.xlu0 %1357
    %1361 = vset.pattern.permute.xlu0 0
    %1362 = vperm.xlu0 %1361, %v1346
    %v1363 = vpop.permute.xlu0 %1362
    %1366 = vset.pattern.permute.xlu0 0
    %1367 = vperm.xlu0 %1366, %v1347
    %v1368 = vpop.permute.xlu0 %1367
    %1371 = vset.pattern.permute.xlu0 0
    %1372 = vperm.xlu0 %1371, %v1348
    %v1373 = vpop.permute.xlu0 %1372
    %1376 = vset.pattern.permute.xlu0 0
    %1377 = vperm.xlu0 %1376, %v1349
    %v1378 = vpop.permute.xlu0 %1377
    %v1380 = vmul.f32 %v1321, %v1353
    %v1381 = vmul.f32 %v1324, %v1358
    %v1382 = vmul.f32 %v1329, %v1363
    %v1383 = vmul.f32 %v1332, %v1368
    %v1384 = vmul.f32 %v1337, %v1373
    %v1385 = vmul.f32 %v1340, %v1378
    %v1386 = vadd.f32 %v1215, %v1380
    %v1387 = vadd.f32 %v1216, %v1381
    %v1388 = vadd.f32 %v1217, %v1382
    %v1389 = vadd.f32 %v1218, %v1383
    %v1390 = vadd.f32 %v1219, %v1384
    %v1391 = vadd.f32 %v1220, %v1385
    %s1392 = scalar_lea.vmem %s4, 448
    %v1393 = vld [vmem:[%s1392] sm:$0xf]
    %v1394 = vld [vmem:[%s1392 + $0x4] sm:$0xf]
    %v1395 = vld [vmem:[%s1392 + $0x8] sm:$0xf]
    %v1396 = vld [vmem:[%s1392 + $0xc] sm:$0xf]
    %v1397 = vld [vmem:[%s1392 + $0x10] sm:$0xf]
    %v1398 = vld [vmem:[%s1392 + $0x14] sm:$0xf]
    %v1399 = vld [vmem:[%s1392 + $0x18] sm:$0xf]
    %v1400 = vld [vmem:[%s1392 + $0x1c] sm:$0xf]
    %v1401 = vld [vmem:[%s1392 + $0x20] sm:$0xf]
    %v1402 = vld [vmem:[%s1392 + $0x24] sm:$0xf]
    %v1403 = vld [vmem:[%s1392 + $0x28] sm:$0xf]
    %v1404 = vld [vmem:[%s1392 + $0x2c] sm:$0xf]
    %v1405 = vld [vmem:[%s1392 + $0x30] sm:$0xf]
    %v1406 = vld [vmem:[%s1392 + $0x34] sm:$0xf]
    %v1407 = vld [vmem:[%s1392 + $0x38] sm:$0xf]
    %v1408 = vld [vmem:[%s1392 + $0x3c] sm:$0xf]
    %v1425 = vunpack.c.l.b16 %v1393
    %v1426 = vunpack.c.l.b16 %v1394
    %v1427 = vunpack.c.l.b16 %v1395
    %v1428 = vunpack.c.l.b16 %v1396
    %v1429 = vunpack.c.l.b16 %v1397
    %v1430 = vunpack.c.l.b16 %v1398
    %v1431 = vunpack.c.l.b16 %v1399
    %v1432 = vunpack.c.l.b16 %v1400
    %v1433 = vunpack.c.l.b16 %v1401
    %v1434 = vunpack.c.l.b16 %v1402
    %v1435 = vunpack.c.l.b16 %v1403
    %v1436 = vunpack.c.l.b16 %v1404
    %v1437 = vunpack.c.l.b16 %v1405
    %v1438 = vunpack.c.l.b16 %v1406
    %v1439 = vunpack.c.l.b16 %v1407
    %v1440 = vunpack.c.l.b16 %v1408
    %v1441 = vpack.c.b16 %v1426, %v1425
    %v1442 = vpack.c.b16 %v1428, %v1427
    %v1443 = vpack.c.b16 %v1430, %v1429
    %v1444 = vpack.c.b16 %v1432, %v1431
    %v1445 = vpack.c.b16 %v1434, %v1433
    %v1446 = vpack.c.b16 %v1436, %v1435
    %v1447 = vpack.c.b16 %v1438, %v1437
    %v1448 = vpack.c.b16 %v1440, %v1439
    %1457 = vmatprep.subr.bf16.mxu0 0
    %1458 = vmatpush1.bf16.msra.mxu0 %v1448
    %1459 = vmatprep.subr.bf16.mxu0 0
    %1460 = vmatpush1.bf16.msra.mxu0 %v1447
    %1461 = vmatprep.subr.bf16.mxu0 0
    %1462 = vmatpush1.bf16.msra.mxu0 %v1446
    %1463 = vmatprep.subr.bf16.mxu0 0
    %1464 = vmatpush1.bf16.msra.mxu0 %v1445
    %1465 = vmatprep.subr.bf16.mxu0 0
    %1466 = vmatpush1.bf16.msra.mxu0 %v1444
    %1467 = vmatprep.subr.bf16.mxu0 0
    %1468 = vmatpush1.bf16.msra.mxu0 %v1443
    %1469 = vmatprep.subr.bf16.mxu0 0
    %1470 = vmatpush1.bf16.msra.mxu0 %v1442
    %1471 = vmatprep.subr.bf16.mxu0 0
    %1472 = vmatpush1.bf16.msra.mxu0 %v1441
    %1473 = vmatprep.subr.bf16.mxu0 0
    %1474 = vmatpush2.bf16.msra.mxu0 0
    %1475 = vmatprep.subr.bf16.mxu0 0
    %1476 = vmatpush2.bf16.msra.mxu0 0
    %1477 = vmatprep.subr.bf16.mxu0 0
    %1478 = vmatpush2.bf16.msra.mxu0 0
    %1479 = vmatprep.subr.bf16.mxu0 0
    %1480 = vmatpush2.bf16.msra.mxu0 0
    %1481 = vmatprep.subr.bf16.mxu0 0
    %1482 = vmatpush2.bf16.msra.mxu0 0
    %1483 = vmatprep.subr.bf16.mxu0 0
    %1484 = vmatpush2.bf16.msra.mxu0 0
    %1485 = vmatprep.subr.bf16.mxu0 0
    %1486 = vmatpush2.bf16.msra.mxu0 0
    %1487 = vmatprep.subr.bf16.mxu0 0
    %1488 = vmatpush2.bf16.msra.mxu0 0
    %1489 = vmatprep.mubr.bf16.mxu0 0
    %1490 = vmatmul.mubr.bf16.gmra.mxu0 %v200
    %v1491 = vpop.f32.mrf.mxu0
    %v1492 = vadd.f32 0.0, %v1491
    %v1493 = vpop.f32.mrf.mxu0
    %v1494 = vpop.f32.mrf.mxu0
    %v1495 = vadd.f32 0.0, %v1494
    %v1496 = vpop.f32.mrf.mxu0
    %1497 = vmatprep.mubr.bf16.mxu0 0
    %1498 = vmatmul.mubr.bf16.gmra.mxu0 %v201
    %v1499 = vpop.f32.mrf.mxu0
    %v1500 = vadd.f32 0.0, %v1499
    %v1501 = vpop.f32.mrf.mxu0
    %v1502 = vpop.f32.mrf.mxu0
    %v1503 = vadd.f32 0.0, %v1502
    %v1504 = vpop.f32.mrf.mxu0
    %1505 = vmatprep.mubr.bf16.mxu0 0
    %1506 = vmatmul.mubr.bf16.gmra.mxu0 %v202
    %v1507 = vpop.f32.mrf.mxu0
    %v1508 = vadd.f32 0.0, %v1507
    %v1509 = vpop.f32.mrf.mxu0
    %v1510 = vpop.f32.mrf.mxu0
    %v1511 = vadd.f32 0.0, %v1510
    %v1512 = vpop.f32.mrf.mxu0
    %1513 = vdwg.mxu0
    %s1514 = scalar_lea.vmem %s5, 336
    %v1515 = vld [vmem:[%s1514] sm:$0xff]
    %v1516 = vld [vmem:[%s1514 + $0x8] sm:$0xff]
    %v1517 = vld [vmem:[%s1514 + $0x10] sm:$0xff]
    %v1518 = vld [vmem:[%s1514 + $0x18] sm:$0xff]
    %v1519 = vld [vmem:[%s1514 + $0x20] sm:$0xff]
    %v1520 = vld [vmem:[%s1514 + $0x28] sm:$0xff]
    %1522 = vset.pattern.permute.xlu0 0
    %1523 = vperm.xlu0 %1522, %v1515
    %v1524 = vpop.permute.xlu0 %1523
    %1527 = vset.pattern.permute.xlu0 0
    %1528 = vperm.xlu0 %1527, %v1516
    %v1529 = vpop.permute.xlu0 %1528
    %1532 = vset.pattern.permute.xlu0 0
    %1533 = vperm.xlu0 %1532, %v1517
    %v1534 = vpop.permute.xlu0 %1533
    %1537 = vset.pattern.permute.xlu0 0
    %1538 = vperm.xlu0 %1537, %v1518
    %v1539 = vpop.permute.xlu0 %1538
    %1542 = vset.pattern.permute.xlu0 0
    %1543 = vperm.xlu0 %1542, %v1519
    %v1544 = vpop.permute.xlu0 %1543
    %1547 = vset.pattern.permute.xlu0 0
    %1548 = vperm.xlu0 %1547, %v1520
    %v1549 = vpop.permute.xlu0 %1548
    %v1551 = vmul.f32 %v1492, %v1524
    %v1552 = vmul.f32 %v1495, %v1529
    %v1553 = vmul.f32 %v1500, %v1534
    %v1554 = vmul.f32 %v1503, %v1539
    %v1555 = vmul.f32 %v1508, %v1544
    %v1556 = vmul.f32 %v1511, %v1549
    %v1557 = vadd.f32 %v1386, %v1551
    %v1558 = vadd.f32 %v1387, %v1552
    %v1559 = vadd.f32 %v1388, %v1553
    %v1560 = vadd.f32 %v1389, %v1554
    %v1561 = vadd.f32 %v1390, %v1555
    %v1562 = vadd.f32 %v1391, %v1556
    %s1563 = scalar_lea.vmem %s4, 512
    %v1564 = vld [vmem:[%s1563] sm:$0xf]
    %v1565 = vld [vmem:[%s1563 + $0x4] sm:$0xf]
    %v1566 = vld [vmem:[%s1563 + $0x8] sm:$0xf]
    %v1567 = vld [vmem:[%s1563 + $0xc] sm:$0xf]
    %v1568 = vld [vmem:[%s1563 + $0x10] sm:$0xf]
    %v1569 = vld [vmem:[%s1563 + $0x14] sm:$0xf]
    %v1570 = vld [vmem:[%s1563 + $0x18] sm:$0xf]
    %v1571 = vld [vmem:[%s1563 + $0x1c] sm:$0xf]
    %v1572 = vld [vmem:[%s1563 + $0x20] sm:$0xf]
    %v1573 = vld [vmem:[%s1563 + $0x24] sm:$0xf]
    %v1574 = vld [vmem:[%s1563 + $0x28] sm:$0xf]
    %v1575 = vld [vmem:[%s1563 + $0x2c] sm:$0xf]
    %v1576 = vld [vmem:[%s1563 + $0x30] sm:$0xf]
    %v1577 = vld [vmem:[%s1563 + $0x34] sm:$0xf]
    %v1578 = vld [vmem:[%s1563 + $0x38] sm:$0xf]
    %v1579 = vld [vmem:[%s1563 + $0x3c] sm:$0xf]
    %v1596 = vunpack.c.l.b16 %v1564
    %v1597 = vunpack.c.l.b16 %v1565
    %v1598 = vunpack.c.l.b16 %v1566
    %v1599 = vunpack.c.l.b16 %v1567
    %v1600 = vunpack.c.l.b16 %v1568
    %v1601 = vunpack.c.l.b16 %v1569
    %v1602 = vunpack.c.l.b16 %v1570
    %v1603 = vunpack.c.l.b16 %v1571
    %v1604 = vunpack.c.l.b16 %v1572
    %v1605 = vunpack.c.l.b16 %v1573
    %v1606 = vunpack.c.l.b16 %v1574
    %v1607 = vunpack.c.l.b16 %v1575
    %v1608 = vunpack.c.l.b16 %v1576
    %v1609 = vunpack.c.l.b16 %v1577
    %v1610 = vunpack.c.l.b16 %v1578
    %v1611 = vunpack.c.l.b16 %v1579
    %v1612 = vpack.c.b16 %v1597, %v1596
    %v1613 = vpack.c.b16 %v1599, %v1598
    %v1614 = vpack.c.b16 %v1601, %v1600
    %v1615 = vpack.c.b16 %v1603, %v1602
    %v1616 = vpack.c.b16 %v1605, %v1604
    %v1617 = vpack.c.b16 %v1607, %v1606
    %v1618 = vpack.c.b16 %v1609, %v1608
    %v1619 = vpack.c.b16 %v1611, %v1610
    %1628 = vmatprep.subr.bf16.mxu0 0
    %1629 = vmatpush1.bf16.msra.mxu0 %v1619
    %1630 = vmatprep.subr.bf16.mxu0 0
    %1631 = vmatpush1.bf16.msra.mxu0 %v1618
    %1632 = vmatprep.subr.bf16.mxu0 0
    %1633 = vmatpush1.bf16.msra.mxu0 %v1617
    %1634 = vmatprep.subr.bf16.mxu0 0
    %1635 = vmatpush1.bf16.msra.mxu0 %v1616
    %1636 = vmatprep.subr.bf16.mxu0 0
    %1637 = vmatpush1.bf16.msra.mxu0 %v1615
    %1638 = vmatprep.subr.bf16.mxu0 0
    %1639 = vmatpush1.bf16.msra.mxu0 %v1614
    %1640 = vmatprep.subr.bf16.mxu0 0
    %1641 = vmatpush1.bf16.msra.mxu0 %v1613
    %1642 = vmatprep.subr.bf16.mxu0 0
    %1643 = vmatpush1.bf16.msra.mxu0 %v1612
    %1644 = vmatprep.subr.bf16.mxu0 0
    %1645 = vmatpush2.bf16.msra.mxu0 0
    %1646 = vmatprep.subr.bf16.mxu0 0
    %1647 = vmatpush2.bf16.msra.mxu0 0
    %1648 = vmatprep.subr.bf16.mxu0 0
    %1649 = vmatpush2.bf16.msra.mxu0 0
    %1650 = vmatprep.subr.bf16.mxu0 0
    %1651 = vmatpush2.bf16.msra.mxu0 0
    %1652 = vmatprep.subr.bf16.mxu0 0
    %1653 = vmatpush2.bf16.msra.mxu0 0
    %1654 = vmatprep.subr.bf16.mxu0 0
    %1655 = vmatpush2.bf16.msra.mxu0 0
    %1656 = vmatprep.subr.bf16.mxu0 0
    %1657 = vmatpush2.bf16.msra.mxu0 0
    %1658 = vmatprep.subr.bf16.mxu0 0
    %1659 = vmatpush2.bf16.msra.mxu0 0
    %1660 = vmatprep.mubr.bf16.mxu0 0
    %1661 = vmatmul.mubr.bf16.gmra.mxu0 %v200
    %v1662 = vpop.f32.mrf.mxu0
    %v1663 = vadd.f32 0.0, %v1662
    %v1664 = vpop.f32.mrf.mxu0
    %v1665 = vpop.f32.mrf.mxu0
    %v1666 = vadd.f32 0.0, %v1665
    %v1667 = vpop.f32.mrf.mxu0
    %1668 = vmatprep.mubr.bf16.mxu0 0
    %1669 = vmatmul.mubr.bf16.gmra.mxu0 %v201
    %v1670 = vpop.f32.mrf.mxu0
    %v1671 = vadd.f32 0.0, %v1670
    %v1672 = vpop.f32.mrf.mxu0
    %v1673 = vpop.f32.mrf.mxu0
    %v1674 = vadd.f32 0.0, %v1673
    %v1675 = vpop.f32.mrf.mxu0
    %1676 = vmatprep.mubr.bf16.mxu0 0
    %1677 = vmatmul.mubr.bf16.gmra.mxu0 %v202
    %v1678 = vpop.f32.mrf.mxu0
    %v1679 = vadd.f32 0.0, %v1678
    %v1680 = vpop.f32.mrf.mxu0
    %v1681 = vpop.f32.mrf.mxu0
    %v1682 = vadd.f32 0.0, %v1681
    %v1683 = vpop.f32.mrf.mxu0
    %1684 = vdwg.mxu0
    %s1685 = scalar_lea.vmem %s5, 384
    %v1686 = vld [vmem:[%s1685] sm:$0xff]
    %v1687 = vld [vmem:[%s1685 + $0x8] sm:$0xff]
    %v1688 = vld [vmem:[%s1685 + $0x10] sm:$0xff]
    %v1689 = vld [vmem:[%s1685 + $0x18] sm:$0xff]
    %v1690 = vld [vmem:[%s1685 + $0x20] sm:$0xff]
    %v1691 = vld [vmem:[%s1685 + $0x28] sm:$0xff]
    %1693 = vset.pattern.permute.xlu0 0
    %1694 = vperm.xlu0 %1693, %v1686
    %v1695 = vpop.permute.xlu0 %1694
    %1698 = vset.pattern.permute.xlu0 0
    %1699 = vperm.xlu0 %1698, %v1687
    %v1700 = vpop.permute.xlu0 %1699
    %1703 = vset.pattern.permute.xlu0 0
    %1704 = vperm.xlu0 %1703, %v1688
    %v1705 = vpop.permute.xlu0 %1704
    %1708 = vset.pattern.permute.xlu0 0
    %1709 = vperm.xlu0 %1708, %v1689
    %v1710 = vpop.permute.xlu0 %1709
    %1713 = vset.pattern.permute.xlu0 0
    %1714 = vperm.xlu0 %1713, %v1690
    %v1715 = vpop.permute.xlu0 %1714
    %1718 = vset.pattern.permute.xlu0 0
    %1719 = vperm.xlu0 %1718, %v1691
    %v1720 = vpop.permute.xlu0 %1719
    %v1722 = vmul.f32 %v1663, %v1695
    %v1723 = vmul.f32 %v1666, %v1700
    %v1724 = vmul.f32 %v1671, %v1705
    %v1725 = vmul.f32 %v1674, %v1710
    %v1726 = vmul.f32 %v1679, %v1715
    %v1727 = vmul.f32 %v1682, %v1720
    %v1728 = vadd.f32 %v1557, %v1722
    %v1729 = vadd.f32 %v1558, %v1723
    %v1730 = vadd.f32 %v1559, %v1724
    %v1731 = vadd.f32 %v1560, %v1725
    %v1732 = vadd.f32 %v1561, %v1726
    %v1733 = vadd.f32 %v1562, %v1727
    %v1734 = vld [vmem:[%s6] sm:$0x1]
    %v1736 = vlaneseq
    %v1737 = vshrl.u32 %v1736, 7
    %v1738 = vsub.s32 0, %v1737
    %v1739 = vrot.slane %v1734, %v1738
    %v1741 = vmul.f32 %v1728, %v1739
    %v1742 = vmul.f32 %v1729, %v1739
    %v1743 = vmul.f32 %v1730, %v1739
    %v1744 = vmul.f32 %v1731, %v1739
    %v1745 = vmul.f32 %v1741, %v1741
    %v1746 = vmul.f32 %v1742, %v1742
    %1747 = vadd.xlane.f32.xlu0 %v1745
    %v1748 = vpop.xlane.xlu0 %1747
    %1749 = vadd.xlane.f32.xlu0 %v1746
    %v1750 = vpop.xlane.xlu0 %1749
    %v1751 = vmax.f32 %v1748, 1e-24
    %v1752 = vmax.f32 %v1750, 1e-24
    %v1753 = vrsqrt.pop %v1751
    %v1754 = vrsqrt.pop %v1752
    %v1755 = vmul.f32 %v1741, %v1753
    %v1756 = vmul.f32 %v1742, %v1754
    %v1757 = vmul.f32 %v1743, %v1743
    %v1758 = vmul.f32 %v1744, %v1744
    %1759 = vadd.xlane.f32.xlu0 %v1757
    %v1760 = vpop.xlane.xlu0 %1759
    %1761 = vadd.xlane.f32.xlu0 %v1758
    %v1762 = vpop.xlane.xlu0 %1761
    %v1763 = vmax.f32 %v1760, 1e-24
    %v1764 = vmax.f32 %v1762, 1e-24
    %v1765 = vrsqrt.pop %v1763
    %v1766 = vrsqrt.pop %v1764
    %v1767 = vmul.f32 %v1743, %v1765
    %v1768 = vmul.f32 %v1744, %v1766
    %1769 = vmatprep.subr.mxu0 0.0
    %1770 = vmatpush1.xpose.msra.mxu0 0.0
    %1771 = vmatprep.subr.mxu0 0.0
    %1772 = vmatpush1.xpose.msra.mxu0 0.0
    %1773 = vmatprep.subr.mxu0 0.0
    %1774 = vmatpush1.xpose.msra.mxu0 0.0
    %1775 = vmatprep.subr.mxu0 0.0
    %1776 = vmatpush1.xpose.msra.mxu0 0.0
    %1777 = vmatprep.subr.mxu0 0.0
    %1778 = vmatpush1.xpose.msra.mxu0 0.0
    %1779 = vmatprep.subr.mxu0 0.0
    %1780 = vmatpush1.xpose.msra.mxu0 0.0
    %1781 = vmatprep.subr.mxu0 0.0
    %1782 = vmatpush1.xpose.msra.mxu0 0.0
    %1783 = vmatprep.subr.mxu0 0.0
    %1784 = vmatpush1.xpose.msra.mxu0 0.0
    %1785 = vmatprep.subr.mxu0 0.0
    %1786 = vmatpush1.xpose.msra.mxu0 0.0
    %1787 = vmatprep.subr.mxu0 0.0
    %1788 = vmatpush1.xpose.msra.mxu0 0.0
    %1789 = vmatprep.subr.mxu0 0.0
    %1790 = vmatpush1.xpose.msra.mxu0 0.0
    %1791 = vmatprep.subr.mxu0 0.0
    %1792 = vmatpush1.xpose.msra.mxu0 0.0
    %1793 = vmatprep.subr.mxu0 0.0
    %1794 = vmatpush1.xpose.msra.mxu0 0.0
    %1795 = vmatprep.subr.mxu0 0.0
    %1796 = vmatpush1.xpose.msra.mxu0 0.0
    %1797 = vmatprep.subr.mxu0 0.0
    %1798 = vmatpush1.xpose.msra.mxu0 %v1768
    %1799 = vmatprep.subr.mxu0 0.0
    %1800 = vmatpush1.xpose.msra.mxu0 %v1767
    %1801 = vmatprep.subr.mxu0 0.0
    %1802 = vmatpush2.xpose.msra.mxu0 0.0
    %1803 = vmatprep.subr.mxu0 0.0
    %1804 = vmatpush2.xpose.msra.mxu0 0.0
    %1805 = vmatprep.subr.mxu0 0.0
    %1806 = vmatpush2.xpose.msra.mxu0 0.0
    %1807 = vmatprep.subr.mxu0 0.0
    %1808 = vmatpush2.xpose.msra.mxu0 0.0
    %1809 = vmatprep.subr.mxu0 0.0
    %1810 = vmatpush2.xpose.msra.mxu0 0.0
    %1811 = vmatprep.subr.mxu0 0.0
    %1812 = vmatpush2.xpose.msra.mxu0 0.0
    %1813 = vmatprep.subr.mxu0 0.0
    %1814 = vmatpush2.xpose.msra.mxu0 0.0
    %1815 = vmatprep.subr.mxu0 0.0
    %1816 = vmatpush2.xpose.msra.mxu0 0.0
    %1817 = vmatprep.subr.mxu0 0.0
    %1818 = vmatpush2.xpose.msra.mxu0 0.0
    %1819 = vmatprep.subr.mxu0 0.0
    %1820 = vmatpush2.xpose.msra.mxu0 0.0
    %1821 = vmatprep.subr.mxu0 0.0
    %1822 = vmatpush2.xpose.msra.mxu0 0.0
    %1823 = vmatprep.subr.mxu0 0.0
    %1824 = vmatpush2.xpose.msra.mxu0 0.0
    %1825 = vmatprep.subr.mxu0 0.0
    %1826 = vmatpush2.xpose.msra.mxu0 0.0
    %1827 = vmatprep.subr.mxu0 0.0
    %1828 = vmatpush2.xpose.msra.mxu0 0.0
    %1829 = vmatprep.subr.mxu0 0.0
    %1830 = vmatpush2.xpose.msra.mxu0 0.0
    %1831 = vmatprep.subr.mxu0 0.0
    %1832 = vmatpush2.xpose.msra.mxu0 0.0
    %1833 = vmatprep.mubr.f32.mxu0 0.0
    %1834 = vmatmul.mubr.f32.gmra.mxu0 %v1755
    %v1835 = vpop.f32.mrf.mxu0
    %v1836 = vadd.f32 0.0, %v1835
    %v1837 = vpop.f32.mrf.mxu0
    %1838 = vmatprep.mubr.f32.mxu0 0.0
    %1839 = vmatmul.mubr.f32.gmra.mxu0 %v1756
    %v1840 = vpop.f32.mrf.mxu0
    %v1841 = vadd.f32 0.0, %v1840
    %v1842 = vpop.f32.mrf.mxu0
    %1843 = vdwg.mxu0
    %v1844 = vld [vmem:[%s7] sm:$0xff]
    %v1845 = vld [vmem:[%s7 + $0x8] sm:$0xff]
    %v1846 = vmul.f32 %v1836, %v1844
    %v1847 = vmul.f32 %v1841, %v1845
    %v1848 = vld [vmem:[%s8] sm:$0xff]
    %v1849 = vld [vmem:[%s8 + $0x8] sm:$0xff]
    %v1850 = vadd.f32 %v1846, %v1848
    %v1851 = vadd.f32 %v1847, %v1849
    %v1852 = vsel %vm133, %v1850, -inf
    %1853 = vmax.xlane.f32.xlu0 %v1852
    %v1854 = vpop.xlane.xlu0 %1853
    %v1855 = vsel %vm133, %v1851, -inf
    %1856 = vmax.xlane.f32.xlu0 %v1855
    %v1857 = vpop.xlane.xlu0 %1856
    %v1858 = vsub.f32 %v1850, %v1854
    %v1859 = vsub.f32 %v1851, %v1857
    %v1860 = vmul.f32 %v1858, 1.442695
    %v1861 = vpow.pop %v1860
    %v1862 = vmul.f32 %v1859, 1.442695
    %v1863 = vpow.pop %v1862
    %v1864 = vsel %vm133, %v1861, 0.0
    %1865 = vadd.xlane.f32.xlu0 %v1864
    %v1866 = vpop.xlane.xlu0 %1865
    %v1867 = vsel %vm133, %v1863, 0.0
    %1868 = vadd.xlane.f32.xlu0 %v1867
    %v1869 = vpop.xlane.xlu0 %1868
    %v1870 = vrcp.pop %v1866
    %v1871 = vrcp.pop %v1869
    %v1872 = vmul.f32 %v1861, %v1870
    %v1873 = vmul.f32 %v1863, %v1871
    %v1875 = vsel %vm133, %v1872, 0
    %v1878 = vsel %vm133, %v1873, 0
    %1880 = vmatprep.subr.mxu0 0.0
    %1881 = vmatpush1.msra.mxu0 0.0
    %1882 = vmatprep.subr.mxu0 0.0
    %1883 = vmatpush1.msra.mxu0 0.0
    %1884 = vmatprep.subr.mxu0 0.0
    %1885 = vmatpush1.msra.mxu0 0.0
    %1886 = vmatprep.subr.mxu0 0.0
    %1887 = vmatpush1.msra.mxu0 0.0
    %1888 = vmatprep.subr.mxu0 0.0
    %1889 = vmatpush1.msra.mxu0 0.0
    %1890 = vmatprep.subr.mxu0 0.0
    %1891 = vmatpush1.msra.mxu0 0.0
    %1892 = vmatprep.subr.mxu0 0.0
    %1893 = vmatpush1.msra.mxu0 0.0
    %1894 = vmatprep.subr.mxu0 0.0
    %1895 = vmatpush1.msra.mxu0 0.0
    %1896 = vmatprep.subr.mxu0 0.0
    %1897 = vmatpush1.msra.mxu0 0.0
    %1898 = vmatprep.subr.mxu0 0.0
    %1899 = vmatpush1.msra.mxu0 0.0
    %1900 = vmatprep.subr.mxu0 0.0
    %1901 = vmatpush1.msra.mxu0 0.0
    %1902 = vmatprep.subr.mxu0 0.0
    %1903 = vmatpush1.msra.mxu0 0.0
    %1904 = vmatprep.subr.mxu0 0.0
    %1905 = vmatpush1.msra.mxu0 0.0
    %1906 = vmatprep.subr.mxu0 0.0
    %1907 = vmatpush1.msra.mxu0 0.0
    %1908 = vmatprep.subr.mxu0 0.0
    %1909 = vmatpush1.msra.mxu0 %v1733
    %1910 = vmatprep.subr.mxu0 0.0
    %1911 = vmatpush1.msra.mxu0 %v1732
    %1912 = vmatprep.subr.mxu0 0.0
    %1913 = vmatpush2.msra.mxu0 0.0
    %1914 = vmatprep.subr.mxu0 0.0
    %1915 = vmatpush2.msra.mxu0 0.0
    %1916 = vmatprep.subr.mxu0 0.0
    %1917 = vmatpush2.msra.mxu0 0.0
    %1918 = vmatprep.subr.mxu0 0.0
    %1919 = vmatpush2.msra.mxu0 0.0
    %1920 = vmatprep.subr.mxu0 0.0
    %1921 = vmatpush2.msra.mxu0 0.0
    %1922 = vmatprep.subr.mxu0 0.0
    %1923 = vmatpush2.msra.mxu0 0.0
    %1924 = vmatprep.subr.mxu0 0.0
    %1925 = vmatpush2.msra.mxu0 0.0
    %1926 = vmatprep.subr.mxu0 0.0
    %1927 = vmatpush2.msra.mxu0 0.0
    %1928 = vmatprep.subr.mxu0 0.0
    %1929 = vmatpush2.msra.mxu0 0.0
    %1930 = vmatprep.subr.mxu0 0.0
    %1931 = vmatpush2.msra.mxu0 0.0
    %1932 = vmatprep.subr.mxu0 0.0
    %1933 = vmatpush2.msra.mxu0 0.0
    %1934 = vmatprep.subr.mxu0 0.0
    %1935 = vmatpush2.msra.mxu0 0.0
    %1936 = vmatprep.subr.mxu0 0.0
    %1937 = vmatpush2.msra.mxu0 0.0
    %1938 = vmatprep.subr.mxu0 0.0
    %1939 = vmatpush2.msra.mxu0 0.0
    %1940 = vmatprep.subr.mxu0 0.0
    %1941 = vmatpush2.msra.mxu0 0.0
    %1942 = vmatprep.subr.mxu0 0.0
    %1943 = vmatpush2.msra.mxu0 0.0
    %1944 = vmatprep.mubr.f32.mxu0 0.0
    %1945 = vmatmul.mubr.f32.gmra.mxu0 %v1875
    %v1946 = vpop.f32.mrf.mxu0
    %v1947 = vadd.f32 0.0, %v1946
    %v1948 = vpop.f32.mrf.mxu0
    %1949 = vmatprep.mubr.f32.mxu0 0.0
    %1950 = vmatmul.mubr.f32.gmra.mxu0 %v1878
    %v1951 = vpop.f32.mrf.mxu0
    %v1952 = vadd.f32 0.0, %v1951
    %v1953 = vpop.f32.mrf.mxu0
    %1954 = vdwg.mxu0
    %v1955 = vmul.f32 %v1947, %v1739
    %v1956 = vmul.f32 %v1952, %v1739
    %s1957 = scalar_lea.vmem %s6, 1
    %v1958 = vld [vmem:[%s1957] sm:$0x1]
    %v1960 = vlaneseq
    %v1961 = vshrl.u32 %v1960, 7
    %v1962 = vsub.s32 0, %v1961
    %v1963 = vrot.slane %v1958, %v1962
    %v1965 = vmul.f32 %v1728, %v1963
    %v1966 = vmul.f32 %v1729, %v1963
    %v1967 = vmul.f32 %v1730, %v1963
    %v1968 = vmul.f32 %v1731, %v1963
    %v1969 = vmul.f32 %v1965, %v1965
    %v1970 = vmul.f32 %v1966, %v1966
    %1971 = vadd.xlane.f32.xlu0 %v1969
    %v1972 = vpop.xlane.xlu0 %1971
    %1973 = vadd.xlane.f32.xlu0 %v1970
    %v1974 = vpop.xlane.xlu0 %1973
    %v1975 = vmax.f32 %v1972, 1e-24
    %v1976 = vmax.f32 %v1974, 1e-24
    %v1977 = vrsqrt.pop %v1975
    %v1978 = vrsqrt.pop %v1976
    %v1979 = vmul.f32 %v1965, %v1977
    %v1980 = vmul.f32 %v1966, %v1978
    %v1981 = vmul.f32 %v1967, %v1967
    %v1982 = vmul.f32 %v1968, %v1968
    %1983 = vadd.xlane.f32.xlu0 %v1981
    %v1984 = vpop.xlane.xlu0 %1983
    %1985 = vadd.xlane.f32.xlu0 %v1982
    %v1986 = vpop.xlane.xlu0 %1985
    %v1987 = vmax.f32 %v1984, 1e-24
    %v1988 = vmax.f32 %v1986, 1e-24
    %v1989 = vrsqrt.pop %v1987
    %v1990 = vrsqrt.pop %v1988
    %v1991 = vmul.f32 %v1967, %v1989
    %v1992 = vmul.f32 %v1968, %v1990
    %1993 = vmatprep.subr.mxu0 0.0
    %1994 = vmatpush1.xpose.msra.mxu0 0.0
    %1995 = vmatprep.subr.mxu0 0.0
    %1996 = vmatpush1.xpose.msra.mxu0 0.0
    %1997 = vmatprep.subr.mxu0 0.0
    %1998 = vmatpush1.xpose.msra.mxu0 0.0
    %1999 = vmatprep.subr.mxu0 0.0
    %2000 = vmatpush1.xpose.msra.mxu0 0.0
    %2001 = vmatprep.subr.mxu0 0.0
    %2002 = vmatpush1.xpose.msra.mxu0 0.0
    %2003 = vmatprep.subr.mxu0 0.0
    %2004 = vmatpush1.xpose.msra.mxu0 0.0
    %2005 = vmatprep.subr.mxu0 0.0
    %2006 = vmatpush1.xpose.msra.mxu0 0.0
    %2007 = vmatprep.subr.mxu0 0.0
    %2008 = vmatpush1.xpose.msra.mxu0 0.0
    %2009 = vmatprep.subr.mxu0 0.0
    %2010 = vmatpush1.xpose.msra.mxu0 0.0
    %2011 = vmatprep.subr.mxu0 0.0
    %2012 = vmatpush1.xpose.msra.mxu0 0.0
    %2013 = vmatprep.subr.mxu0 0.0
    %2014 = vmatpush1.xpose.msra.mxu0 0.0
    %2015 = vmatprep.subr.mxu0 0.0
    %2016 = vmatpush1.xpose.msra.mxu0 0.0
    %2017 = vmatprep.subr.mxu0 0.0
    %2018 = vmatpush1.xpose.msra.mxu0 0.0
    %2019 = vmatprep.subr.mxu0 0.0
    %2020 = vmatpush1.xpose.msra.mxu0 0.0
    %2021 = vmatprep.subr.mxu0 0.0
    %2022 = vmatpush1.xpose.msra.mxu0 %v1992
    %2023 = vmatprep.subr.mxu0 0.0
    %2024 = vmatpush1.xpose.msra.mxu0 %v1991
    %2025 = vmatprep.subr.mxu0 0.0
    %2026 = vmatpush2.xpose.msra.mxu0 0.0
    %2027 = vmatprep.subr.mxu0 0.0
    %2028 = vmatpush2.xpose.msra.mxu0 0.0
    %2029 = vmatprep.subr.mxu0 0.0
    %2030 = vmatpush2.xpose.msra.mxu0 0.0
    %2031 = vmatprep.subr.mxu0 0.0
    %2032 = vmatpush2.xpose.msra.mxu0 0.0
    %2033 = vmatprep.subr.mxu0 0.0
    %2034 = vmatpush2.xpose.msra.mxu0 0.0
    %2035 = vmatprep.subr.mxu0 0.0
    %2036 = vmatpush2.xpose.msra.mxu0 0.0
    %2037 = vmatprep.subr.mxu0 0.0
    %2038 = vmatpush2.xpose.msra.mxu0 0.0
    %2039 = vmatprep.subr.mxu0 0.0
    %2040 = vmatpush2.xpose.msra.mxu0 0.0
    %2041 = vmatprep.subr.mxu0 0.0
    %2042 = vmatpush2.xpose.msra.mxu0 0.0
    %2043 = vmatprep.subr.mxu0 0.0
    %2044 = vmatpush2.xpose.msra.mxu0 0.0
    %2045 = vmatprep.subr.mxu0 0.0
    %2046 = vmatpush2.xpose.msra.mxu0 0.0
    %2047 = vmatprep.subr.mxu0 0.0
    %2048 = vmatpush2.xpose.msra.mxu0 0.0
    %2049 = vmatprep.subr.mxu0 0.0
    %2050 = vmatpush2.xpose.msra.mxu0 0.0
    %2051 = vmatprep.subr.mxu0 0.0
    %2052 = vmatpush2.xpose.msra.mxu0 0.0
    %2053 = vmatprep.subr.mxu0 0.0
    %2054 = vmatpush2.xpose.msra.mxu0 0.0
    %2055 = vmatprep.subr.mxu0 0.0
    %2056 = vmatpush2.xpose.msra.mxu0 0.0
    %2057 = vmatprep.mubr.f32.mxu0 0.0
    %2058 = vmatmul.mubr.f32.gmra.mxu0 %v1979
    %v2059 = vpop.f32.mrf.mxu0
    %v2060 = vadd.f32 0.0, %v2059
    %v2061 = vpop.f32.mrf.mxu0
    %2062 = vmatprep.mubr.f32.mxu0 0.0
    %2063 = vmatmul.mubr.f32.gmra.mxu0 %v1980
    %v2064 = vpop.f32.mrf.mxu0
    %v2065 = vadd.f32 0.0, %v2064
    %v2066 = vpop.f32.mrf.mxu0
    %2067 = vdwg.mxu0
    %v2068 = vmul.f32 %v2060, %v1844
    %v2069 = vmul.f32 %v2065, %v1845
    %v2070 = vadd.f32 %v2068, %v1848
    %v2071 = vadd.f32 %v2069, %v1849
    %v2072 = vsel %vm133, %v2070, -inf
    %2073 = vmax.xlane.f32.xlu0 %v2072
    %v2074 = vpop.xlane.xlu0 %2073
    %v2075 = vsel %vm133, %v2071, -inf
    %2076 = vmax.xlane.f32.xlu0 %v2075
    %v2077 = vpop.xlane.xlu0 %2076
    %v2078 = vsub.f32 %v2070, %v2074
    %v2079 = vsub.f32 %v2071, %v2077
    %v2080 = vmul.f32 %v2078, 1.442695
    %v2081 = vpow.pop %v2080
    %v2082 = vmul.f32 %v2079, 1.442695
    %v2083 = vpow.pop %v2082
    %v2084 = vsel %vm133, %v2081, 0.0
    %2085 = vadd.xlane.f32.xlu0 %v2084
    %v2086 = vpop.xlane.xlu0 %2085
    %v2087 = vsel %vm133, %v2083, 0.0
    %2088 = vadd.xlane.f32.xlu0 %v2087
    %v2089 = vpop.xlane.xlu0 %2088
    %v2090 = vrcp.pop %v2086
    %v2091 = vrcp.pop %v2089
    %v2092 = vmul.f32 %v2081, %v2090
    %v2093 = vmul.f32 %v2083, %v2091
    %v2095 = vsel %vm133, %v2092, 0
    %v2098 = vsel %vm133, %v2093, 0
    %2100 = vmatprep.subr.mxu0 0.0
    %2101 = vmatpush1.msra.mxu0 0.0
    %2102 = vmatprep.subr.mxu0 0.0
    %2103 = vmatpush1.msra.mxu0 0.0
    %2104 = vmatprep.subr.mxu0 0.0
    %2105 = vmatpush1.msra.mxu0 0.0
    %2106 = vmatprep.subr.mxu0 0.0
    %2107 = vmatpush1.msra.mxu0 0.0
    %2108 = vmatprep.subr.mxu0 0.0
    %2109 = vmatpush1.msra.mxu0 0.0
    %2110 = vmatprep.subr.mxu0 0.0
    %2111 = vmatpush1.msra.mxu0 0.0
    %2112 = vmatprep.subr.mxu0 0.0
    %2113 = vmatpush1.msra.mxu0 0.0
    %2114 = vmatprep.subr.mxu0 0.0
    %2115 = vmatpush1.msra.mxu0 0.0
    %2116 = vmatprep.subr.mxu0 0.0
    %2117 = vmatpush1.msra.mxu0 0.0
    %2118 = vmatprep.subr.mxu0 0.0
    %2119 = vmatpush1.msra.mxu0 0.0
    %2120 = vmatprep.subr.mxu0 0.0
    %2121 = vmatpush1.msra.mxu0 0.0
    %2122 = vmatprep.subr.mxu0 0.0
    %2123 = vmatpush1.msra.mxu0 0.0
    %2124 = vmatprep.subr.mxu0 0.0
    %2125 = vmatpush1.msra.mxu0 0.0
    %2126 = vmatprep.subr.mxu0 0.0
    %2127 = vmatpush1.msra.mxu0 0.0
    %2128 = vmatprep.subr.mxu0 0.0
    %2129 = vmatpush1.msra.mxu0 %v1733
    %2130 = vmatprep.subr.mxu0 0.0
    %2131 = vmatpush1.msra.mxu0 %v1732
    %2132 = vmatprep.subr.mxu0 0.0
    %2133 = vmatpush2.msra.mxu0 0.0
    %2134 = vmatprep.subr.mxu0 0.0
    %2135 = vmatpush2.msra.mxu0 0.0
    %2136 = vmatprep.subr.mxu0 0.0
    %2137 = vmatpush2.msra.mxu0 0.0
    %2138 = vmatprep.subr.mxu0 0.0
    %2139 = vmatpush2.msra.mxu0 0.0
    %2140 = vmatprep.subr.mxu0 0.0
    %2141 = vmatpush2.msra.mxu0 0.0
    %2142 = vmatprep.subr.mxu0 0.0
    %2143 = vmatpush2.msra.mxu0 0.0
    %2144 = vmatprep.subr.mxu0 0.0
    %2145 = vmatpush2.msra.mxu0 0.0
    %2146 = vmatprep.subr.mxu0 0.0
    %2147 = vmatpush2.msra.mxu0 0.0
    %2148 = vmatprep.subr.mxu0 0.0
    %2149 = vmatpush2.msra.mxu0 0.0
    %2150 = vmatprep.subr.mxu0 0.0
    %2151 = vmatpush2.msra.mxu0 0.0
    %2152 = vmatprep.subr.mxu0 0.0
    %2153 = vmatpush2.msra.mxu0 0.0
    %2154 = vmatprep.subr.mxu0 0.0
    %2155 = vmatpush2.msra.mxu0 0.0
    %2156 = vmatprep.subr.mxu0 0.0
    %2157 = vmatpush2.msra.mxu0 0.0
    %2158 = vmatprep.subr.mxu0 0.0
    %2159 = vmatpush2.msra.mxu0 0.0
    %2160 = vmatprep.subr.mxu0 0.0
    %2161 = vmatpush2.msra.mxu0 0.0
    %2162 = vmatprep.subr.mxu0 0.0
    %2163 = vmatpush2.msra.mxu0 0.0
    %2164 = vmatprep.mubr.f32.mxu0 0.0
    %2165 = vmatmul.mubr.f32.gmra.mxu0 %v2095
    %v2166 = vpop.f32.mrf.mxu0
    %v2167 = vadd.f32 0.0, %v2166
    %v2168 = vpop.f32.mrf.mxu0
    %2169 = vmatprep.mubr.f32.mxu0 0.0
    %2170 = vmatmul.mubr.f32.gmra.mxu0 %v2098
    %v2171 = vpop.f32.mrf.mxu0
    %v2172 = vadd.f32 0.0, %v2171
    %v2173 = vpop.f32.mrf.mxu0
    %2174 = vdwg.mxu0
    %v2175 = vmul.f32 %v2167, %v1963
    %v2176 = vmul.f32 %v2172, %v1963
    %v2177 = vadd.f32 %v1955, %v2175
    %v2178 = vadd.f32 %v1956, %v2176
    %v2179 = vld [vmem:[%s9] sm:$0xf]
    %v2180 = vld [vmem:[%s9 + $0x4] sm:$0xf]
    %v2181 = vpack.c.bf16 %v2178, %v2177
    %v2184 = vunpack.c.l.b16 %v2179
    %v2185 = vunpack.c.l.b16 %v2180
    %v2186 = vpack.c.b16 %v2185, %v2184
    %v2188 = vsel %vm133, %v2186, 0
    %2190 = vmatprep.subr.bf16.mxu0 0
    %2191 = vmatpush1.bf16.msra.mxu0 0
    %2192 = vmatprep.subr.bf16.mxu0 0
    %2193 = vmatpush1.bf16.msra.mxu0 0
    %2194 = vmatprep.subr.bf16.mxu0 0
    %2195 = vmatpush1.bf16.msra.mxu0 0
    %2196 = vmatprep.subr.bf16.mxu0 0
    %2197 = vmatpush1.bf16.msra.mxu0 0
    %2198 = vmatprep.subr.bf16.mxu0 0
    %2199 = vmatpush1.bf16.msra.mxu0 0
    %2200 = vmatprep.subr.bf16.mxu0 0
    %2201 = vmatpush1.bf16.msra.mxu0 0
    %2202 = vmatprep.subr.bf16.mxu0 0
    %2203 = vmatpush1.bf16.msra.mxu0 0
    %2204 = vmatprep.subr.bf16.mxu0 0
    %2205 = vmatpush1.bf16.msra.mxu0 %v2181
    %2206 = vmatprep.subr.bf16.mxu0 0
    %2207 = vmatpush2.bf16.msra.mxu0 0
    %2208 = vmatprep.subr.bf16.mxu0 0
    %2209 = vmatpush2.bf16.msra.mxu0 0
    %2210 = vmatprep.subr.bf16.mxu0 0
    %2211 = vmatpush2.bf16.msra.mxu0 0
    %2212 = vmatprep.subr.bf16.mxu0 0
    %2213 = vmatpush2.bf16.msra.mxu0 0
    %2214 = vmatprep.subr.bf16.mxu0 0
    %2215 = vmatpush2.bf16.msra.mxu0 0
    %2216 = vmatprep.subr.bf16.mxu0 0
    %2217 = vmatpush2.bf16.msra.mxu0 0
    %2218 = vmatprep.subr.bf16.mxu0 0
    %2219 = vmatpush2.bf16.msra.mxu0 0
    %2220 = vmatprep.subr.bf16.mxu0 0
    %2221 = vmatpush2.bf16.msra.mxu0 0
    %2222 = vmatprep.mubr.bf16.mxu0 0
    %2223 = vmatmul.mubr.bf16.gmra.mxu0 %v2188
    %v2224 = vpop.f32.mrf.mxu0
    %v2225 = vadd.f32 0.0, %v2224
    %v2226 = vpop.f32.mrf.mxu0
    %v2227 = vpop.f32.mrf.mxu0
    %v2228 = vadd.f32 0.0, %v2227
    %v2229 = vpop.f32.mrf.mxu0
    %2230 = vdwg.mxu0
    %v2231 = vadd.f32 %v56, %v2225
    %v2232 = vadd.f32 %v57, %v2228
    %v2233 = vadd.f32 %v2231, %v2232
    %v2234 = vrot.slane %v2233, 4
    %v2235 = vadd.f32 %v2233, %v2234
    %v2236 = vrot.slane %v2235, 2
    %v2237 = vadd.f32 %v2235, %v2236
    %v2238 = vrot.slane %v2237, 1
    %v2239 = vadd.f32 %v2237, %v2238
    %v2240 = vmul.f32 %v2239, %v65
    %v2241 = vsub.f32 %v2231, %v2240
    %v2242 = vsub.f32 %v2232, %v2240
    %v2243 = vmul.f32 %v2241, %v2241
    %v2244 = vmul.f32 %v2242, %v2242
    %v2245 = vadd.f32 %v2243, %v2244
    %v2246 = vrot.slane %v2245, 4
    %v2247 = vadd.f32 %v2245, %v2246
    %v2248 = vrot.slane %v2247, 2
    %v2249 = vadd.f32 %v2247, %v2248
    %v2250 = vrot.slane %v2249, 1
    %v2251 = vadd.f32 %v2249, %v2250
    %v2252 = vmul.f32 %v2251, %v65
    %v2253 = vadd.f32 %v2252, 1e-05
    %v2254 = vrsqrt.pop %v2253
    %v2255 = vmul.f32 %v2241, %v2254
    %v2256 = vmul.f32 %v2242, %v2254
    %v2257 = vld [vmem:[%s10] sm:$0xff]
    %v2258 = vld [vmem:[%s10 + $0x8] sm:$0xff]
    %2260 = vset.pattern.permute.xlu0 0
    %2261 = vperm.xlu0 %2260, %v2257
    %v2262 = vpop.permute.xlu0 %2261
    %2265 = vset.pattern.permute.xlu0 0
    %2266 = vperm.xlu0 %2265, %v2258
    %v2267 = vpop.permute.xlu0 %2266
    %v2269 = vmul.f32 %v2255, %v2262
    %v2270 = vmul.f32 %v2256, %v2267
    %v2271 = vld [vmem:[%s11] sm:$0xff]
    %v2272 = vld [vmem:[%s11 + $0x8] sm:$0xff]
    %2274 = vset.pattern.permute.xlu0 0
    %2275 = vperm.xlu0 %2274, %v2271
    %v2276 = vpop.permute.xlu0 %2275
    %2279 = vset.pattern.permute.xlu0 0
    %2280 = vperm.xlu0 %2279, %v2272
    %v2281 = vpop.permute.xlu0 %2280
    %v2283 = vadd.f32 %v2269, %v2276
    %v2284 = vadd.f32 %v2270, %v2281
    %v2285 = vld [vmem:[%s12] sm:$0xf]
    %v2286 = vld [vmem:[%s12 + $0x4] sm:$0xf]
    %v2287 = vld [vmem:[%s12 + $0x8] sm:$0xf]
    %v2288 = vld [vmem:[%s12 + $0xc] sm:$0xf]
    %v2289 = vpack.c.bf16 %v2284, %v2283
    %v2294 = vunpack.c.l.b16 %v2285
    %v2295 = vunpack.c.l.b16 %v2286
    %v2296 = vunpack.c.l.b16 %v2287
    %v2297 = vunpack.c.l.b16 %v2288
    %v2298 = vpack.c.b16 %v2295, %v2294
    %v2299 = vpack.c.b16 %v2297, %v2296
    %v2301 = vsel %vm133, %v2298, 0
    %v2304 = vsel %vm133, %v2299, 0
    %2306 = vmatprep.subr.bf16.mxu0 0
    %2307 = vmatpush1.bf16.msra.mxu0 0
    %2308 = vmatprep.subr.bf16.mxu0 0
    %2309 = vmatpush1.bf16.msra.mxu0 0
    %2310 = vmatprep.subr.bf16.mxu0 0
    %2311 = vmatpush1.bf16.msra.mxu0 0
    %2312 = vmatprep.subr.bf16.mxu0 0
    %2313 = vmatpush1.bf16.msra.mxu0 0
    %2314 = vmatprep.subr.bf16.mxu0 0
    %2315 = vmatpush1.bf16.msra.mxu0 0
    %2316 = vmatprep.subr.bf16.mxu0 0
    %2317 = vmatpush1.bf16.msra.mxu0 0
    %2318 = vmatprep.subr.bf16.mxu0 0
    %2319 = vmatpush1.bf16.msra.mxu0 0
    %2320 = vmatprep.subr.bf16.mxu0 0
    %2321 = vmatpush1.bf16.msra.mxu0 %v2289
    %2322 = vmatprep.subr.bf16.mxu0 0
    %2323 = vmatpush2.bf16.msra.mxu0 0
    %2324 = vmatprep.subr.bf16.mxu0 0
    %2325 = vmatpush2.bf16.msra.mxu0 0
    %2326 = vmatprep.subr.bf16.mxu0 0
    %2327 = vmatpush2.bf16.msra.mxu0 0
    %2328 = vmatprep.subr.bf16.mxu0 0
    %2329 = vmatpush2.bf16.msra.mxu0 0
    %2330 = vmatprep.subr.bf16.mxu0 0
    %2331 = vmatpush2.bf16.msra.mxu0 0
    %2332 = vmatprep.subr.bf16.mxu0 0
    %2333 = vmatpush2.bf16.msra.mxu0 0
    %2334 = vmatprep.subr.bf16.mxu0 0
    %2335 = vmatpush2.bf16.msra.mxu0 0
    %2336 = vmatprep.subr.bf16.mxu0 0
    %2337 = vmatpush2.bf16.msra.mxu0 0
    %2338 = vmatprep.mubr.bf16.mxu0 0
    %2339 = vmatmul.mubr.bf16.gmra.mxu0 %v2301
    %v2340 = vpop.f32.mrf.mxu0
    %v2341 = vadd.f32 0.0, %v2340
    %v2342 = vpop.f32.mrf.mxu0
    %v2343 = vpop.f32.mrf.mxu0
    %v2344 = vadd.f32 0.0, %v2343
    %v2345 = vpop.f32.mrf.mxu0
    %2346 = vmatprep.mubr.bf16.mxu0 0
    %2347 = vmatmul.mubr.bf16.gmra.mxu0 %v2304
    %v2348 = vpop.f32.mrf.mxu0
    %v2349 = vadd.f32 0.0, %v2348
    %v2350 = vpop.f32.mrf.mxu0
    %v2351 = vpop.f32.mrf.mxu0
    %v2352 = vadd.f32 0.0, %v2351
    %v2353 = vpop.f32.mrf.mxu0
    %2354 = vdwg.mxu0
    %v2355 = vld [vmem:[%s13] sm:$0xf]
    %v2356 = vld [vmem:[%s13 + $0x4] sm:$0xf]
    %v2357 = vld [vmem:[%s13 + $0x8] sm:$0xf]
    %v2358 = vld [vmem:[%s13 + $0xc] sm:$0xf]
    %v2359 = vld [vmem:[%s13 + $0x10] sm:$0xf]
    %v2360 = vld [vmem:[%s13 + $0x14] sm:$0xf]
    %v2361 = vld [vmem:[%s13 + $0x18] sm:$0xf]
    %v2362 = vld [vmem:[%s13 + $0x1c] sm:$0xf]
    %v2363 = vld [vmem:[%s13 + $0x20] sm:$0xf]
    %v2364 = vld [vmem:[%s13 + $0x24] sm:$0xf]
    %v2365 = vld [vmem:[%s13 + $0x28] sm:$0xf]
    %v2366 = vld [vmem:[%s13 + $0x2c] sm:$0xf]
    %v2367 = vld [vmem:[%s13 + $0x30] sm:$0xf]
    %v2368 = vld [vmem:[%s13 + $0x34] sm:$0xf]
    %v2369 = vld [vmem:[%s13 + $0x38] sm:$0xf]
    %v2370 = vld [vmem:[%s13 + $0x3c] sm:$0xf]
    %v2371 = vld [vmem:[%s13 + $0x40] sm:$0xf]
    %v2372 = vld [vmem:[%s13 + $0x44] sm:$0xf]
    %v2373 = vld [vmem:[%s13 + $0x48] sm:$0xf]
    %v2374 = vld [vmem:[%s13 + $0x4c] sm:$0xf]
    %v2375 = vld [vmem:[%s13 + $0x50] sm:$0xf]
    %v2376 = vld [vmem:[%s13 + $0x54] sm:$0xf]
    %v2377 = vld [vmem:[%s13 + $0x58] sm:$0xf]
    %v2378 = vld [vmem:[%s13 + $0x5c] sm:$0xf]
    %v2379 = vld [vmem:[%s13 + $0x60] sm:$0xf]
    %v2380 = vld [vmem:[%s13 + $0x64] sm:$0xf]
    %v2381 = vld [vmem:[%s13 + $0x68] sm:$0xf]
    %v2382 = vld [vmem:[%s13 + $0x6c] sm:$0xf]
    %v2383 = vld [vmem:[%s13 + $0x70] sm:$0xf]
    %v2384 = vld [vmem:[%s13 + $0x74] sm:$0xf]
    %v2385 = vld [vmem:[%s13 + $0x78] sm:$0xf]
    %v2386 = vld [vmem:[%s13 + $0x7c] sm:$0xf]
    %v2387 = vld [vmem:[%s13 + $0x80] sm:$0xf]
    %v2388 = vld [vmem:[%s13 + $0x84] sm:$0xf]
    %v2389 = vld [vmem:[%s13 + $0x88] sm:$0xf]
    %v2390 = vld [vmem:[%s13 + $0x8c] sm:$0xf]
    %v2391 = vpack.c.bf16 %v2344, %v2341
    %v2392 = vpack.c.bf16 %v2352, %v2349
    %v2429 = vunpack.c.l.b16 %v2355
    %v2430 = vunpack.c.l.b16 %v2356
    %v2431 = vunpack.c.l.b16 %v2357
    %v2432 = vunpack.c.l.b16 %v2358
    %v2433 = vunpack.c.l.b16 %v2359
    %v2434 = vunpack.c.l.b16 %v2360
    %v2435 = vunpack.c.l.b16 %v2361
    %v2436 = vunpack.c.l.b16 %v2362
    %v2437 = vunpack.c.l.b16 %v2363
    %v2438 = vunpack.c.l.b16 %v2364
    %v2439 = vunpack.c.l.b16 %v2365
    %v2440 = vunpack.c.l.b16 %v2366
    %v2441 = vunpack.c.l.b16 %v2367
    %v2442 = vunpack.c.l.b16 %v2368
    %v2443 = vunpack.c.l.b16 %v2369
    %v2444 = vunpack.c.l.b16 %v2370
    %v2445 = vunpack.c.l.b16 %v2371
    %v2446 = vunpack.c.l.b16 %v2372
    %v2447 = vunpack.c.l.b16 %v2373
    %v2448 = vunpack.c.l.b16 %v2374
    %v2449 = vunpack.c.l.b16 %v2375
    %v2450 = vunpack.c.l.b16 %v2376
    %v2451 = vunpack.c.l.b16 %v2377
    %v2452 = vunpack.c.l.b16 %v2378
    %v2453 = vunpack.c.l.b16 %v2379
    %v2454 = vunpack.c.l.b16 %v2380
    %v2455 = vunpack.c.l.b16 %v2381
    %v2456 = vunpack.c.l.b16 %v2382
    %v2457 = vunpack.c.l.b16 %v2383
    %v2458 = vunpack.c.l.b16 %v2384
    %v2459 = vunpack.c.l.b16 %v2385
    %v2460 = vunpack.c.l.b16 %v2386
    %v2461 = vunpack.c.l.b16 %v2387
    %v2462 = vunpack.c.l.b16 %v2388
    %v2463 = vunpack.c.l.b16 %v2389
    %v2464 = vunpack.c.l.b16 %v2390
    %v2465 = vpack.c.b16 %v2430, %v2429
    %v2466 = vpack.c.b16 %v2432, %v2431
    %v2467 = vpack.c.b16 %v2434, %v2433
    %v2468 = vpack.c.b16 %v2436, %v2435
    %v2469 = vpack.c.b16 %v2438, %v2437
    %v2470 = vpack.c.b16 %v2440, %v2439
    %v2471 = vpack.c.b16 %v2442, %v2441
    %v2472 = vpack.c.b16 %v2444, %v2443
    %v2473 = vpack.c.b16 %v2446, %v2445
    %v2474 = vpack.c.b16 %v2448, %v2447
    %v2475 = vpack.c.b16 %v2450, %v2449
    %v2476 = vpack.c.b16 %v2452, %v2451
    %v2477 = vpack.c.b16 %v2454, %v2453
    %v2478 = vpack.c.b16 %v2456, %v2455
    %v2479 = vpack.c.b16 %v2458, %v2457
    %v2480 = vpack.c.b16 %v2460, %v2459
    %v2481 = vpack.c.b16 %v2462, %v2461
    %v2482 = vpack.c.b16 %v2464, %v2463
    %vm2483 = vcmask 261120
    %v2485 = vsel %vm2483, %v2465, 0
    %v2488 = vsel %vm2483, %v2466, 0
    %v2491 = vsel %vm2483, %v2467, 0
    %v2494 = vsel %vm2483, %v2468, 0
    %v2497 = vsel %vm2483, %v2469, 0
    %v2500 = vsel %vm2483, %v2470, 0
    %v2503 = vsel %vm2483, %v2471, 0
    %v2506 = vsel %vm2483, %v2472, 0
    %v2509 = vsel %vm2483, %v2473, 0
    %v2512 = vsel %vm2483, %v2474, 0
    %v2515 = vsel %vm2483, %v2475, 0
    %v2518 = vsel %vm2483, %v2476, 0
    %v2521 = vsel %vm2483, %v2477, 0
    %v2524 = vsel %vm2483, %v2478, 0
    %v2527 = vsel %vm2483, %v2479, 0
    %v2530 = vsel %vm2483, %v2480, 0
    %v2533 = vsel %vm2483, %v2481, 0
    %v2536 = vsel %vm2483, %v2482, 0
    %2538 = vmatprep.subr.bf16.mxu0 0
    %2539 = vmatpush1.bf16.msra.mxu0 0
    %2540 = vmatprep.subr.bf16.mxu0 0
    %2541 = vmatpush1.bf16.msra.mxu0 0
    %2542 = vmatprep.subr.bf16.mxu0 0
    %2543 = vmatpush1.bf16.msra.mxu0 0
    %2544 = vmatprep.subr.bf16.mxu0 0
    %2545 = vmatpush1.bf16.msra.mxu0 0
    %2546 = vmatprep.subr.bf16.mxu0 0
    %2547 = vmatpush1.bf16.msra.mxu0 0
    %2548 = vmatprep.subr.bf16.mxu0 0
    %2549 = vmatpush1.bf16.msra.mxu0 0
    %2550 = vmatprep.subr.bf16.mxu0 0
    %2551 = vmatpush1.bf16.msra.mxu0 %v2392
    %2552 = vmatprep.subr.bf16.mxu0 0
    %2553 = vmatpush1.bf16.msra.mxu0 %v2391
    %2554 = vmatprep.subr.bf16.mxu0 0
    %2555 = vmatpush2.bf16.msra.mxu0 0
    %2556 = vmatprep.subr.bf16.mxu0 0
    %2557 = vmatpush2.bf16.msra.mxu0 0
    %2558 = vmatprep.subr.bf16.mxu0 0
    %2559 = vmatpush2.bf16.msra.mxu0 0
    %2560 = vmatprep.subr.bf16.mxu0 0
    %2561 = vmatpush2.bf16.msra.mxu0 0
    %2562 = vmatprep.subr.bf16.mxu0 0
    %2563 = vmatpush2.bf16.msra.mxu0 0
    %2564 = vmatprep.subr.bf16.mxu0 0
    %2565 = vmatpush2.bf16.msra.mxu0 0
    %2566 = vmatprep.subr.bf16.mxu0 0
    %2567 = vmatpush2.bf16.msra.mxu0 0
    %2568 = vmatprep.subr.bf16.mxu0 0
    %2569 = vmatpush2.bf16.msra.mxu0 0
    %2570 = vmatprep.mubr.bf16.mxu0 0
    %2571 = vmatmul.mubr.bf16.gmra.mxu0 %v2485
    %v2572 = vpop.f32.mrf.mxu0
    %v2573 = vadd.f32 0.0, %v2572
    %v2574 = vpop.f32.mrf.mxu0
    %v2575 = vpop.f32.mrf.mxu0
    %v2576 = vadd.f32 0.0, %v2575
    %v2577 = vpop.f32.mrf.mxu0
    %2578 = vmatprep.mubr.bf16.mxu0 0
    %2579 = vmatmul.mubr.bf16.gmra.mxu0 %v2488
    %v2580 = vpop.f32.mrf.mxu0
    %v2581 = vadd.f32 0.0, %v2580
    %v2582 = vpop.f32.mrf.mxu0
    %v2583 = vpop.f32.mrf.mxu0
    %v2584 = vadd.f32 0.0, %v2583
    %v2585 = vpop.f32.mrf.mxu0
    %2586 = vmatprep.mubr.bf16.mxu0 0
    %2587 = vmatmul.mubr.bf16.gmra.mxu0 %v2491
    %v2588 = vpop.f32.mrf.mxu0
    %v2589 = vadd.f32 0.0, %v2588
    %v2590 = vpop.f32.mrf.mxu0
    %v2591 = vpop.f32.mrf.mxu0
    %v2592 = vadd.f32 0.0, %v2591
    %v2593 = vpop.f32.mrf.mxu0
    %2594 = vmatprep.mubr.bf16.mxu0 0
    %2595 = vmatmul.mubr.bf16.gmra.mxu0 %v2494
    %v2596 = vpop.f32.mrf.mxu0
    %v2597 = vadd.f32 0.0, %v2596
    %v2598 = vpop.f32.mrf.mxu0
    %v2599 = vpop.f32.mrf.mxu0
    %v2600 = vadd.f32 0.0, %v2599
    %v2601 = vpop.f32.mrf.mxu0
    %2602 = vmatprep.mubr.bf16.mxu0 0
    %2603 = vmatmul.mubr.bf16.gmra.mxu0 %v2497
    %v2604 = vpop.f32.mrf.mxu0
    %v2605 = vadd.f32 0.0, %v2604
    %v2606 = vpop.f32.mrf.mxu0
    %v2607 = vpop.f32.mrf.mxu0
    %v2608 = vadd.f32 0.0, %v2607
    %v2609 = vpop.f32.mrf.mxu0
    %2610 = vmatprep.mubr.bf16.mxu0 0
    %2611 = vmatmul.mubr.bf16.gmra.mxu0 %v2500
    %v2612 = vpop.f32.mrf.mxu0
    %v2613 = vadd.f32 0.0, %v2612
    %v2614 = vpop.f32.mrf.mxu0
    %v2615 = vpop.f32.mrf.mxu0
    %v2616 = vadd.f32 0.0, %v2615
    %v2617 = vpop.f32.mrf.mxu0
    %2618 = vmatprep.mubr.bf16.mxu0 0
    %2619 = vmatmul.mubr.bf16.gmra.mxu0 %v2503
    %v2620 = vpop.f32.mrf.mxu0
    %v2621 = vadd.f32 0.0, %v2620
    %v2622 = vpop.f32.mrf.mxu0
    %v2623 = vpop.f32.mrf.mxu0
    %v2624 = vadd.f32 0.0, %v2623
    %v2625 = vpop.f32.mrf.mxu0
    %2626 = vmatprep.mubr.bf16.mxu0 0
    %2627 = vmatmul.mubr.bf16.gmra.mxu0 %v2506
    %v2628 = vpop.f32.mrf.mxu0
    %v2629 = vadd.f32 0.0, %v2628
    %v2630 = vpop.f32.mrf.mxu0
    %v2631 = vpop.f32.mrf.mxu0
    %v2632 = vadd.f32 0.0, %v2631
    %v2633 = vpop.f32.mrf.mxu0
    %2634 = vmatprep.mubr.bf16.mxu0 0
    %2635 = vmatmul.mubr.bf16.gmra.mxu0 %v2509
    %v2636 = vpop.f32.mrf.mxu0
    %v2637 = vadd.f32 0.0, %v2636
    %v2638 = vpop.f32.mrf.mxu0
    %v2639 = vpop.f32.mrf.mxu0
    %v2640 = vadd.f32 0.0, %v2639
    %v2641 = vpop.f32.mrf.mxu0
    %2642 = vmatprep.mubr.bf16.mxu0 0
    %2643 = vmatmul.mubr.bf16.gmra.mxu0 %v2512
    %v2644 = vpop.f32.mrf.mxu0
    %v2645 = vadd.f32 0.0, %v2644
    %v2646 = vpop.f32.mrf.mxu0
    %v2647 = vpop.f32.mrf.mxu0
    %v2648 = vadd.f32 0.0, %v2647
    %v2649 = vpop.f32.mrf.mxu0
    %2650 = vmatprep.mubr.bf16.mxu0 0
    %2651 = vmatmul.mubr.bf16.gmra.mxu0 %v2515
    %v2652 = vpop.f32.mrf.mxu0
    %v2653 = vadd.f32 0.0, %v2652
    %v2654 = vpop.f32.mrf.mxu0
    %v2655 = vpop.f32.mrf.mxu0
    %v2656 = vadd.f32 0.0, %v2655
    %v2657 = vpop.f32.mrf.mxu0
    %2658 = vmatprep.mubr.bf16.mxu0 0
    %2659 = vmatmul.mubr.bf16.gmra.mxu0 %v2518
    %v2660 = vpop.f32.mrf.mxu0
    %v2661 = vadd.f32 0.0, %v2660
    %v2662 = vpop.f32.mrf.mxu0
    %v2663 = vpop.f32.mrf.mxu0
    %v2664 = vadd.f32 0.0, %v2663
    %v2665 = vpop.f32.mrf.mxu0
    %2666 = vmatprep.mubr.bf16.mxu0 0
    %2667 = vmatmul.mubr.bf16.gmra.mxu0 %v2521
    %v2668 = vpop.f32.mrf.mxu0
    %v2669 = vadd.f32 0.0, %v2668
    %v2670 = vpop.f32.mrf.mxu0
    %v2671 = vpop.f32.mrf.mxu0
    %v2672 = vadd.f32 0.0, %v2671
    %v2673 = vpop.f32.mrf.mxu0
    %2674 = vmatprep.mubr.bf16.mxu0 0
    %2675 = vmatmul.mubr.bf16.gmra.mxu0 %v2524
    %v2676 = vpop.f32.mrf.mxu0
    %v2677 = vadd.f32 0.0, %v2676
    %v2678 = vpop.f32.mrf.mxu0
    %v2679 = vpop.f32.mrf.mxu0
    %v2680 = vadd.f32 0.0, %v2679
    %v2681 = vpop.f32.mrf.mxu0
    %2682 = vmatprep.mubr.bf16.mxu0 0
    %2683 = vmatmul.mubr.bf16.gmra.mxu0 %v2527
    %v2684 = vpop.f32.mrf.mxu0
    %v2685 = vadd.f32 0.0, %v2684
    %v2686 = vpop.f32.mrf.mxu0
    %v2687 = vpop.f32.mrf.mxu0
    %v2688 = vadd.f32 0.0, %v2687
    %v2689 = vpop.f32.mrf.mxu0
    %2690 = vmatprep.mubr.bf16.mxu0 0
    %2691 = vmatmul.mubr.bf16.gmra.mxu0 %v2530
    %v2692 = vpop.f32.mrf.mxu0
    %v2693 = vadd.f32 0.0, %v2692
    %v2694 = vpop.f32.mrf.mxu0
    %v2695 = vpop.f32.mrf.mxu0
    %v2696 = vadd.f32 0.0, %v2695
    %v2697 = vpop.f32.mrf.mxu0
    %2698 = vmatprep.mubr.bf16.mxu0 0
    %2699 = vmatmul.mubr.bf16.gmra.mxu0 %v2533
    %v2700 = vpop.f32.mrf.mxu0
    %v2701 = vadd.f32 0.0, %v2700
    %v2702 = vpop.f32.mrf.mxu0
    %v2703 = vpop.f32.mrf.mxu0
    %v2704 = vadd.f32 0.0, %v2703
    %v2705 = vpop.f32.mrf.mxu0
    %2706 = vmatprep.mubr.bf16.mxu0 0
    %2707 = vmatmul.mubr.bf16.gmra.mxu0 %v2536
    %v2708 = vpop.f32.mrf.mxu0
    %v2709 = vadd.f32 0.0, %v2708
    %v2710 = vpop.f32.mrf.mxu0
    %v2711 = vpop.f32.mrf.mxu0
    %v2712 = vadd.f32 0.0, %v2711
    %v2713 = vpop.f32.mrf.mxu0
    %2714 = vdwg.mxu0
    %v2715 = vpack.c.bf16 %v2576, %v2573
    %v2716 = vpack.c.bf16 %v2584, %v2581
    %v2717 = vpack.c.bf16 %v2592, %v2589
    %v2718 = vpack.c.bf16 %v2600, %v2597
    %v2719 = vpack.c.bf16 %v2608, %v2605
    %v2720 = vpack.c.bf16 %v2616, %v2613
    %v2721 = vpack.c.bf16 %v2624, %v2621
    %v2722 = vpack.c.bf16 %v2632, %v2629
    %v2723 = vpack.c.bf16 %v2640, %v2637
    %v2724 = vpack.c.bf16 %v2648, %v2645
    %v2725 = vpack.c.bf16 %v2656, %v2653
    %v2726 = vpack.c.bf16 %v2664, %v2661
    %v2727 = vpack.c.bf16 %v2672, %v2669
    %v2728 = vpack.c.bf16 %v2680, %v2677
    %v2729 = vpack.c.bf16 %v2688, %v2685
    %v2730 = vpack.c.bf16 %v2696, %v2693
    %v2731 = vpack.c.bf16 %v2704, %v2701
    %v2732 = vpack.c.bf16 %v2712, %v2709
    %2733 = vmatprep.subr.bf16.mxu0 0
    %2734 = vmatpush1.bf16.msra.mxu0 %v422
    %2735 = vmatprep.subr.bf16.mxu0 0
    %2736 = vmatpush1.bf16.msra.mxu0 %v421
    %2737 = vmatprep.subr.bf16.mxu0 0
    %2738 = vmatpush1.bf16.msra.mxu0 %v420
    %2739 = vmatprep.subr.bf16.mxu0 0
    %2740 = vmatpush1.bf16.msra.mxu0 %v419
    %2741 = vmatprep.subr.bf16.mxu0 0
    %2742 = vmatpush1.bf16.msra.mxu0 %v418
    %2743 = vmatprep.subr.bf16.mxu0 0
    %2744 = vmatpush1.bf16.msra.mxu0 %v417
    %2745 = vmatprep.subr.bf16.mxu0 0
    %2746 = vmatpush1.bf16.msra.mxu0 %v416
    %2747 = vmatprep.subr.bf16.mxu0 0
    %2748 = vmatpush1.bf16.msra.mxu0 %v415
    %2749 = vmatprep.subr.bf16.mxu0 0
    %2750 = vmatpush2.bf16.msra.mxu0 0
    %2751 = vmatprep.subr.bf16.mxu0 0
    %2752 = vmatpush2.bf16.msra.mxu0 0
    %2753 = vmatprep.subr.bf16.mxu0 0
    %2754 = vmatpush2.bf16.msra.mxu0 0
    %2755 = vmatprep.subr.bf16.mxu0 0
    %2756 = vmatpush2.bf16.msra.mxu0 0
    %2757 = vmatprep.subr.bf16.mxu0 0
    %2758 = vmatpush2.bf16.msra.mxu0 0
    %2759 = vmatprep.subr.bf16.mxu0 0
    %2760 = vmatpush2.bf16.msra.mxu0 0
    %2761 = vmatprep.subr.bf16.mxu0 0
    %2762 = vmatpush2.bf16.msra.mxu0 0
    %2763 = vmatprep.subr.bf16.mxu0 0
    %2764 = vmatpush2.bf16.msra.mxu0 0
    %2765 = vmatprep.mubr.bf16.mxu0 0
    %2766 = vmatmul.mubr.bf16.gmra.mxu0 %v2717
    %v2767 = vpop.f32.mrf.mxu0
    %v2768 = vadd.f32 0.0, %v2767
    %v2769 = vpop.f32.mrf.mxu0
    %v2770 = vpop.f32.mrf.mxu0
    %v2771 = vadd.f32 0.0, %v2770
    %v2772 = vpop.f32.mrf.mxu0
    %2773 = vmatprep.mubr.bf16.mxu0 0
    %2774 = vmatmul.mubr.bf16.gmra.mxu0 %v2718
    %v2775 = vpop.f32.mrf.mxu0
    %v2776 = vadd.f32 0.0, %v2775
    %v2777 = vpop.f32.mrf.mxu0
    %v2778 = vpop.f32.mrf.mxu0
    %v2779 = vadd.f32 0.0, %v2778
    %v2780 = vpop.f32.mrf.mxu0
    %2781 = vdwg.mxu0
    %2782 = vmatprep.subr.bf16.mxu0 0
    %2783 = vmatpush1.bf16.msra.mxu0 %v258
    %2784 = vmatprep.subr.bf16.mxu0 0
    %2785 = vmatpush1.bf16.msra.mxu0 %v257
    %2786 = vmatprep.subr.bf16.mxu0 0
    %2787 = vmatpush1.bf16.msra.mxu0 %v256
    %2788 = vmatprep.subr.bf16.mxu0 0
    %2789 = vmatpush1.bf16.msra.mxu0 %v255
    %2790 = vmatprep.subr.bf16.mxu0 0
    %2791 = vmatpush1.bf16.msra.mxu0 %v254
    %2792 = vmatprep.subr.bf16.mxu0 0
    %2793 = vmatpush1.bf16.msra.mxu0 %v253
    %2794 = vmatprep.subr.bf16.mxu0 0
    %2795 = vmatpush1.bf16.msra.mxu0 %v252
    %2796 = vmatprep.subr.bf16.mxu0 0
    %2797 = vmatpush1.bf16.msra.mxu0 %v251
    %2798 = vmatprep.subr.bf16.mxu0 0
    %2799 = vmatpush2.bf16.msra.mxu0 0
    %2800 = vmatprep.subr.bf16.mxu0 0
    %2801 = vmatpush2.bf16.msra.mxu0 0
    %2802 = vmatprep.subr.bf16.mxu0 0
    %2803 = vmatpush2.bf16.msra.mxu0 0
    %2804 = vmatprep.subr.bf16.mxu0 0
    %2805 = vmatpush2.bf16.msra.mxu0 0
    %2806 = vmatprep.subr.bf16.mxu0 0
    %2807 = vmatpush2.bf16.msra.mxu0 0
    %2808 = vmatprep.subr.bf16.mxu0 0
    %2809 = vmatpush2.bf16.msra.mxu0 0
    %2810 = vmatprep.subr.bf16.mxu0 0
    %2811 = vmatpush2.bf16.msra.mxu0 0
    %2812 = vmatprep.subr.bf16.mxu0 0
    %2813 = vmatpush2.bf16.msra.mxu0 0
    %2814 = vmatprep.mubr.bf16.mxu0 0
    %2815 = vmatmul.mubr.bf16.gmra.mxu0 %v2715
    %v2816 = vpop.f32.mrf.mxu0
    %v2817 = vadd.f32 %v2768, %v2816
    %v2818 = vpop.f32.mrf.mxu0
    %v2819 = vpop.f32.mrf.mxu0
    %v2820 = vadd.f32 %v2771, %v2819
    %v2821 = vpop.f32.mrf.mxu0
    %2822 = vmatprep.mubr.bf16.mxu0 0
    %2823 = vmatmul.mubr.bf16.gmra.mxu0 %v2716
    %v2824 = vpop.f32.mrf.mxu0
    %v2825 = vadd.f32 %v2776, %v2824
    %v2826 = vpop.f32.mrf.mxu0
    %v2827 = vpop.f32.mrf.mxu0
    %v2828 = vadd.f32 %v2779, %v2827
    %v2829 = vpop.f32.mrf.mxu0
    %2830 = vdwg.mxu0
    %2831 = vmatprep.subr.bf16.mxu0 0
    %2832 = vmatpush1.bf16.msra.mxu0 %v593
    %2833 = vmatprep.subr.bf16.mxu0 0
    %2834 = vmatpush1.bf16.msra.mxu0 %v592
    %2835 = vmatprep.subr.bf16.mxu0 0
    %2836 = vmatpush1.bf16.msra.mxu0 %v591
    %2837 = vmatprep.subr.bf16.mxu0 0
    %2838 = vmatpush1.bf16.msra.mxu0 %v590
    %2839 = vmatprep.subr.bf16.mxu0 0
    %2840 = vmatpush1.bf16.msra.mxu0 %v589
    %2841 = vmatprep.subr.bf16.mxu0 0
    %2842 = vmatpush1.bf16.msra.mxu0 %v588
    %2843 = vmatprep.subr.bf16.mxu0 0
    %2844 = vmatpush1.bf16.msra.mxu0 %v587
    %2845 = vmatprep.subr.bf16.mxu0 0
    %2846 = vmatpush1.bf16.msra.mxu0 %v586
    %2847 = vmatprep.subr.bf16.mxu0 0
    %2848 = vmatpush2.bf16.msra.mxu0 0
    %2849 = vmatprep.subr.bf16.mxu0 0
    %2850 = vmatpush2.bf16.msra.mxu0 0
    %2851 = vmatprep.subr.bf16.mxu0 0
    %2852 = vmatpush2.bf16.msra.mxu0 0
    %2853 = vmatprep.subr.bf16.mxu0 0
    %2854 = vmatpush2.bf16.msra.mxu0 0
    %2855 = vmatprep.subr.bf16.mxu0 0
    %2856 = vmatpush2.bf16.msra.mxu0 0
    %2857 = vmatprep.subr.bf16.mxu0 0
    %2858 = vmatpush2.bf16.msra.mxu0 0
    %2859 = vmatprep.subr.bf16.mxu0 0
    %2860 = vmatpush2.bf16.msra.mxu0 0
    %2861 = vmatprep.subr.bf16.mxu0 0
    %2862 = vmatpush2.bf16.msra.mxu0 0
    %2863 = vmatprep.mubr.bf16.mxu0 0
    %2864 = vmatmul.mubr.bf16.gmra.mxu0 %v2719
    %v2865 = vpop.f32.mrf.mxu0
    %v2866 = vadd.f32 0.0, %v2865
    %v2867 = vpop.f32.mrf.mxu0
    %v2868 = vpop.f32.mrf.mxu0
    %v2869 = vadd.f32 0.0, %v2868
    %v2870 = vpop.f32.mrf.mxu0
    %2871 = vmatprep.mubr.bf16.mxu0 0
    %2872 = vmatmul.mubr.bf16.gmra.mxu0 %v2720
    %v2873 = vpop.f32.mrf.mxu0
    %v2874 = vadd.f32 0.0, %v2873
    %v2875 = vpop.f32.mrf.mxu0
    %v2876 = vpop.f32.mrf.mxu0
    %v2877 = vadd.f32 0.0, %v2876
    %v2878 = vpop.f32.mrf.mxu0
    %2879 = vdwg.mxu0
    %v2880 = vadd.f32 %v2817, %v2866
    %v2881 = vadd.f32 %v2820, %v2869
    %v2882 = vadd.f32 %v2825, %v2874
    %v2883 = vadd.f32 %v2828, %v2877
    %2884 = vmatprep.subr.bf16.mxu0 0
    %2885 = vmatpush1.bf16.msra.mxu0 %v764
    %2886 = vmatprep.subr.bf16.mxu0 0
    %2887 = vmatpush1.bf16.msra.mxu0 %v763
    %2888 = vmatprep.subr.bf16.mxu0 0
    %2889 = vmatpush1.bf16.msra.mxu0 %v762
    %2890 = vmatprep.subr.bf16.mxu0 0
    %2891 = vmatpush1.bf16.msra.mxu0 %v761
    %2892 = vmatprep.subr.bf16.mxu0 0
    %2893 = vmatpush1.bf16.msra.mxu0 %v760
    %2894 = vmatprep.subr.bf16.mxu0 0
    %2895 = vmatpush1.bf16.msra.mxu0 %v759
    %2896 = vmatprep.subr.bf16.mxu0 0
    %2897 = vmatpush1.bf16.msra.mxu0 %v758
    %2898 = vmatprep.subr.bf16.mxu0 0
    %2899 = vmatpush1.bf16.msra.mxu0 %v757
    %2900 = vmatprep.subr.bf16.mxu0 0
    %2901 = vmatpush2.bf16.msra.mxu0 0
    %2902 = vmatprep.subr.bf16.mxu0 0
    %2903 = vmatpush2.bf16.msra.mxu0 0
    %2904 = vmatprep.subr.bf16.mxu0 0
    %2905 = vmatpush2.bf16.msra.mxu0 0
    %2906 = vmatprep.subr.bf16.mxu0 0
    %2907 = vmatpush2.bf16.msra.mxu0 0
    %2908 = vmatprep.subr.bf16.mxu0 0
    %2909 = vmatpush2.bf16.msra.mxu0 0
    %2910 = vmatprep.subr.bf16.mxu0 0
    %2911 = vmatpush2.bf16.msra.mxu0 0
    %2912 = vmatprep.subr.bf16.mxu0 0
    %2913 = vmatpush2.bf16.msra.mxu0 0
    %2914 = vmatprep.subr.bf16.mxu0 0
    %2915 = vmatpush2.bf16.msra.mxu0 0
    %2916 = vmatprep.mubr.bf16.mxu0 0
    %2917 = vmatmul.mubr.bf16.gmra.mxu0 %v2721
    %v2918 = vpop.f32.mrf.mxu0
    %v2919 = vadd.f32 0.0, %v2918
    %v2920 = vpop.f32.mrf.mxu0
    %v2921 = vpop.f32.mrf.mxu0
    %v2922 = vadd.f32 0.0, %v2921
    %v2923 = vpop.f32.mrf.mxu0
    %2924 = vmatprep.mubr.bf16.mxu0 0
    %2925 = vmatmul.mubr.bf16.gmra.mxu0 %v2722
    %v2926 = vpop.f32.mrf.mxu0
    %v2927 = vadd.f32 0.0, %v2926
    %v2928 = vpop.f32.mrf.mxu0
    %v2929 = vpop.f32.mrf.mxu0
    %v2930 = vadd.f32 0.0, %v2929
    %v2931 = vpop.f32.mrf.mxu0
    %2932 = vdwg.mxu0
    %v2933 = vadd.f32 %v2880, %v2919
    %v2934 = vadd.f32 %v2881, %v2922
    %v2935 = vadd.f32 %v2882, %v2927
    %v2936 = vadd.f32 %v2883, %v2930
    %2937 = vmatprep.subr.bf16.mxu0 0
    %2938 = vmatpush1.bf16.msra.mxu0 %v935
    %2939 = vmatprep.subr.bf16.mxu0 0
    %2940 = vmatpush1.bf16.msra.mxu0 %v934
    %2941 = vmatprep.subr.bf16.mxu0 0
    %2942 = vmatpush1.bf16.msra.mxu0 %v933
    %2943 = vmatprep.subr.bf16.mxu0 0
    %2944 = vmatpush1.bf16.msra.mxu0 %v932
    %2945 = vmatprep.subr.bf16.mxu0 0
    %2946 = vmatpush1.bf16.msra.mxu0 %v931
    %2947 = vmatprep.subr.bf16.mxu0 0
    %2948 = vmatpush1.bf16.msra.mxu0 %v930
    %2949 = vmatprep.subr.bf16.mxu0 0
    %2950 = vmatpush1.bf16.msra.mxu0 %v929
    %2951 = vmatprep.subr.bf16.mxu0 0
    %2952 = vmatpush1.bf16.msra.mxu0 %v928
    %2953 = vmatprep.subr.bf16.mxu0 0
    %2954 = vmatpush2.bf16.msra.mxu0 0
    %2955 = vmatprep.subr.bf16.mxu0 0
    %2956 = vmatpush2.bf16.msra.mxu0 0
    %2957 = vmatprep.subr.bf16.mxu0 0
    %2958 = vmatpush2.bf16.msra.mxu0 0
    %2959 = vmatprep.subr.bf16.mxu0 0
    %2960 = vmatpush2.bf16.msra.mxu0 0
    %2961 = vmatprep.subr.bf16.mxu0 0
    %2962 = vmatpush2.bf16.msra.mxu0 0
    %2963 = vmatprep.subr.bf16.mxu0 0
    %2964 = vmatpush2.bf16.msra.mxu0 0
    %2965 = vmatprep.subr.bf16.mxu0 0
    %2966 = vmatpush2.bf16.msra.mxu0 0
    %2967 = vmatprep.subr.bf16.mxu0 0
    %2968 = vmatpush2.bf16.msra.mxu0 0
    %2969 = vmatprep.mubr.bf16.mxu0 0
    %2970 = vmatmul.mubr.bf16.gmra.mxu0 %v2723
    %v2971 = vpop.f32.mrf.mxu0
    %v2972 = vadd.f32 0.0, %v2971
    %v2973 = vpop.f32.mrf.mxu0
    %v2974 = vpop.f32.mrf.mxu0
    %v2975 = vadd.f32 0.0, %v2974
    %v2976 = vpop.f32.mrf.mxu0
    %2977 = vmatprep.mubr.bf16.mxu0 0
    %2978 = vmatmul.mubr.bf16.gmra.mxu0 %v2724
    %v2979 = vpop.f32.mrf.mxu0
    %v2980 = vadd.f32 0.0, %v2979
    %v2981 = vpop.f32.mrf.mxu0
    %v2982 = vpop.f32.mrf.mxu0
    %v2983 = vadd.f32 0.0, %v2982
    %v2984 = vpop.f32.mrf.mxu0
    %2985 = vdwg.mxu0
    %v2986 = vadd.f32 %v2933, %v2972
    %v2987 = vadd.f32 %v2934, %v2975
    %v2988 = vadd.f32 %v2935, %v2980
    %v2989 = vadd.f32 %v2936, %v2983
    %2990 = vmatprep.subr.bf16.mxu0 0
    %2991 = vmatpush1.bf16.msra.mxu0 %v1106
    %2992 = vmatprep.subr.bf16.mxu0 0
    %2993 = vmatpush1.bf16.msra.mxu0 %v1105
    %2994 = vmatprep.subr.bf16.mxu0 0
    %2995 = vmatpush1.bf16.msra.mxu0 %v1104
    %2996 = vmatprep.subr.bf16.mxu0 0
    %2997 = vmatpush1.bf16.msra.mxu0 %v1103
    %2998 = vmatprep.subr.bf16.mxu0 0
    %2999 = vmatpush1.bf16.msra.mxu0 %v1102
    %3000 = vmatprep.subr.bf16.mxu0 0
    %3001 = vmatpush1.bf16.msra.mxu0 %v1101
    %3002 = vmatprep.subr.bf16.mxu0 0
    %3003 = vmatpush1.bf16.msra.mxu0 %v1100
    %3004 = vmatprep.subr.bf16.mxu0 0
    %3005 = vmatpush1.bf16.msra.mxu0 %v1099
    %3006 = vmatprep.subr.bf16.mxu0 0
    %3007 = vmatpush2.bf16.msra.mxu0 0
    %3008 = vmatprep.subr.bf16.mxu0 0
    %3009 = vmatpush2.bf16.msra.mxu0 0
    %3010 = vmatprep.subr.bf16.mxu0 0
    %3011 = vmatpush2.bf16.msra.mxu0 0
    %3012 = vmatprep.subr.bf16.mxu0 0
    %3013 = vmatpush2.bf16.msra.mxu0 0
    %3014 = vmatprep.subr.bf16.mxu0 0
    %3015 = vmatpush2.bf16.msra.mxu0 0
    %3016 = vmatprep.subr.bf16.mxu0 0
    %3017 = vmatpush2.bf16.msra.mxu0 0
    %3018 = vmatprep.subr.bf16.mxu0 0
    %3019 = vmatpush2.bf16.msra.mxu0 0
    %3020 = vmatprep.subr.bf16.mxu0 0
    %3021 = vmatpush2.bf16.msra.mxu0 0
    %3022 = vmatprep.mubr.bf16.mxu0 0
    %3023 = vmatmul.mubr.bf16.gmra.mxu0 %v2725
    %v3024 = vpop.f32.mrf.mxu0
    %v3025 = vadd.f32 0.0, %v3024
    %v3026 = vpop.f32.mrf.mxu0
    %v3027 = vpop.f32.mrf.mxu0
    %v3028 = vadd.f32 0.0, %v3027
    %v3029 = vpop.f32.mrf.mxu0
    %3030 = vmatprep.mubr.bf16.mxu0 0
    %3031 = vmatmul.mubr.bf16.gmra.mxu0 %v2726
    %v3032 = vpop.f32.mrf.mxu0
    %v3033 = vadd.f32 0.0, %v3032
    %v3034 = vpop.f32.mrf.mxu0
    %v3035 = vpop.f32.mrf.mxu0
    %v3036 = vadd.f32 0.0, %v3035
    %v3037 = vpop.f32.mrf.mxu0
    %3038 = vdwg.mxu0
    %v3039 = vadd.f32 %v2986, %v3025
    %v3040 = vadd.f32 %v2987, %v3028
    %v3041 = vadd.f32 %v2988, %v3033
    %v3042 = vadd.f32 %v2989, %v3036
    %3043 = vmatprep.subr.bf16.mxu0 0
    %3044 = vmatpush1.bf16.msra.mxu0 %v1277
    %3045 = vmatprep.subr.bf16.mxu0 0
    %3046 = vmatpush1.bf16.msra.mxu0 %v1276
    %3047 = vmatprep.subr.bf16.mxu0 0
    %3048 = vmatpush1.bf16.msra.mxu0 %v1275
    %3049 = vmatprep.subr.bf16.mxu0 0
    %3050 = vmatpush1.bf16.msra.mxu0 %v1274
    %3051 = vmatprep.subr.bf16.mxu0 0
    %3052 = vmatpush1.bf16.msra.mxu0 %v1273
    %3053 = vmatprep.subr.bf16.mxu0 0
    %3054 = vmatpush1.bf16.msra.mxu0 %v1272
    %3055 = vmatprep.subr.bf16.mxu0 0
    %3056 = vmatpush1.bf16.msra.mxu0 %v1271
    %3057 = vmatprep.subr.bf16.mxu0 0
    %3058 = vmatpush1.bf16.msra.mxu0 %v1270
    %3059 = vmatprep.subr.bf16.mxu0 0
    %3060 = vmatpush2.bf16.msra.mxu0 0
    %3061 = vmatprep.subr.bf16.mxu0 0
    %3062 = vmatpush2.bf16.msra.mxu0 0
    %3063 = vmatprep.subr.bf16.mxu0 0
    %3064 = vmatpush2.bf16.msra.mxu0 0
    %3065 = vmatprep.subr.bf16.mxu0 0
    %3066 = vmatpush2.bf16.msra.mxu0 0
    %3067 = vmatprep.subr.bf16.mxu0 0
    %3068 = vmatpush2.bf16.msra.mxu0 0
    %3069 = vmatprep.subr.bf16.mxu0 0
    %3070 = vmatpush2.bf16.msra.mxu0 0
    %3071 = vmatprep.subr.bf16.mxu0 0
    %3072 = vmatpush2.bf16.msra.mxu0 0
    %3073 = vmatprep.subr.bf16.mxu0 0
    %3074 = vmatpush2.bf16.msra.mxu0 0
    %3075 = vmatprep.mubr.bf16.mxu0 0
    %3076 = vmatmul.mubr.bf16.gmra.mxu0 %v2727
    %v3077 = vpop.f32.mrf.mxu0
    %v3078 = vadd.f32 0.0, %v3077
    %v3079 = vpop.f32.mrf.mxu0
    %v3080 = vpop.f32.mrf.mxu0
    %v3081 = vadd.f32 0.0, %v3080
    %v3082 = vpop.f32.mrf.mxu0
    %3083 = vmatprep.mubr.bf16.mxu0 0
    %3084 = vmatmul.mubr.bf16.gmra.mxu0 %v2728
    %v3085 = vpop.f32.mrf.mxu0
    %v3086 = vadd.f32 0.0, %v3085
    %v3087 = vpop.f32.mrf.mxu0
    %v3088 = vpop.f32.mrf.mxu0
    %v3089 = vadd.f32 0.0, %v3088
    %v3090 = vpop.f32.mrf.mxu0
    %3091 = vdwg.mxu0
    %v3092 = vadd.f32 %v3039, %v3078
    %v3093 = vadd.f32 %v3040, %v3081
    %v3094 = vadd.f32 %v3041, %v3086
    %v3095 = vadd.f32 %v3042, %v3089
    %3096 = vmatprep.subr.bf16.mxu0 0
    %3097 = vmatpush1.bf16.msra.mxu0 %v1448
    %3098 = vmatprep.subr.bf16.mxu0 0
    %3099 = vmatpush1.bf16.msra.mxu0 %v1447
    %3100 = vmatprep.subr.bf16.mxu0 0
    %3101 = vmatpush1.bf16.msra.mxu0 %v1446
    %3102 = vmatprep.subr.bf16.mxu0 0
    %3103 = vmatpush1.bf16.msra.mxu0 %v1445
    %3104 = vmatprep.subr.bf16.mxu0 0
    %3105 = vmatpush1.bf16.msra.mxu0 %v1444
    %3106 = vmatprep.subr.bf16.mxu0 0
    %3107 = vmatpush1.bf16.msra.mxu0 %v1443
    %3108 = vmatprep.subr.bf16.mxu0 0
    %3109 = vmatpush1.bf16.msra.mxu0 %v1442
    %3110 = vmatprep.subr.bf16.mxu0 0
    %3111 = vmatpush1.bf16.msra.mxu0 %v1441
    %3112 = vmatprep.subr.bf16.mxu0 0
    %3113 = vmatpush2.bf16.msra.mxu0 0
    %3114 = vmatprep.subr.bf16.mxu0 0
    %3115 = vmatpush2.bf16.msra.mxu0 0
    %3116 = vmatprep.subr.bf16.mxu0 0
    %3117 = vmatpush2.bf16.msra.mxu0 0
    %3118 = vmatprep.subr.bf16.mxu0 0
    %3119 = vmatpush2.bf16.msra.mxu0 0
    %3120 = vmatprep.subr.bf16.mxu0 0
    %3121 = vmatpush2.bf16.msra.mxu0 0
    %3122 = vmatprep.subr.bf16.mxu0 0
    %3123 = vmatpush2.bf16.msra.mxu0 0
    %3124 = vmatprep.subr.bf16.mxu0 0
    %3125 = vmatpush2.bf16.msra.mxu0 0
    %3126 = vmatprep.subr.bf16.mxu0 0
    %3127 = vmatpush2.bf16.msra.mxu0 0
    %3128 = vmatprep.mubr.bf16.mxu0 0
    %3129 = vmatmul.mubr.bf16.gmra.mxu0 %v2729
    %v3130 = vpop.f32.mrf.mxu0
    %v3131 = vadd.f32 0.0, %v3130
    %v3132 = vpop.f32.mrf.mxu0
    %v3133 = vpop.f32.mrf.mxu0
    %v3134 = vadd.f32 0.0, %v3133
    %v3135 = vpop.f32.mrf.mxu0
    %3136 = vmatprep.mubr.bf16.mxu0 0
    %3137 = vmatmul.mubr.bf16.gmra.mxu0 %v2730
    %v3138 = vpop.f32.mrf.mxu0
    %v3139 = vadd.f32 0.0, %v3138
    %v3140 = vpop.f32.mrf.mxu0
    %v3141 = vpop.f32.mrf.mxu0
    %v3142 = vadd.f32 0.0, %v3141
    %v3143 = vpop.f32.mrf.mxu0
    %3144 = vdwg.mxu0
    %v3145 = vadd.f32 %v3092, %v3131
    %v3146 = vadd.f32 %v3093, %v3134
    %v3147 = vadd.f32 %v3094, %v3139
    %v3148 = vadd.f32 %v3095, %v3142
    %3149 = vmatprep.subr.bf16.mxu0 0
    %3150 = vmatpush1.bf16.msra.mxu0 %v1619
    %3151 = vmatprep.subr.bf16.mxu0 0
    %3152 = vmatpush1.bf16.msra.mxu0 %v1618
    %3153 = vmatprep.subr.bf16.mxu0 0
    %3154 = vmatpush1.bf16.msra.mxu0 %v1617
    %3155 = vmatprep.subr.bf16.mxu0 0
    %3156 = vmatpush1.bf16.msra.mxu0 %v1616
    %3157 = vmatprep.subr.bf16.mxu0 0
    %3158 = vmatpush1.bf16.msra.mxu0 %v1615
    %3159 = vmatprep.subr.bf16.mxu0 0
    %3160 = vmatpush1.bf16.msra.mxu0 %v1614
    %3161 = vmatprep.subr.bf16.mxu0 0
    %3162 = vmatpush1.bf16.msra.mxu0 %v1613
    %3163 = vmatprep.subr.bf16.mxu0 0
    %3164 = vmatpush1.bf16.msra.mxu0 %v1612
    %3165 = vmatprep.subr.bf16.mxu0 0
    %3166 = vmatpush2.bf16.msra.mxu0 0
    %3167 = vmatprep.subr.bf16.mxu0 0
    %3168 = vmatpush2.bf16.msra.mxu0 0
    %3169 = vmatprep.subr.bf16.mxu0 0
    %3170 = vmatpush2.bf16.msra.mxu0 0
    %3171 = vmatprep.subr.bf16.mxu0 0
    %3172 = vmatpush2.bf16.msra.mxu0 0
    %3173 = vmatprep.subr.bf16.mxu0 0
    %3174 = vmatpush2.bf16.msra.mxu0 0
    %3175 = vmatprep.subr.bf16.mxu0 0
    %3176 = vmatpush2.bf16.msra.mxu0 0
    %3177 = vmatprep.subr.bf16.mxu0 0
    %3178 = vmatpush2.bf16.msra.mxu0 0
    %3179 = vmatprep.subr.bf16.mxu0 0
    %3180 = vmatpush2.bf16.msra.mxu0 0
    %3181 = vmatprep.mubr.bf16.mxu0 0
    %3182 = vmatmul.mubr.bf16.gmra.mxu0 %v2731
    %v3183 = vpop.f32.mrf.mxu0
    %v3184 = vadd.f32 0.0, %v3183
    %v3185 = vpop.f32.mrf.mxu0
    %v3186 = vpop.f32.mrf.mxu0
    %v3187 = vadd.f32 0.0, %v3186
    %v3188 = vpop.f32.mrf.mxu0
    %3189 = vmatprep.mubr.bf16.mxu0 0
    %3190 = vmatmul.mubr.bf16.gmra.mxu0 %v2732
    %v3191 = vpop.f32.mrf.mxu0
    %v3192 = vadd.f32 0.0, %v3191
    %v3193 = vpop.f32.mrf.mxu0
    %v3194 = vpop.f32.mrf.mxu0
    %v3195 = vadd.f32 0.0, %v3194
    %v3196 = vpop.f32.mrf.mxu0
    %3197 = vdwg.mxu0
    %v3198 = vadd.f32 %v3145, %v3184
    %v3199 = vadd.f32 %v3146, %v3187
    %v3200 = vadd.f32 %v3147, %v3192
    %v3201 = vadd.f32 %v3148, %v3195
    %s3202 = sld [smem:[#allocation2]]
    %vm3203 = vcmp.gt.f32.partialorder %v3198, 0.0
    %vm3204 = vcmp.gt.f32.partialorder %v3199, 0.0
    %vm3205 = vcmp.gt.f32.partialorder %v3200, 0.0
    %vm3206 = vcmp.gt.f32.partialorder %v3201, 0.0
    %v3207 = vstv %s3202
    %v3208 = vmul.f32 %v3207, %v3198
    %v3209 = vmul.f32 %v3207, %v3199
    %v3210 = vmul.f32 %v3207, %v3200
    %v3211 = vmul.f32 %v3207, %v3201
    %v3212 = vsel %vm3203, %v3198, %v3208
    %v3213 = vsel %vm3204, %v3199, %v3209
    %v3214 = vsel %vm3205, %v3200, %v3210
    %v3215 = vsel %vm3206, %v3201, %v3211
    %v3216 = vld [vmem:[%s14] sm:$0xf]
    %v3217 = vld [vmem:[%s14 + $0x4] sm:$0xf]
    %v3218 = vpack.c.bf16 %v3213, %v3212
    %v3219 = vpack.c.bf16 %v3215, %v3214
    %v3222 = vunpack.c.l.b16 %v3216
    %v3223 = vunpack.c.l.b16 %v3217
    %v3224 = vpack.c.b16 %v3223, %v3222
    %v3226 = vsel %vm2483, %v3224, 0
    %3228 = vmatprep.subr.bf16.mxu0 0
    %3229 = vmatpush1.bf16.msra.mxu0 0
    %3230 = vmatprep.subr.bf16.mxu0 0
    %3231 = vmatpush1.bf16.msra.mxu0 0
    %3232 = vmatprep.subr.bf16.mxu0 0
    %3233 = vmatpush1.bf16.msra.mxu0 0
    %3234 = vmatprep.subr.bf16.mxu0 0
    %3235 = vmatpush1.bf16.msra.mxu0 0
    %3236 = vmatprep.subr.bf16.mxu0 0
    %3237 = vmatpush1.bf16.msra.mxu0 0
    %3238 = vmatprep.subr.bf16.mxu0 0
    %3239 = vmatpush1.bf16.msra.mxu0 0
    %3240 = vmatprep.subr.bf16.mxu0 0
    %3241 = vmatpush1.bf16.msra.mxu0 %v3219
    %3242 = vmatprep.subr.bf16.mxu0 0
    %3243 = vmatpush1.bf16.msra.mxu0 %v3218
    %3244 = vmatprep.subr.bf16.mxu0 0
    %3245 = vmatpush2.bf16.msra.mxu0 0
    %3246 = vmatprep.subr.bf16.mxu0 0
    %3247 = vmatpush2.bf16.msra.mxu0 0
    %3248 = vmatprep.subr.bf16.mxu0 0
    %3249 = vmatpush2.bf16.msra.mxu0 0
    %3250 = vmatprep.subr.bf16.mxu0 0
    %3251 = vmatpush2.bf16.msra.mxu0 0
    %3252 = vmatprep.subr.bf16.mxu0 0
    %3253 = vmatpush2.bf16.msra.mxu0 0
    %3254 = vmatprep.subr.bf16.mxu0 0
    %3255 = vmatpush2.bf16.msra.mxu0 0
    %3256 = vmatprep.subr.bf16.mxu0 0
    %3257 = vmatpush2.bf16.msra.mxu0 0
    %3258 = vmatprep.subr.bf16.mxu0 0
    %3259 = vmatpush2.bf16.msra.mxu0 0
    %3260 = vmatprep.mubr.bf16.mxu0 0
    %3261 = vmatmul.mubr.bf16.gmra.mxu0 %v3226
    %v3262 = vpop.f32.mrf.mxu0
    %v3263 = vadd.f32 0.0, %v3262
    %v3264 = vpop.f32.mrf.mxu0
    %v3265 = vpop.f32.mrf.mxu0
    %v3266 = vadd.f32 0.0, %v3265
    %v3267 = vpop.f32.mrf.mxu0
    %3268 = vdwg.mxu0
    %v3269 = vadd.f32 %v2231, %v3263
    %v3270 = vadd.f32 %v2232, %v3266
    %3271 = vst [vmem:[#allocation3] sm:$0xff] %v3269
    %3272 = vst [vmem:[#allocation3 + $0x8] sm:$0xff] %v3270
    // Predicated region
    $region66: #{tpu_custom_call.1} parent=1 // pred_check
      _
    $region67: #{tpu_custom_call.1} parent=1 // pred_check_branch
      %3274 = sbr.rel (0) target = $region69
    $region68: #{tpu_custom_call.1} parent=1 // pred_region
      %s3276 = ssub.s32 256, 256
      %3277 = vsyncadd [#allocation4], %s3276
      %s3278 = sshll.u32 [#allocation3], 4
      %s3279 = int_to_ptr.vmem [resolvable:$true] %s3278
      %3284 = dma.vmem_to_hbm [thread:$0]  %s3279, 256, %s16, [#allocation4], 128, 128, 8
    $region69: #{tpu_custom_call.1} parent=1 // pred_fallthru
      _
    // Predicated region
    $region70: #{tpu_custom_call.1} parent=1 // pred_check
      _
    $region71: #{tpu_custom_call.1} parent=1 // pred_check_branch
      %3286 = sbr.rel (0) target = $region73
    $region72: #{tpu_custom_call.1} parent=1 // pred_region
      %3287 = dma.done [#allocation4], 256
    $region73: #{tpu_custom_call.1} parent=1 // pred_fallthru
      _
    %3288 = vsyncpa [#allocation4], 1

</llo_original>
